<compile_context>
chip_gen: v5e
topology: v5e:2x2
jax: 0.10.0
libtpu: 0.0.40
codegen_flags: <defaults>
</compile_context>

<pallas_src>
import functools

import jax
import jax.numpy as jnp
from jax.experimental import pallas as pl
from jax.experimental.pallas import tpu as pltpu


# -----------------------------------------------------------------------------
# Fused Pallas kernel: conv+lrelu+gn  -> conv+lrelu+gn -> conv+lrelu
# -----------------------------------------------------------------------------
def _smooth_block_kernel(x_ref, w1_ref, w2_ref, w3_ref, gb_ref, gmat_ref,
                         o_ref, xp_ref, *, H, W, C_in, C_out, dilation,
                         num_groups, eps, neg_slope):
    """One batch element per grid step.

    x_ref   : (1, C_in, H*W)        lane-dense input (flattened NCHW)
    w{1,2,3}: (9*C_in, C_layer)     im2col GEMM weights (HWIO flattened)
    gb_ref  : (4, C_in)             rows = gamma1, beta1, gamma2, beta2
    gmat_ref: (C_in, C_in)          group-membership matrix (1 if same group)
    o_ref   : (1, C_out, H*W)       lane-dense output (flattened NCHW)
    xp_ref  : (H+2d, W+2d, C_in)    VMEM halo scratch (borders stay zero)
    """
    HW = H * W
    d = dilation

    # Zero the halo scratch once per step; the interior is overwritten before
    # every conv, the 4-pixel border stays zero (== PyTorch zero padding).
    xp_ref[...] = jnp.zeros_like(xp_ref)

    gmat = gmat_ref[...]                                   # (C_in, C_in)

    def lrelu(v):
        return jnp.where(v > 0, v, neg_slope * v)

    def conv3x3(h, w_ref):
        # h: (HW, C_in). Write the interior, then im2col all 9 dilated taps
        # into one (HW, 9*C_in) matrix and do a single GEMM.
        xp_ref[d:d + H, d:d + W, :] = h.reshape(H, W, C_in)
        taps = []
        for ki in range(3):
            for kj in range(3):
                if ki == 1 and kj == 1:
                    taps.append(h)                         # centre tap == h
                else:
                    t = xp_ref[ki * d:ki * d + H, kj * d:kj * d + W, :]
                    taps.append(t.reshape(HW, C_in))
        patches = jnp.concatenate(taps, axis=-1)           # (HW, 9*C_in)
        return jnp.dot(patches, w_ref[...],
                       preferred_element_type=jnp.float32)  # (HW, C_layer)

    def group_norm(h, gamma, beta):
        # One reduce pass + one FMA pass; the (C,C) membership matmul both
        # sums within groups and broadcasts the result back per channel,
        # so there is no per-group lane slicing / concat.
        cg = C_in // num_groups
        n = jnp.float32(HW * cg)
        gsum = jnp.sum(jnp.dot(h, gmat, preferred_element_type=jnp.float32),
                       axis=0, keepdims=True) / n          # (1, C): group mean
        gsq = jnp.sum(jnp.dot(h * h, gmat,
                              preferred_element_type=jnp.float32),
                      axis=0, keepdims=True) / n           # (1, C): group E[x^2]
        var = gsq - gsum * gsum
        inv = jax.lax.rsqrt(var + eps)
        scale = inv * gamma                                # (1, C)
        shift = beta - gsum * scale                        # (1, C)
        return h * scale + shift                           # single FMA pass

    g1 = gb_ref[0:1, :]
    b1 = gb_ref[1:2, :]
    g2 = gb_ref[2:3, :]
    b2 = gb_ref[3:4, :]

    # (C_in, HW) -> (HW, C_in): cheap XLU transpose, done once per step.
    h = jnp.transpose(x_ref[0])

    h = group_norm(lrelu(conv3x3(h, w1_ref)), g1, b1)      # conv1 + lrelu + gn1
    h = group_norm(lrelu(conv3x3(h, w2_ref)), g2, b2)      # conv2 + lrelu + gn2
    h = lrelu(conv3x3(h, w3_ref))                          # conv3 + lrelu

    # Lane-dense writeback: (HW, C_out) -> (C_out, HW) so the store uses full
    # 128-lane vectors instead of 4-of-128 masked stores.
    o_ref[0] = jnp.transpose(h)


# -----------------------------------------------------------------------------
# Wrapper: pure reshapes in/out (NCHW native), weights pre-flattened.
# -----------------------------------------------------------------------------
def smooth_block(x_nchw, params, *, num_groups=4, eps=1e-5, neg_slope=0.2,
                 dilation=4):
    """x_nchw: (N, C_in, H, W) f32; params weights are PyTorch OIHW."""
    N, C_in, H, W = x_nchw.shape
    C_out = params["w3"].shape[0]
    HW = H * W
    Hp, Wp = H + 2 * dilation, W + 2 * dilation

    def flat_weight(w_oihw):
        # OIHW -> HWIO -> (9*C_in, C_out_layer), matching the im2col tap order.
        w_hwio = jnp.transpose(w_oihw, (2, 3, 1, 0)).astype(jnp.float32)
        return w_hwio.reshape(9 * C_in, w_oihw.shape[0])

    w1f = flat_weight(params["w1"])
    w2f = flat_weight(params["w2"])
    w3f = flat_weight(params["w3"])
    gb = jnp.stack([params["g1"], params["b1"], params["g2"], params["b2"]],
                   axis=0).astype(jnp.float32)             # (4, C_in)

    cg = C_in // num_groups
    gidx = jnp.arange(C_in) // cg
    gmat = (gidx[:, None] == gidx[None, :]).astype(jnp.float32)  # (C_in, C_in)

    x_flat = x_nchw.reshape(N, C_in, HW).astype(jnp.float32)     # free reshape

    kernel = functools.partial(
        _smooth_block_kernel, H=H, W=W, C_in=C_in, C_out=C_out,
        dilation=dilation, num_groups=num_groups, eps=eps, neg_slope=neg_slope)

    out_flat = pl.pallas_call(
        kernel,
        out_shape=jax.ShapeDtypeStruct((N, C_out, HW), jnp.float32),
        grid=(N,),
        in_specs=[
            pl.BlockSpec((1, C_in, HW), lambda n: (n, 0, 0)),
            pl.BlockSpec((9 * C_in, C_in), lambda n: (0, 0)),
            pl.BlockSpec((9 * C_in, C_in), lambda n: (0, 0)),
            pl.BlockSpec((9 * C_in, C_out), lambda n: (0, 0)),
            pl.BlockSpec((4, C_in), lambda n: (0, 0)),
            pl.BlockSpec((C_in, C_in), lambda n: (0, 0)),
        ],
        out_specs=pl.BlockSpec((1, C_out, HW), lambda n: (n, 0, 0)),
        scratch_shapes=[pltpu.VMEM((Hp, Wp, C_in), jnp.float32)],
        compiler_params=pltpu.CompilerParams(
            dimension_semantics=("parallel",)),
    )(x_flat, w1f, w2f, w3f, gb, gmat)

    return out_flat.reshape(N, C_out, H, W)                # free reshape (NCHW)


# -----------------------------------------------------------------------------
# Parameter setup (plain JAX glue)
# -----------------------------------------------------------------------------
def spectral_normalize(w_oihw, n_iter=30):
    """Deterministic spectral normalization of an OIHW conv weight."""
    c_out = w_oihw.shape[0]
    wm = w_oihw.reshape(c_out, -1)
    u = jnp.ones((c_out,), jnp.float32) / jnp.sqrt(jnp.float32(c_out))
    for _ in range(n_iter):
        v = wm.T @ u
        v = v / (jnp.sqrt(jnp.sum(v * v)) + 1e-12)
        u = wm @ v
        u = u / (jnp.sqrt(jnp.sum(u * u)) + 1e-12)
    sigma = u @ (wm @ v)
    return w_oihw / sigma


# -----------------------------------------------------------------------------
# Pure-JAX reference (correctness check), NCHW / OIHW like PyTorch.
# -----------------------------------------------------------------------------
def ref_forward(x_nchw, params, num_groups=4, eps=1e-5):
    def conv(x, w):
        return jax.lax.conv_general_dilated(
            x, w, window_strides=(1, 1), padding=((4, 4), (4, 4)),
            rhs_dilation=(4, 4), dimension_numbers=("NCHW", "OIHW", "NCHW"),
            precision=jax.lax.Precision.HIGHEST)

    def lrelu(x):
        return jnp.where(x > 0, x, 0.2 * x)

    def gn(x, gamma, beta):
        N, C, H, W = x.shape
        cg = C // num_groups
        xg = x.reshape(N, num_groups, cg, H, W)
        mean = xg.mean(axis=(2, 3, 4), keepdims=True)
        var = jnp.square(xg - mean).mean(axis=(2, 3, 4), keepdims=True)
        xn = ((xg - mean) * jax.lax.rsqrt(var + eps)).reshape(N, C, H, W)
        return xn * gamma.reshape(1, C, 1, 1) + beta.reshape(1, C, 1, 1)

    h = lrelu(conv(x_nchw, params["w1"]))
    h = gn(h, params["g1"], params["b1"])
    h = lrelu(conv(h, params["w2"]))
    h = gn(h, params["g2"], params["b2"])
    h = lrelu(conv(h, params["w3"]))
    return h


# -----------------------------------------------------------------------------
if __name__ == "__main__":
    key = jax.random.PRNGKey(0)
    ks = jax.random.split(key, 8)

    N, C_in, C_out, H, W = 2, 8, 4, 16, 16   # ch_in=8, ch_out=4

    # Conv weights in PyTorch OIHW, spectral-normalized at parameter-prep time.
    w1 = spectral_normalize(
        0.1 * jax.random.normal(ks[0], (C_in, C_in, 3, 3), jnp.float32))
    w2 = spectral_normalize(
        0.1 * jax.random.normal(ks[1], (C_in, C_in, 3, 3), jnp.float32))
    w3 = spectral_normalize(
        0.1 * jax.random.normal(ks[2], (C_out, C_in, 3, 3), jnp.float32))

    params = {
        "w1": w1, "w2": w2, "w3": w3,
        # GroupNorm affine params (PyTorch default is ones/zeros; perturbed
        # deterministically so the affine path is exercised).
        "g1": 1.0 + 0.1 * jax.random.normal(ks[3], (C_in,), jnp.float32),
        "b1": 0.1 * jax.random.normal(ks[4], (C_in,), jnp.float32),
        "g2": 1.0 + 0.1 * jax.random.normal(ks[5], (C_in,), jnp.float32),
        "b2": 0.1 * jax.random.normal(ks[6], (C_in,), jnp.float32),
    }

    x_nchw = jax.random.normal(ks[7], (N, C_in, H, W), jnp.float32)

    out_nchw = smooth_block(x_nchw, params)
    jax.block_until_ready(out_nchw)

    ref_nchw = ref_forward(x_nchw, params)
    assert out_nchw.shape == (N, C_out, H, W)
    max_err = float(jnp.max(jnp.abs(out_nchw - ref_nchw)))
    assert jnp.allclose(out_nchw, ref_nchw, rtol=2e-3, atol=2e-3), max_err

    print("KERNEL_OK")
</pallas_src>

<mosaic_0001>
module attributes {stable_mosaic.version = 11 : i64} {
  func.func @_smooth_block_kernel(%arg0: i32, %arg1: memref<1x8x256xf32, #tpu.memory_space<vmem>>, %arg2: memref<72x8xf32, #tpu.memory_space<vmem>>, %arg3: memref<72x8xf32, #tpu.memory_space<vmem>>, %arg4: memref<72x4xf32, #tpu.memory_space<vmem>>, %arg5: memref<4x8xf32, #tpu.memory_space<vmem>>, %arg6: memref<8x8xf32, #tpu.memory_space<vmem>>, %arg7: memref<1x4x256xf32, #tpu.memory_space<vmem>>, %arg8: memref<24x24x8xf32, #tpu.memory_space<vmem>>) attributes {dimension_semantics = [#tpu.dimension_semantics<parallel>], iteration_bounds = array<i64: 2>, scalar_prefetch = 0 : i64, scratch_operands = 1 : i64, tpu.core_type = #tpu.core_type<tc>, window_params = [{transform_indices = @transform_0, window_bounds = array<i64: 1, 8, 256>}, {pipeline_mode = #tpu.pipeline_mode<synchronous>, transform_indices = @transform_1, window_bounds = array<i64: 72, 8>}, {pipeline_mode = #tpu.pipeline_mode<synchronous>, transform_indices = @transform_2, window_bounds = array<i64: 72, 8>}, {pipeline_mode = #tpu.pipeline_mode<synchronous>, transform_indices = @transform_3, window_bounds = array<i64: 72, 4>}, {pipeline_mode = #tpu.pipeline_mode<synchronous>, transform_indices = @transform_4, window_bounds = array<i64: 4, 8>}, {pipeline_mode = #tpu.pipeline_mode<synchronous>, transform_indices = @transform_5, window_bounds = array<i64: 8, 8>}, {transform_indices = @transform_6, window_bounds = array<i64: 1, 4, 256>}]} {
    %cst = arith.constant 0.000000e+00 : f32
    %0 = vector.broadcast %cst : f32 to vector<24x24x8xf32>
    %c0 = arith.constant 0 : index
    %c0_0 = arith.constant 0 : index
    %c0_1 = arith.constant 0 : index
    %1 = vector.load %arg8[%c0, %c0_0, %c0_1] : memref<24x24x8xf32, #tpu.memory_space<vmem>>, vector<24x24x8xf32>
    tpu.vector_store %arg8[%c0, %c0_0, %c0_1], %0 {strides = array<i32>} : memref<24x24x8xf32, #tpu.memory_space<vmem>>, vector<24x24x8xf32>,
    %c0_2 = arith.constant 0 : index
    %c0_3 = arith.constant 0 : index
    %2 = vector.load %arg6[%c0_2, %c0_3] : memref<8x8xf32, #tpu.memory_space<vmem>>, vector<8x8xf32>
    %c0_4 = arith.constant 0 : index
    %c0_5 = arith.constant 0 : index
    %3 = vector.load %arg5[%c0_4, %c0_5] : memref<4x8xf32, #tpu.memory_space<vmem>>, vector<1x8xf32>
    %c1 = arith.constant 1 : index
    %c0_6 = arith.constant 0 : index
    %4 = vector.load %arg5[%c1, %c0_6] : memref<4x8xf32, #tpu.memory_space<vmem>>, vector<1x8xf32>
    %c2 = arith.constant 2 : index
    %c0_7 = arith.constant 0 : index
    %5 = vector.load %arg5[%c2, %c0_7] : memref<4x8xf32, #tpu.memory_space<vmem>>, vector<1x8xf32>
    %c3 = arith.constant 3 : index
    %c0_8 = arith.constant 0 : index
    %6 = vector.load %arg5[%c3, %c0_8] : memref<4x8xf32, #tpu.memory_space<vmem>>, vector<1x8xf32>
    %c0_9 = arith.constant 0 : index
    %c0_10 = arith.constant 0 : index
    %c0_11 = arith.constant 0 : index
    %7 = vector.load %arg1[%c0_9, %c0_10, %c0_11] : memref<1x8x256xf32, #tpu.memory_space<vmem>>, vector<1x8x256xf32>
    %8 = vector.shape_cast %7 : vector<1x8x256xf32> to vector<8x256xf32>
    %9 = tpu.transpose %8, [1, 0] : vector<8x256xf32> -> vector<256x8xf32>
    %10 = vector.shape_cast %9 : vector<256x8xf32> to vector<16x16x8xf32>
    %c4 = arith.constant 4 : index
    %c4_12 = arith.constant 4 : index
    %c0_13 = arith.constant 0 : index
    %11 = vector.load %arg8[%c4, %c4_12, %c0_13] : memref<24x24x8xf32, #tpu.memory_space<vmem>>, vector<16x16x8xf32>
    tpu.vector_store %arg8[%c4, %c4_12, %c0_13], %10 {strides = array<i32>} : memref<24x24x8xf32, #tpu.memory_space<vmem>>, vector<16x16x8xf32>,
    %c0_14 = arith.constant 0 : index
    %c0_15 = arith.constant 0 : index
    %c0_16 = arith.constant 0 : index
    %12 = vector.load %arg8[%c0_14, %c0_15, %c0_16] : memref<24x24x8xf32, #tpu.memory_space<vmem>>, vector<16x16x8xf32>
    %13 = vector.shape_cast %12 : vector<16x16x8xf32> to vector<256x8xf32>
    %c0_17 = arith.constant 0 : index
    %c4_18 = arith.constant 4 : index
    %c0_19 = arith.constant 0 : index
    %14 = vector.load %arg8[%c0_17, %c4_18, %c0_19] : memref<24x24x8xf32, #tpu.memory_space<vmem>>, vector<16x16x8xf32>
    %15 = vector.shape_cast %14 : vector<16x16x8xf32> to vector<256x8xf32>
    %c0_20 = arith.constant 0 : index
    %c8 = arith.constant 8 : index
    %c0_21 = arith.constant 0 : index
    %16 = vector.load %arg8[%c0_20, %c8, %c0_21] : memref<24x24x8xf32, #tpu.memory_space<vmem>>, vector<16x16x8xf32>
    %17 = vector.shape_cast %16 : vector<16x16x8xf32> to vector<256x8xf32>
    %c4_22 = arith.constant 4 : index
    %c0_23 = arith.constant 0 : index
    %c0_24 = arith.constant 0 : index
    %18 = vector.load %arg8[%c4_22, %c0_23, %c0_24] : memref<24x24x8xf32, #tpu.memory_space<vmem>>, vector<16x16x8xf32>
    %19 = vector.shape_cast %18 : vector<16x16x8xf32> to vector<256x8xf32>
    %c4_25 = arith.constant 4 : index
    %c8_26 = arith.constant 8 : index
    %c0_27 = arith.constant 0 : index
    %20 = vector.load %arg8[%c4_25, %c8_26, %c0_27] : memref<24x24x8xf32, #tpu.memory_space<vmem>>, vector<16x16x8xf32>
    %21 = vector.shape_cast %20 : vector<16x16x8xf32> to vector<256x8xf32>
    %c8_28 = arith.constant 8 : index
    %c0_29 = arith.constant 0 : index
    %c0_30 = arith.constant 0 : index
    %22 = vector.load %arg8[%c8_28, %c0_29, %c0_30] : memref<24x24x8xf32, #tpu.memory_space<vmem>>, vector<16x16x8xf32>
    %23 = vector.shape_cast %22 : vector<16x16x8xf32> to vector<256x8xf32>
    %c8_31 = arith.constant 8 : index
    %c4_32 = arith.constant 4 : index
    %c0_33 = arith.constant 0 : index
    %24 = vector.load %arg8[%c8_31, %c4_32, %c0_33] : memref<24x24x8xf32, #tpu.memory_space<vmem>>, vector<16x16x8xf32>
    %25 = vector.shape_cast %24 : vector<16x16x8xf32> to vector<256x8xf32>
    %c8_34 = arith.constant 8 : index
    %c8_35 = arith.constant 8 : index
    %c0_36 = arith.constant 0 : index
    %26 = vector.load %arg8[%c8_34, %c8_35, %c0_36] : memref<24x24x8xf32, #tpu.memory_space<vmem>>, vector<16x16x8xf32>
    %27 = vector.shape_cast %26 : vector<16x16x8xf32> to vector<256x8xf32>
    %28 = tpu.concatenate %13, %15, %17, %19, %9, %21, %23, %25, %27 in 1 : vector<256x8xf32>, vector<256x8xf32>, vector<256x8xf32>, vector<256x8xf32>, vector<256x8xf32>, vector<256x8xf32>, vector<256x8xf32>, vector<256x8xf32>, vector<256x8xf32> -> vector<256x72xf32>
    %c0_37 = arith.constant 0 : index
    %c0_38 = arith.constant 0 : index
    %29 = vector.load %arg2[%c0_37, %c0_38] : memref<72x8xf32, #tpu.memory_space<vmem>>, vector<72x8xf32>
    %cst_39 = arith.constant dense<0.000000e+00> : vector<256x8xf32>
    %30 = tpu.matmul %28, %29, %cst_39 {dimension_numbers = #tpu.dot_dimension_numbers<[1], [0], [0], [1], [0, 0, 1, 1], [], []>} : vector<256x72xf32>, vector<72x8xf32>, vector<256x8xf32> -> vector<256x8xf32>
    %cst_40 = arith.constant 0.000000e+00 : f32
    %31 = vector.broadcast %cst_40 : f32 to vector<256x8xf32>
    %32 = arith.cmpf ogt, %30, %31 : vector<256x8xf32>
    %cst_41 = arith.constant 2.000000e-01 : f32
    %33 = vector.broadcast %cst_41 : f32 to vector<256x8xf32>
    %34 = arith.mulf %33, %30 : vector<256x8xf32>
    %35 = arith.select %32, %30, %34 : vector<256x8xi1>, vector<256x8xf32>
    %cst_42 = arith.constant dense<0.000000e+00> : vector<256x8xf32>
    %36 = tpu.matmul %35, %2, %cst_42 {dimension_numbers = #tpu.dot_dimension_numbers<[1], [0], [0], [1], [0, 0, 1, 1], [], []>} : vector<256x8xf32>, vector<8x8xf32>, vector<256x8xf32> -> vector<256x8xf32>
    %cst_43 = arith.constant dense<0.000000e+00> : vector<8xf32>
    %37 = vector.multi_reduction <add>, %36, %cst_43 [0] : vector<256x8xf32> to vector<8xf32>
    %38 = vector.shape_cast %37 : vector<8xf32> to vector<1x8xf32>
    %cst_44 = arith.constant 5.120000e+02 : f32
    %39 = vector.broadcast %cst_44 : f32 to vector<1x8xf32>
    %40 = arith.divf %38, %39 : vector<1x8xf32>
    %41 = arith.mulf %35, %35 : vector<256x8xf32>
    %cst_45 = arith.constant dense<0.000000e+00> : vector<256x8xf32>
    %42 = tpu.matmul %41, %2, %cst_45 {dimension_numbers = #tpu.dot_dimension_numbers<[1], [0], [0], [1], [0, 0, 1, 1], [], []>} : vector<256x8xf32>, vector<8x8xf32>, vector<256x8xf32> -> vector<256x8xf32>
    %cst_46 = arith.constant dense<0.000000e+00> : vector<8xf32>
    %43 = vector.multi_reduction <add>, %42, %cst_46 [0] : vector<256x8xf32> to vector<8xf32>
    %44 = vector.shape_cast %43 : vector<8xf32> to vector<1x8xf32>
    %cst_47 = arith.constant 5.120000e+02 : f32
    %45 = vector.broadcast %cst_47 : f32 to vector<1x8xf32>
    %46 = arith.divf %44, %45 : vector<1x8xf32>
    %47 = arith.mulf %40, %40 : vector<1x8xf32>
    %48 = arith.subf %46, %47 : vector<1x8xf32>
    %cst_48 = arith.constant 9.99999974E-6 : f32
    %49 = vector.broadcast %cst_48 : f32 to vector<1x8xf32>
    %50 = arith.addf %48, %49 : vector<1x8xf32>
    %51 = math.rsqrt %50 : vector<1x8xf32>
    %52 = arith.mulf %51, %3 : vector<1x8xf32>
    %53 = arith.mulf %40, %52 : vector<1x8xf32>
    %54 = arith.subf %4, %53 : vector<1x8xf32>
    %55 = vector.broadcast %52 : vector<1x8xf32> to vector<256x8xf32>
    %56 = arith.mulf %35, %55 : vector<256x8xf32>
    %57 = vector.broadcast %54 : vector<1x8xf32> to vector<256x8xf32>
    %58 = arith.addf %56, %57 : vector<256x8xf32>
    %59 = vector.shape_cast %58 : vector<256x8xf32> to vector<16x16x8xf32>
    %c4_49 = arith.constant 4 : index
    %c4_50 = arith.constant 4 : index
    %c0_51 = arith.constant 0 : index
    %60 = vector.load %arg8[%c4_49, %c4_50, %c0_51] : memref<24x24x8xf32, #tpu.memory_space<vmem>>, vector<16x16x8xf32>
    tpu.vector_store %arg8[%c4_49, %c4_50, %c0_51], %59 {strides = array<i32>} : memref<24x24x8xf32, #tpu.memory_space<vmem>>, vector<16x16x8xf32>,
    %c0_52 = arith.constant 0 : index
    %c0_53 = arith.constant 0 : index
    %c0_54 = arith.constant 0 : index
    %61 = vector.load %arg8[%c0_52, %c0_53, %c0_54] : memref<24x24x8xf32, #tpu.memory_space<vmem>>, vector<16x16x8xf32>
    %62 = vector.shape_cast %61 : vector<16x16x8xf32> to vector<256x8xf32>
    %c0_55 = arith.constant 0 : index
    %c4_56 = arith.constant 4 : index
    %c0_57 = arith.constant 0 : index
    %63 = vector.load %arg8[%c0_55, %c4_56, %c0_57] : memref<24x24x8xf32, #tpu.memory_space<vmem>>, vector<16x16x8xf32>
    %64 = vector.shape_cast %63 : vector<16x16x8xf32> to vector<256x8xf32>
    %c0_58 = arith.constant 0 : index
    %c8_59 = arith.constant 8 : index
    %c0_60 = arith.constant 0 : index
    %65 = vector.load %arg8[%c0_58, %c8_59, %c0_60] : memref<24x24x8xf32, #tpu.memory_space<vmem>>, vector<16x16x8xf32>
    %66 = vector.shape_cast %65 : vector<16x16x8xf32> to vector<256x8xf32>
    %c4_61 = arith.constant 4 : index
    %c0_62 = arith.constant 0 : index
    %c0_63 = arith.constant 0 : index
    %67 = vector.load %arg8[%c4_61, %c0_62, %c0_63] : memref<24x24x8xf32, #tpu.memory_space<vmem>>, vector<16x16x8xf32>
    %68 = vector.shape_cast %67 : vector<16x16x8xf32> to vector<256x8xf32>
    %c4_64 = arith.constant 4 : index
    %c8_65 = arith.constant 8 : index
    %c0_66 = arith.constant 0 : index
    %69 = vector.load %arg8[%c4_64, %c8_65, %c0_66] : memref<24x24x8xf32, #tpu.memory_space<vmem>>, vector<16x16x8xf32>
    %70 = vector.shape_cast %69 : vector<16x16x8xf32> to vector<256x8xf32>
    %c8_67 = arith.constant 8 : index
    %c0_68 = arith.constant 0 : index
    %c0_69 = arith.constant 0 : index
    %71 = vector.load %arg8[%c8_67, %c0_68, %c0_69] : memref<24x24x8xf32, #tpu.memory_space<vmem>>, vector<16x16x8xf32>
    %72 = vector.shape_cast %71 : vector<16x16x8xf32> to vector<256x8xf32>
    %c8_70 = arith.constant 8 : index
    %c4_71 = arith.constant 4 : index
    %c0_72 = arith.constant 0 : index
    %73 = vector.load %arg8[%c8_70, %c4_71, %c0_72] : memref<24x24x8xf32, #tpu.memory_space<vmem>>, vector<16x16x8xf32>
    %74 = vector.shape_cast %73 : vector<16x16x8xf32> to vector<256x8xf32>
    %c8_73 = arith.constant 8 : index
    %c8_74 = arith.constant 8 : index
    %c0_75 = arith.constant 0 : index
    %75 = vector.load %arg8[%c8_73, %c8_74, %c0_75] : memref<24x24x8xf32, #tpu.memory_space<vmem>>, vector<16x16x8xf32>
    %76 = vector.shape_cast %75 : vector<16x16x8xf32> to vector<256x8xf32>
    %77 = tpu.concatenate %62, %64, %66, %68, %58, %70, %72, %74, %76 in 1 : vector<256x8xf32>, vector<256x8xf32>, vector<256x8xf32>, vector<256x8xf32>, vector<256x8xf32>, vector<256x8xf32>, vector<256x8xf32>, vector<256x8xf32>, vector<256x8xf32> -> vector<256x72xf32>
    %c0_76 = arith.constant 0 : index
    %c0_77 = arith.constant 0 : index
    %78 = vector.load %arg3[%c0_76, %c0_77] : memref<72x8xf32, #tpu.memory_space<vmem>>, vector<72x8xf32>
    %cst_78 = arith.constant dense<0.000000e+00> : vector<256x8xf32>
    %79 = tpu.matmul %77, %78, %cst_78 {dimension_numbers = #tpu.dot_dimension_numbers<[1], [0], [0], [1], [0, 0, 1, 1], [], []>} : vector<256x72xf32>, vector<72x8xf32>, vector<256x8xf32> -> vector<256x8xf32>
    %cst_79 = arith.constant 0.000000e+00 : f32
    %80 = vector.broadcast %cst_79 : f32 to vector<256x8xf32>
    %81 = arith.cmpf ogt, %79, %80 : vector<256x8xf32>
    %cst_80 = arith.constant 2.000000e-01 : f32
    %82 = vector.broadcast %cst_80 : f32 to vector<256x8xf32>
    %83 = arith.mulf %82, %79 : vector<256x8xf32>
    %84 = arith.select %81, %79, %83 : vector<256x8xi1>, vector<256x8xf32>
    %cst_81 = arith.constant dense<0.000000e+00> : vector<256x8xf32>
    %85 = tpu.matmul %84, %2, %cst_81 {dimension_numbers = #tpu.dot_dimension_numbers<[1], [0], [0], [1], [0, 0, 1, 1], [], []>} : vector<256x8xf32>, vector<8x8xf32>, vector<256x8xf32> -> vector<256x8xf32>
    %cst_82 = arith.constant dense<0.000000e+00> : vector<8xf32>
    %86 = vector.multi_reduction <add>, %85, %cst_82 [0] : vector<256x8xf32> to vector<8xf32>
    %87 = vector.shape_cast %86 : vector<8xf32> to vector<1x8xf32>
    %cst_83 = arith.constant 5.120000e+02 : f32
    %88 = vector.broadcast %cst_83 : f32 to vector<1x8xf32>
    %89 = arith.divf %87, %88 : vector<1x8xf32>
    %90 = arith.mulf %84, %84 : vector<256x8xf32>
    %cst_84 = arith.constant dense<0.000000e+00> : vector<256x8xf32>
    %91 = tpu.matmul %90, %2, %cst_84 {dimension_numbers = #tpu.dot_dimension_numbers<[1], [0], [0], [1], [0, 0, 1, 1], [], []>} : vector<256x8xf32>, vector<8x8xf32>, vector<256x8xf32> -> vector<256x8xf32>
    %cst_85 = arith.constant dense<0.000000e+00> : vector<8xf32>
    %92 = vector.multi_reduction <add>, %91, %cst_85 [0] : vector<256x8xf32> to vector<8xf32>
    %93 = vector.shape_cast %92 : vector<8xf32> to vector<1x8xf32>
    %cst_86 = arith.constant 5.120000e+02 : f32
    %94 = vector.broadcast %cst_86 : f32 to vector<1x8xf32>
    %95 = arith.divf %93, %94 : vector<1x8xf32>
    %96 = arith.mulf %89, %89 : vector<1x8xf32>
    %97 = arith.subf %95, %96 : vector<1x8xf32>
    %cst_87 = arith.constant 9.99999974E-6 : f32
    %98 = vector.broadcast %cst_87 : f32 to vector<1x8xf32>
    %99 = arith.addf %97, %98 : vector<1x8xf32>
    %100 = math.rsqrt %99 : vector<1x8xf32>
    %101 = arith.mulf %100, %5 : vector<1x8xf32>
    %102 = arith.mulf %89, %101 : vector<1x8xf32>
    %103 = arith.subf %6, %102 : vector<1x8xf32>
    %104 = vector.broadcast %101 : vector<1x8xf32> to vector<256x8xf32>
    %105 = arith.mulf %84, %104 : vector<256x8xf32>
    %106 = vector.broadcast %103 : vector<1x8xf32> to vector<256x8xf32>
    %107 = arith.addf %105, %106 : vector<256x8xf32>
    %108 = vector.shape_cast %107 : vector<256x8xf32> to vector<16x16x8xf32>
    %c4_88 = arith.constant 4 : index
    %c4_89 = arith.constant 4 : index
    %c0_90 = arith.constant 0 : index
    %109 = vector.load %arg8[%c4_88, %c4_89, %c0_90] : memref<24x24x8xf32, #tpu.memory_space<vmem>>, vector<16x16x8xf32>
    tpu.vector_store %arg8[%c4_88, %c4_89, %c0_90], %108 {strides = array<i32>} : memref<24x24x8xf32, #tpu.memory_space<vmem>>, vector<16x16x8xf32>,
    %c0_91 = arith.constant 0 : index
    %c0_92 = arith.constant 0 : index
    %c0_93 = arith.constant 0 : index
    %110 = vector.load %arg8[%c0_91, %c0_92, %c0_93] : memref<24x24x8xf32, #tpu.memory_space<vmem>>, vector<16x16x8xf32>
    %111 = vector.shape_cast %110 : vector<16x16x8xf32> to vector<256x8xf32>
    %c0_94 = arith.constant 0 : index
    %c4_95 = arith.constant 4 : index
    %c0_96 = arith.constant 0 : index
    %112 = vector.load %arg8[%c0_94, %c4_95, %c0_96] : memref<24x24x8xf32, #tpu.memory_space<vmem>>, vector<16x16x8xf32>
    %113 = vector.shape_cast %112 : vector<16x16x8xf32> to vector<256x8xf32>
    %c0_97 = arith.constant 0 : index
    %c8_98 = arith.constant 8 : index
    %c0_99 = arith.constant 0 : index
    %114 = vector.load %arg8[%c0_97, %c8_98, %c0_99] : memref<24x24x8xf32, #tpu.memory_space<vmem>>, vector<16x16x8xf32>
    %115 = vector.shape_cast %114 : vector<16x16x8xf32> to vector<256x8xf32>
    %c4_100 = arith.constant 4 : index
    %c0_101 = arith.constant 0 : index
    %c0_102 = arith.constant 0 : index
    %116 = vector.load %arg8[%c4_100, %c0_101, %c0_102] : memref<24x24x8xf32, #tpu.memory_space<vmem>>, vector<16x16x8xf32>
    %117 = vector.shape_cast %116 : vector<16x16x8xf32> to vector<256x8xf32>
    %c4_103 = arith.constant 4 : index
    %c8_104 = arith.constant 8 : index
    %c0_105 = arith.constant 0 : index
    %118 = vector.load %arg8[%c4_103, %c8_104, %c0_105] : memref<24x24x8xf32, #tpu.memory_space<vmem>>, vector<16x16x8xf32>
    %119 = vector.shape_cast %118 : vector<16x16x8xf32> to vector<256x8xf32>
    %c8_106 = arith.constant 8 : index
    %c0_107 = arith.constant 0 : index
    %c0_108 = arith.constant 0 : index
    %120 = vector.load %arg8[%c8_106, %c0_107, %c0_108] : memref<24x24x8xf32, #tpu.memory_space<vmem>>, vector<16x16x8xf32>
    %121 = vector.shape_cast %120 : vector<16x16x8xf32> to vector<256x8xf32>
    %c8_109 = arith.constant 8 : index
    %c4_110 = arith.constant 4 : index
    %c0_111 = arith.constant 0 : index
    %122 = vector.load %arg8[%c8_109, %c4_110, %c0_111] : memref<24x24x8xf32, #tpu.memory_space<vmem>>, vector<16x16x8xf32>
    %123 = vector.shape_cast %122 : vector<16x16x8xf32> to vector<256x8xf32>
    %c8_112 = arith.constant 8 : index
    %c8_113 = arith.constant 8 : index
    %c0_114 = arith.constant 0 : index
    %124 = vector.load %arg8[%c8_112, %c8_113, %c0_114] : memref<24x24x8xf32, #tpu.memory_space<vmem>>, vector<16x16x8xf32>
    %125 = vector.shape_cast %124 : vector<16x16x8xf32> to vector<256x8xf32>
    %126 = tpu.concatenate %111, %113, %115, %117, %107, %119, %121, %123, %125 in 1 : vector<256x8xf32>, vector<256x8xf32>, vector<256x8xf32>, vector<256x8xf32>, vector<256x8xf32>, vector<256x8xf32>, vector<256x8xf32>, vector<256x8xf32>, vector<256x8xf32> -> vector<256x72xf32>
    %c0_115 = arith.constant 0 : index
    %c0_116 = arith.constant 0 : index
    %127 = vector.load %arg4[%c0_115, %c0_116] : memref<72x4xf32, #tpu.memory_space<vmem>>, vector<72x4xf32>
    %cst_117 = arith.constant dense<0.000000e+00> : vector<256x4xf32>
    %128 = tpu.matmul %126, %127, %cst_117 {dimension_numbers = #tpu.dot_dimension_numbers<[1], [0], [0], [1], [0, 0, 1, 1], [], []>} : vector<256x72xf32>, vector<72x4xf32>, vector<256x4xf32> -> vector<256x4xf32>
    %cst_118 = arith.constant 0.000000e+00 : f32
    %129 = vector.broadcast %cst_118 : f32 to vector<256x4xf32>
    %130 = arith.cmpf ogt, %128, %129 : vector<256x4xf32>
    %cst_119 = arith.constant 2.000000e-01 : f32
    %131 = vector.broadcast %cst_119 : f32 to vector<256x4xf32>
    %132 = arith.mulf %131, %128 : vector<256x4xf32>
    %133 = arith.select %130, %128, %132 : vector<256x4xi1>, vector<256x4xf32>
    %134 = tpu.transpose %133, [1, 0] : vector<256x4xf32> -> vector<4x256xf32>
    %c0_120 = arith.constant 0 : index
    %c0_121 = arith.constant 0 : index
    %c0_122 = arith.constant 0 : index
    %135 = vector.load %arg7[%c0_120, %c0_121, %c0_122] : memref<1x4x256xf32, #tpu.memory_space<vmem>>, vector<1x4x256xf32>
    %136 = vector.shape_cast %135 : vector<1x4x256xf32> to vector<4x256xf32>
    %137 = vector.shape_cast %134 : vector<4x256xf32> to vector<1x4x256xf32>
    tpu.vector_store %arg7[%c0_120, %c0_121, %c0_122], %137 {strides = array<i32>} : memref<1x4x256xf32, #tpu.memory_space<vmem>>, vector<1x4x256xf32>,
    return
  }
  func.func @transform_0(%arg0: i32) -> (i32, i32, i32) {
    %c0_i32 = arith.constant 0 : i32
    %c0_i32_0 = arith.constant 0 : i32
    %c0_i32_1 = arith.constant 0 : i32
    return %arg0, %c0_i32, %c0_i32_0 : i32, i32, i32
  }
  func.func @transform_1(%arg0: i32) -> (i32, i32) {
    %c0_i32 = arith.constant 0 : i32
    %c0_i32_0 = arith.constant 0 : i32
    %c0_i32_1 = arith.constant 0 : i32
    return %c0_i32, %c0_i32_0 : i32, i32
  }
  func.func @transform_2(%arg0: i32) -> (i32, i32) {
    %c0_i32 = arith.constant 0 : i32
    %c0_i32_0 = arith.constant 0 : i32
    %c0_i32_1 = arith.constant 0 : i32
    return %c0_i32, %c0_i32_0 : i32, i32
  }
  func.func @transform_3(%arg0: i32) -> (i32, i32) {
    %c0_i32 = arith.constant 0 : i32
    %c0_i32_0 = arith.constant 0 : i32
    %c0_i32_1 = arith.constant 0 : i32
    return %c0_i32, %c0_i32_0 : i32, i32
  }
  func.func @transform_4(%arg0: i32) -> (i32, i32) {
    %c0_i32 = arith.constant 0 : i32
    %c0_i32_0 = arith.constant 0 : i32
    %c0_i32_1 = arith.constant 0 : i32
    return %c0_i32, %c0_i32_0 : i32, i32
  }
  func.func @transform_5(%arg0: i32) -> (i32, i32) {
    %c0_i32 = arith.constant 0 : i32
    %c0_i32_0 = arith.constant 0 : i32
    %c0_i32_1 = arith.constant 0 : i32
    return %c0_i32, %c0_i32_0 : i32, i32
  }
  func.func @transform_6(%arg0: i32) -> (i32, i32, i32) {
    %c0_i32 = arith.constant 0 : i32
    %c0_i32_0 = arith.constant 0 : i32
    %c0_i32_1 = arith.constant 0 : i32
    return %arg0, %c0_i32, %c0_i32_0 : i32, i32, i32
  }
}

</mosaic_0001>

<llo_original>
// kernel: tpu_custom_call.1
$region0: #{tpu_custom_call.1}
  #allocation0 [shape = 'u32[]', space=smem, size = 0x4, offset = 0x4, fixed_abs, tag = 'smem constant byte address 0x4 - core index']
  #allocation1 [shape = 'u32[72,128]{1,0:T(1,128)}', space=vmem, size = 0x9000, scoped, tag = 'internal scratch']
  #allocation2 [shape = 'f32[24,24,8]{2,1,0:T(8,128)}', space=vmem, size = 0x48000, scoped, tag = 'scratch operand']
  %s0 = inlined_call_operand.vmem [shape: f32[2,8,256], index: 0, kind: input, shape index: {}]
  %s1 = inlined_call_operand.vmem [shape: f32[72,8], index: 1, kind: input, shape index: {}]
  %s2 = inlined_call_operand.vmem [shape: f32[72,8], index: 2, kind: input, shape index: {}]
  %s3 = inlined_call_operand.vmem [shape: f32[72,4], index: 3, kind: input, shape index: {}]
  %s4 = inlined_call_operand.vmem [shape: f32[4,8], index: 4, kind: input, shape index: {}]
  %s5 = inlined_call_operand.vmem [shape: f32[8,8], index: 5, kind: input, shape index: {}]
  %s6 = inlined_call_operand.hbm [shape: f32[2,4,256], index: 6, kind: output, shape index: {}]
  %s7 = sld [smem:[#allocation0]]
  $region57: #{tpu_custom_call.1} parent=0
    _
  %s9 = ssub.s32 1, %s7
  %s10 = scalar_select 0, %s9, %s7
  $region1: #{tpu_custom_call.1} parent=0
    #allocation3 [shape = 'u8[8192]{0}', space=vmem, size = 0x2000, scoped, tag = 'output window, operand 0']
    #allocation4 [shape = 's32[2]{0}', space=sflag, size = 0x8, scoped, tag = 'scoped memory for tpu_custom_call.1']
    %11 = vsyncpa [#allocation4], 0
    %s12 = scalar_lea.sflag [#allocation4], 1
    %13 = vsyncpa %s12, 0
    loop: start=0, step=1, limit=4
    $region2: #{tpu_custom_call.1} parent=1 // loop_pre_header
      _
    $region3: #{tpu_custom_call.1} parent=1 // loop_header
      %s15 = sphi 0, %s19
      %p16 = scmp.ge.s32.totalorder %s15, 4
      %s25 = sphi 0, %s27
      %s28 = sphi 0, %s25
      %s29 = sphi 0, %s28
      %s45 = sphi 0, %s29
      %s49 = sphi 0, %s49
      %s51 = sphi 0, %s49
      %s52 = sphi 0, %s51
      %s66 = sphi 0, %s52
      %s70 = sphi 0, %s70
      %s72 = sphi 0, %s70
      %s73 = sphi 0, %s72
      %s87 = sphi 0, %s73
      %s91 = sphi 0, %s91
      %s93 = sphi 0, %s91
      %s94 = sphi 0, %s93
      %s108 = sphi 0, %s94
      %s112 = sphi 0, %s112
      %s114 = sphi 0, %s112
      %s115 = sphi 0, %s114
      %s129 = sphi 0, %s115
      %s133 = sphi 0, %s133
      %s135 = sphi 0, %s133
      %s136 = sphi 0, %s135
      %s150 = sphi 0, %s136
      %s156 = sphi 0, %s158
      %s159 = sphi 0, %s156
      %s160 = sphi 0, %s159
      %s176 = sphi 0, %s160
    $region4: #{tpu_custom_call.1} parent=1 // loop_header_branch
      %18 = sbr.rel (%p16) target = $region8
    $region5: #{tpu_custom_call.1} parent=1 // loop_body
      %s20 = ssub.s32 %s15, 1
      %s21 = ssub.s32 %s15, 2
      %s22 = sadd.s32 %s15, 1
      %s23 = ssub.s32 %s15, %s22
      %p24 = scmp.eq.s32.totalorder %s23, 0
      %s26 = sadd.s32 %s25, 1
      %s27 = scalar_select %p24, %s25, %s26
      %p30 = pneg %p24
      %p31 = scmp.eq.s32.totalorder %s15, 1
      %p32 = por %p30, %p31
      %p33 = scmp.ne.s32.totalorder %s25, %s28
      %p34 = scmp.eq.s32.totalorder %s15, 0
      %p35 = por %p33, %p34
      %p36 = scmp.ne.s32.totalorder %s25, %s28
      %p37 = scmp.eq.s32.totalorder %s20, 1
      %p38 = por %p36, %p37
      %p39 = scmp.ne.s32.totalorder %s28, %s29
      %p40 = scmp.eq.s32.totalorder %s20, 0
      %p41 = por %p39, %p40
      %p42 = scmp.ne.s32.totalorder %s28, %s29
      %p43 = scmp.eq.s32.totalorder %s21, 1
      %p44 = por %p42, %p43
      %p46 = scmp.ne.s32.totalorder %s29, %s45
      %p47 = scmp.eq.s32.totalorder %s21, 0
      %p48 = por %p46, %p47
      %s50 = sadd.s32 %s49, 1
      %p53 = scmp.eq.s32.totalorder %s15, 1
      %p54 = scmp.ne.s32.totalorder %s49, %s51
      %p55 = scmp.eq.s32.totalorder %s15, 0
      %p56 = por %p54, %p55
      %p57 = scmp.ne.s32.totalorder %s49, %s51
      %p58 = scmp.eq.s32.totalorder %s20, 1
      %p59 = por %p57, %p58
      %p60 = scmp.ne.s32.totalorder %s51, %s52
      %p61 = scmp.eq.s32.totalorder %s20, 0
      %p62 = por %p60, %p61
      %p63 = scmp.ne.s32.totalorder %s51, %s52
      %p64 = scmp.eq.s32.totalorder %s21, 1
      %p65 = por %p63, %p64
      %p67 = scmp.ne.s32.totalorder %s52, %s66
      %p68 = scmp.eq.s32.totalorder %s21, 0
      %p69 = por %p67, %p68
      %s71 = sadd.s32 %s70, 1
      %p74 = scmp.eq.s32.totalorder %s15, 1
      %p75 = scmp.ne.s32.totalorder %s70, %s72
      %p76 = scmp.eq.s32.totalorder %s15, 0
      %p77 = por %p75, %p76
      %p78 = scmp.ne.s32.totalorder %s70, %s72
      %p79 = scmp.eq.s32.totalorder %s20, 1
      %p80 = por %p78, %p79
      %p81 = scmp.ne.s32.totalorder %s72, %s73
      %p82 = scmp.eq.s32.totalorder %s20, 0
      %p83 = por %p81, %p82
      %p84 = scmp.ne.s32.totalorder %s72, %s73
      %p85 = scmp.eq.s32.totalorder %s21, 1
      %p86 = por %p84, %p85
      %p88 = scmp.ne.s32.totalorder %s73, %s87
      %p89 = scmp.eq.s32.totalorder %s21, 0
      %p90 = por %p88, %p89
      %s92 = sadd.s32 %s91, 1
      %p95 = scmp.eq.s32.totalorder %s15, 1
      %p96 = scmp.ne.s32.totalorder %s91, %s93
      %p97 = scmp.eq.s32.totalorder %s15, 0
      %p98 = por %p96, %p97
      %p99 = scmp.ne.s32.totalorder %s91, %s93
      %p100 = scmp.eq.s32.totalorder %s20, 1
      %p101 = por %p99, %p100
      %p102 = scmp.ne.s32.totalorder %s93, %s94
      %p103 = scmp.eq.s32.totalorder %s20, 0
      %p104 = por %p102, %p103
      %p105 = scmp.ne.s32.totalorder %s93, %s94
      %p106 = scmp.eq.s32.totalorder %s21, 1
      %p107 = por %p105, %p106
      %p109 = scmp.ne.s32.totalorder %s94, %s108
      %p110 = scmp.eq.s32.totalorder %s21, 0
      %p111 = por %p109, %p110
      %s113 = sadd.s32 %s112, 1
      %p116 = scmp.eq.s32.totalorder %s15, 1
      %p117 = scmp.ne.s32.totalorder %s112, %s114
      %p118 = scmp.eq.s32.totalorder %s15, 0
      %p119 = por %p117, %p118
      %p120 = scmp.ne.s32.totalorder %s112, %s114
      %p121 = scmp.eq.s32.totalorder %s20, 1
      %p122 = por %p120, %p121
      %p123 = scmp.ne.s32.totalorder %s114, %s115
      %p124 = scmp.eq.s32.totalorder %s20, 0
      %p125 = por %p123, %p124
      %p126 = scmp.ne.s32.totalorder %s114, %s115
      %p127 = scmp.eq.s32.totalorder %s21, 1
      %p128 = por %p126, %p127
      %p130 = scmp.ne.s32.totalorder %s115, %s129
      %p131 = scmp.eq.s32.totalorder %s21, 0
      %p132 = por %p130, %p131
      %s134 = sadd.s32 %s133, 1
      %p137 = scmp.eq.s32.totalorder %s15, 1
      %p138 = scmp.ne.s32.totalorder %s133, %s135
      %p139 = scmp.eq.s32.totalorder %s15, 0
      %p140 = por %p138, %p139
      %p141 = scmp.ne.s32.totalorder %s133, %s135
      %p142 = scmp.eq.s32.totalorder %s20, 1
      %p143 = por %p141, %p142
      %p144 = scmp.ne.s32.totalorder %s135, %s136
      %p145 = scmp.eq.s32.totalorder %s20, 0
      %p146 = por %p144, %p145
      %p147 = scmp.ne.s32.totalorder %s135, %s136
      %p148 = scmp.eq.s32.totalorder %s21, 1
      %p149 = por %p147, %p148
      %p151 = scmp.ne.s32.totalorder %s136, %s150
      %p152 = scmp.eq.s32.totalorder %s21, 0
      %p153 = por %p151, %p152
      %s154 = ssub.s32 %s15, %s22
      %p155 = scmp.eq.s32.totalorder %s154, 0
      %s157 = sadd.s32 %s156, 1
      %s158 = scalar_select %p155, %s156, %s157
      %p161 = pneg %p155
      %p162 = scmp.eq.s32.totalorder %s15, 1
      %p163 = por %p161, %p162
      %p164 = scmp.ne.s32.totalorder %s156, %s159
      %p165 = scmp.eq.s32.totalorder %s15, 0
      %p166 = por %p164, %p165
      %p167 = scmp.ne.s32.totalorder %s156, %s159
      %p168 = scmp.eq.s32.totalorder %s20, 1
      %p169 = por %p167, %p168
      %p170 = scmp.ne.s32.totalorder %s159, %s160
      %p171 = scmp.eq.s32.totalorder %s20, 0
      %p172 = por %p170, %p171
      %p173 = scmp.ne.s32.totalorder %s159, %s160
      %p174 = scmp.eq.s32.totalorder %s21, 1
      %p175 = por %p173, %p174
      %p177 = scmp.ne.s32.totalorder %s160, %s176
      %p178 = scmp.eq.s32.totalorder %s21, 0
      %p179 = por %p177, %p178
      %p180 = scmp.le.s32.totalorder 1, %s15
      %p181 = scmp.lt.s32.totalorder %s15, 3
      %p182 = pnand %p180, %p181
      %p183 = pneg %p182
      // Predicated region
      $region9: #{tpu_custom_call.1} parent=5 // pred_check
        _
      $region10: #{tpu_custom_call.1} parent=5 // pred_check_branch
        %185 = sbr.rel (%p182) target = $region12
      $region11: #{tpu_custom_call.1} parent=5 // pred_region
        %s186 = ssub.s32 %s15, 1
        // Predicated region
        $region13: #{tpu_custom_call.1} parent=11 // pred_check
          %p187 = pneg %p62
        $region14: #{tpu_custom_call.1} parent=11 // pred_check_branch
          %189 = sbr.rel (%p187) target = $region16
        $region15: #{tpu_custom_call.1} parent=11 // pred_region
          _
        $region16: #{tpu_custom_call.1} parent=11 // pred_fallthru
          _
        // Predicated region
        $region17: #{tpu_custom_call.1} parent=11 // pred_check
          %p190 = pneg %p83
        $region18: #{tpu_custom_call.1} parent=11 // pred_check_branch
          %192 = sbr.rel (%p190) target = $region20
        $region19: #{tpu_custom_call.1} parent=11 // pred_region
          _
        $region20: #{tpu_custom_call.1} parent=11 // pred_fallthru
          _
        // Predicated region
        $region21: #{tpu_custom_call.1} parent=11 // pred_check
          %p193 = pneg %p104
        $region22: #{tpu_custom_call.1} parent=11 // pred_check_branch
          %195 = sbr.rel (%p193) target = $region24
        $region23: #{tpu_custom_call.1} parent=11 // pred_region
          _
        $region24: #{tpu_custom_call.1} parent=11 // pred_fallthru
          _
        // Predicated region
        $region25: #{tpu_custom_call.1} parent=11 // pred_check
          %p196 = pneg %p125
        $region26: #{tpu_custom_call.1} parent=11 // pred_check_branch
          %198 = sbr.rel (%p196) target = $region28
        $region27: #{tpu_custom_call.1} parent=11 // pred_region
          _
        $region28: #{tpu_custom_call.1} parent=11 // pred_fallthru
          _
        // Predicated region
        $region29: #{tpu_custom_call.1} parent=11 // pred_check
          %p199 = pneg %p146
        $region30: #{tpu_custom_call.1} parent=11 // pred_check_branch
          %201 = sbr.rel (%p199) target = $region32
        $region31: #{tpu_custom_call.1} parent=11 // pred_region
          _
        $region32: #{tpu_custom_call.1} parent=11 // pred_fallthru
          _
      $region12: #{tpu_custom_call.1} parent=5 // pred_fallthru
        _
      %p202 = scmp.lt.s32.totalorder %s15, 2
      // Predicated region
      $region33: #{tpu_custom_call.1} parent=5 // pred_check
        %p203 = pneg %p202
      $region34: #{tpu_custom_call.1} parent=5 // pred_check_branch
        %205 = sbr.rel (%p203) target = $region36
      $region35: #{tpu_custom_call.1} parent=5 // pred_region
        // Predicated region
        $region37: #{tpu_custom_call.1} parent=35 // pred_check
          %p206 = pneg %p35
        $region38: #{tpu_custom_call.1} parent=35 // pred_check_branch
          %208 = sbr.rel (%p206) target = $region40
        $region39: #{tpu_custom_call.1} parent=35 // pred_region
          %p209 = scmp.lt.s32.totalorder %s15, 1
          %s210 = scalar_select %p209, %s15, 1
          %s211 = smul.addr %s210, 2
          %s212 = smul.addr %s211, 8
          %s213 = scalar_lea.vmem %s0, %s212
        $region40: #{tpu_custom_call.1} parent=35 // pred_fallthru
          _
      $region36: #{tpu_custom_call.1} parent=5 // pred_fallthru
        _
      %p214 = scmp.le.s32.totalorder 1, %s15
      %p215 = scmp.lt.s32.totalorder %s15, 3
      %p216 = pnand %p214, %p215
      %p217 = pneg %p216
      // Predicated region
      $region41: #{tpu_custom_call.1} parent=5 // pred_check
        _
      $region42: #{tpu_custom_call.1} parent=5 // pred_check_branch
        %219 = sbr.rel (%p216) target = $region44
      $region43: #{tpu_custom_call.1} parent=5 // pred_region
        %s220 = ssub.s32 %s15, 1
        %p221 = scmp.lt.s32.totalorder %s20, 1
        %s222 = scalar_select %p221, %s20, 1
        %s223 = smul.addr %s222, 2
        %s224 = smul.addr %s223, 8
        %s225 = scalar_lea.vmem %s0, %s224
        %p226 = pneg %p41
        %p227 = pneg %p38
        %p228 = pneg %p62
        %p229 = pneg %p59
        %p230 = pneg %p83
        %p231 = pneg %p80
        %p232 = pneg %p104
        %p233 = pneg %p101
        %p234 = pneg %p125
        %p235 = pneg %p122
        %p236 = pneg %p146
        %p237 = pneg %p143
        %p238 = pneg %p172
        %p239 = pneg %p169
        %s240 = sand.u32 %s159, 1
        %s241 = scalar_lea.sflag [#allocation4], %s240
        %s242 = sand.u32 %s159, 1
        %s243 = smul.addr %s242, 8
        %s244 = scalar_lea.vmem [#allocation3], %s243
        %p245 = scmp.lt.s32.totalorder %s20, 1
        %s246 = scalar_select %p245, %s20, 1
        %s247 = smul.addr %s246, 2
        %s248 = smul.addr %s247, 8
        %s249 = scalar_lea.vmem %s0, %s248
        %vm250 = vcmask 64512
        %251 = vst.msk [vmem:[#allocation2] sm:$0xff] %vm250, 0.0
        %252 = vst.msk [vmem:[#allocation2 + $0x8] sm:$0xff] %vm250, 0.0
        %253 = vst.msk [vmem:[#allocation2 + $0x10] sm:$0xff] %vm250, 0.0
        %254 = vst.msk [vmem:[#allocation2 + $0x18] sm:$0xff] %vm250, 0.0
        %255 = vst.msk [vmem:[#allocation2 + $0x20] sm:$0xff] %vm250, 0.0
        %256 = vst.msk [vmem:[#allocation2 + $0x28] sm:$0xff] %vm250, 0.0
        %257 = vst.msk [vmem:[#allocation2 + $0x30] sm:$0xff] %vm250, 0.0
        %258 = vst.msk [vmem:[#allocation2 + $0x38] sm:$0xff] %vm250, 0.0
        %259 = vst.msk [vmem:[#allocation2 + $0x40] sm:$0xff] %vm250, 0.0
        %260 = vst.msk [vmem:[#allocation2 + $0x48] sm:$0xff] %vm250, 0.0
        %261 = vst.msk [vmem:[#allocation2 + $0x50] sm:$0xff] %vm250, 0.0
        %262 = vst.msk [vmem:[#allocation2 + $0x58] sm:$0xff] %vm250, 0.0
        %263 = vst.msk [vmem:[#allocation2 + $0x60] sm:$0xff] %vm250, 0.0
        %264 = vst.msk [vmem:[#allocation2 + $0x68] sm:$0xff] %vm250, 0.0
        %265 = vst.msk [vmem:[#allocation2 + $0x70] sm:$0xff] %vm250, 0.0
        %266 = vst.msk [vmem:[#allocation2 + $0x78] sm:$0xff] %vm250, 0.0
        %267 = vst.msk [vmem:[#allocation2 + $0x80] sm:$0xff] %vm250, 0.0
        %268 = vst.msk [vmem:[#allocation2 + $0x88] sm:$0xff] %vm250, 0.0
        %269 = vst.msk [vmem:[#allocation2 + $0x90] sm:$0xff] %vm250, 0.0
        %270 = vst.msk [vmem:[#allocation2 + $0x98] sm:$0xff] %vm250, 0.0
        %271 = vst.msk [vmem:[#allocation2 + $0xa0] sm:$0xff] %vm250, 0.0
        %272 = vst.msk [vmem:[#allocation2 + $0xa8] sm:$0xff] %vm250, 0.0
        %273 = vst.msk [vmem:[#allocation2 + $0xb0] sm:$0xff] %vm250, 0.0
        %274 = vst.msk [vmem:[#allocation2 + $0xb8] sm:$0xff] %vm250, 0.0
        %275 = vst.msk [vmem:[#allocation2 + $0xc0] sm:$0xff] %vm250, 0.0
        %276 = vst.msk [vmem:[#allocation2 + $0xc8] sm:$0xff] %vm250, 0.0
        %277 = vst.msk [vmem:[#allocation2 + $0xd0] sm:$0xff] %vm250, 0.0
        %278 = vst.msk [vmem:[#allocation2 + $0xd8] sm:$0xff] %vm250, 0.0
        %279 = vst.msk [vmem:[#allocation2 + $0xe0] sm:$0xff] %vm250, 0.0
        %280 = vst.msk [vmem:[#allocation2 + $0xe8] sm:$0xff] %vm250, 0.0
        %281 = vst.msk [vmem:[#allocation2 + $0xf0] sm:$0xff] %vm250, 0.0
        %282 = vst.msk [vmem:[#allocation2 + $0xf8] sm:$0xff] %vm250, 0.0
        %283 = vst.msk [vmem:[#allocation2 + $0x100] sm:$0xff] %vm250, 0.0
        %284 = vst.msk [vmem:[#allocation2 + $0x108] sm:$0xff] %vm250, 0.0
        %285 = vst.msk [vmem:[#allocation2 + $0x110] sm:$0xff] %vm250, 0.0
        %286 = vst.msk [vmem:[#allocation2 + $0x118] sm:$0xff] %vm250, 0.0
        %287 = vst.msk [vmem:[#allocation2 + $0x120] sm:$0xff] %vm250, 0.0
        %288 = vst.msk [vmem:[#allocation2 + $0x128] sm:$0xff] %vm250, 0.0
        %289 = vst.msk [vmem:[#allocation2 + $0x130] sm:$0xff] %vm250, 0.0
        %290 = vst.msk [vmem:[#allocation2 + $0x138] sm:$0xff] %vm250, 0.0
        %291 = vst.msk [vmem:[#allocation2 + $0x140] sm:$0xff] %vm250, 0.0
        %292 = vst.msk [vmem:[#allocation2 + $0x148] sm:$0xff] %vm250, 0.0
        %293 = vst.msk [vmem:[#allocation2 + $0x150] sm:$0xff] %vm250, 0.0
        %294 = vst.msk [vmem:[#allocation2 + $0x158] sm:$0xff] %vm250, 0.0
        %295 = vst.msk [vmem:[#allocation2 + $0x160] sm:$0xff] %vm250, 0.0
        %296 = vst.msk [vmem:[#allocation2 + $0x168] sm:$0xff] %vm250, 0.0
        %297 = vst.msk [vmem:[#allocation2 + $0x170] sm:$0xff] %vm250, 0.0
        %298 = vst.msk [vmem:[#allocation2 + $0x178] sm:$0xff] %vm250, 0.0
        %299 = vst.msk [vmem:[#allocation2 + $0x180] sm:$0xff] %vm250, 0.0
        %300 = vst.msk [vmem:[#allocation2 + $0x188] sm:$0xff] %vm250, 0.0
        %301 = vst.msk [vmem:[#allocation2 + $0x190] sm:$0xff] %vm250, 0.0
        %302 = vst.msk [vmem:[#allocation2 + $0x198] sm:$0xff] %vm250, 0.0
        %303 = vst.msk [vmem:[#allocation2 + $0x1a0] sm:$0xff] %vm250, 0.0
        %304 = vst.msk [vmem:[#allocation2 + $0x1a8] sm:$0xff] %vm250, 0.0
        %305 = vst.msk [vmem:[#allocation2 + $0x1b0] sm:$0xff] %vm250, 0.0
        %306 = vst.msk [vmem:[#allocation2 + $0x1b8] sm:$0xff] %vm250, 0.0
        %307 = vst.msk [vmem:[#allocation2 + $0x1c0] sm:$0xff] %vm250, 0.0
        %308 = vst.msk [vmem:[#allocation2 + $0x1c8] sm:$0xff] %vm250, 0.0
        %309 = vst.msk [vmem:[#allocation2 + $0x1d0] sm:$0xff] %vm250, 0.0
        %310 = vst.msk [vmem:[#allocation2 + $0x1d8] sm:$0xff] %vm250, 0.0
        %311 = vst.msk [vmem:[#allocation2 + $0x1e0] sm:$0xff] %vm250, 0.0
        %312 = vst.msk [vmem:[#allocation2 + $0x1e8] sm:$0xff] %vm250, 0.0
        %313 = vst.msk [vmem:[#allocation2 + $0x1f0] sm:$0xff] %vm250, 0.0
        %314 = vst.msk [vmem:[#allocation2 + $0x1f8] sm:$0xff] %vm250, 0.0
        %315 = vst.msk [vmem:[#allocation2 + $0x200] sm:$0xff] %vm250, 0.0
        %316 = vst.msk [vmem:[#allocation2 + $0x208] sm:$0xff] %vm250, 0.0
        %317 = vst.msk [vmem:[#allocation2 + $0x210] sm:$0xff] %vm250, 0.0
        %318 = vst.msk [vmem:[#allocation2 + $0x218] sm:$0xff] %vm250, 0.0
        %319 = vst.msk [vmem:[#allocation2 + $0x220] sm:$0xff] %vm250, 0.0
        %320 = vst.msk [vmem:[#allocation2 + $0x228] sm:$0xff] %vm250, 0.0
        %321 = vst.msk [vmem:[#allocation2 + $0x230] sm:$0xff] %vm250, 0.0
        %322 = vst.msk [vmem:[#allocation2 + $0x238] sm:$0xff] %vm250, 0.0
        %v323 = vld [vmem:[%s5] sm:$0xff]
        %v324 = vld [vmem:[%s4] sm:$0x1]
        %v325 = vld [vmem:[%s4 + $0x1] sm:$0x1]
        %v326 = vld [vmem:[%s4 + $0x2] sm:$0x1]
        %v327 = vld [vmem:[%s4 + $0x3] sm:$0x1]
        %v328 = vld [vmem:[%s249] sm:$0xff]
        %v329 = vld [vmem:[%s249 + $0x8] sm:$0xff]
        %330 = vxpose.xlu0.b32.start [1/16] %v328, 128
        %331 = vxpose.xlu0.b32.cont [2/16] 0.0, 128
        %332 = vxpose.xlu0.b32.cont [3/16] 0.0, 128
        %333 = vxpose.xlu0.b32.cont [4/16] 0.0, 128
        %334 = vxpose.xlu0.b32.cont [5/16] 0.0, 128
        %335 = vxpose.xlu0.b32.cont [6/16] 0.0, 128
        %336 = vxpose.xlu0.b32.cont [7/16] 0.0, 128
        %337 = vxpose.xlu0.b32.cont [8/16] 0.0, 128
        %338 = vxpose.xlu0.b32.cont [9/16] 0.0, 128
        %339 = vxpose.xlu0.b32.cont [10/16] 0.0, 128
        %340 = vxpose.xlu0.b32.cont [11/16] 0.0, 128
        %341 = vxpose.xlu0.b32.cont [12/16] 0.0, 128
        %342 = vxpose.xlu0.b32.cont [13/16] 0.0, 128
        %343 = vxpose.xlu0.b32.cont [14/16] 0.0, 128
        %344 = vxpose.xlu0.b32.cont [15/16] 0.0, 128
        %345 = vxpose.xlu0.b32.end [16/16] 0.0, 128
        %v346 = vpop.trf.xlu0
        %v347 = vpop.trf.xlu0
        %v348 = vpop.trf.xlu0
        %v349 = vpop.trf.xlu0
        %v350 = vpop.trf.xlu0
        %v351 = vpop.trf.xlu0
        %v352 = vpop.trf.xlu0
        %v353 = vpop.trf.xlu0
        %v354 = vpop.trf.xlu0
        %v355 = vpop.trf.xlu0
        %v356 = vpop.trf.xlu0
        %v357 = vpop.trf.xlu0
        %v358 = vpop.trf.xlu0
        %v359 = vpop.trf.xlu0
        %v360 = vpop.trf.xlu0
        %v361 = vpop.trf.xlu0
        %362 = vxpose.xlu0.b32.start [1/16] %v329, 128
        %363 = vxpose.xlu0.b32.cont [2/16] 0.0, 128
        %364 = vxpose.xlu0.b32.cont [3/16] 0.0, 128
        %365 = vxpose.xlu0.b32.cont [4/16] 0.0, 128
        %366 = vxpose.xlu0.b32.cont [5/16] 0.0, 128
        %367 = vxpose.xlu0.b32.cont [6/16] 0.0, 128
        %368 = vxpose.xlu0.b32.cont [7/16] 0.0, 128
        %369 = vxpose.xlu0.b32.cont [8/16] 0.0, 128
        %370 = vxpose.xlu0.b32.cont [9/16] 0.0, 128
        %371 = vxpose.xlu0.b32.cont [10/16] 0.0, 128
        %372 = vxpose.xlu0.b32.cont [11/16] 0.0, 128
        %373 = vxpose.xlu0.b32.cont [12/16] 0.0, 128
        %374 = vxpose.xlu0.b32.cont [13/16] 0.0, 128
        %375 = vxpose.xlu0.b32.cont [14/16] 0.0, 128
        %376 = vxpose.xlu0.b32.cont [15/16] 0.0, 128
        %377 = vxpose.xlu0.b32.end [16/16] 0.0, 128
        %v378 = vpop.trf.xlu0
        %v379 = vpop.trf.xlu0
        %v380 = vpop.trf.xlu0
        %v381 = vpop.trf.xlu0
        %v382 = vpop.trf.xlu0
        %v383 = vpop.trf.xlu0
        %v384 = vpop.trf.xlu0
        %v385 = vpop.trf.xlu0
        %v386 = vpop.trf.xlu0
        %v387 = vpop.trf.xlu0
        %v388 = vpop.trf.xlu0
        %v389 = vpop.trf.xlu0
        %v390 = vpop.trf.xlu0
        %v391 = vpop.trf.xlu0
        %v392 = vpop.trf.xlu0
        %v393 = vpop.trf.xlu0
        %s394 = scalar_lea.vmem [#allocation2], 96
        %395 = vst.msk [vmem:[%s394 + $0x4] sm:$0xff] %vm250, %v346
        %396 = vst.msk [vmem:[%s394 + $0xc] sm:$0xff] %vm250, %v347
        %397 = vst.msk [vmem:[%s394 + $0x1c] sm:$0xff] %vm250, %v348
        %398 = vst.msk [vmem:[%s394 + $0x24] sm:$0xff] %vm250, %v349
        %399 = vst.msk [vmem:[%s394 + $0x34] sm:$0xff] %vm250, %v350
        %400 = vst.msk [vmem:[%s394 + $0x3c] sm:$0xff] %vm250, %v351
        %401 = vst.msk [vmem:[%s394 + $0x4c] sm:$0xff] %vm250, %v352
        %402 = vst.msk [vmem:[%s394 + $0x54] sm:$0xff] %vm250, %v353
        %403 = vst.msk [vmem:[%s394 + $0x64] sm:$0xff] %vm250, %v354
        %404 = vst.msk [vmem:[%s394 + $0x6c] sm:$0xff] %vm250, %v355
        %405 = vst.msk [vmem:[%s394 + $0x7c] sm:$0xff] %vm250, %v356
        %406 = vst.msk [vmem:[%s394 + $0x84] sm:$0xff] %vm250, %v357
        %407 = vst.msk [vmem:[%s394 + $0x94] sm:$0xff] %vm250, %v358
        %408 = vst.msk [vmem:[%s394 + $0x9c] sm:$0xff] %vm250, %v359
        %409 = vst.msk [vmem:[%s394 + $0xac] sm:$0xff] %vm250, %v360
        %410 = vst.msk [vmem:[%s394 + $0xb4] sm:$0xff] %vm250, %v361
        %411 = vst.msk [vmem:[%s394 + $0xc4] sm:$0xff] %vm250, %v378
        %412 = vst.msk [vmem:[%s394 + $0xcc] sm:$0xff] %vm250, %v379
        %413 = vst.msk [vmem:[%s394 + $0xdc] sm:$0xff] %vm250, %v380
        %414 = vst.msk [vmem:[%s394 + $0xe4] sm:$0xff] %vm250, %v381
        %415 = vst.msk [vmem:[%s394 + $0xf4] sm:$0xff] %vm250, %v382
        %416 = vst.msk [vmem:[%s394 + $0xfc] sm:$0xff] %vm250, %v383
        %417 = vst.msk [vmem:[%s394 + $0x10c] sm:$0xff] %vm250, %v384
        %418 = vst.msk [vmem:[%s394 + $0x114] sm:$0xff] %vm250, %v385
        %419 = vst.msk [vmem:[%s394 + $0x124] sm:$0xff] %vm250, %v386
        %420 = vst.msk [vmem:[%s394 + $0x12c] sm:$0xff] %vm250, %v387
        %421 = vst.msk [vmem:[%s394 + $0x13c] sm:$0xff] %vm250, %v388
        %422 = vst.msk [vmem:[%s394 + $0x144] sm:$0xff] %vm250, %v389
        %423 = vst.msk [vmem:[%s394 + $0x154] sm:$0xff] %vm250, %v390
        %424 = vst.msk [vmem:[%s394 + $0x15c] sm:$0xff] %vm250, %v391
        %425 = vst.msk [vmem:[%s394 + $0x16c] sm:$0xff] %vm250, %v392
        %426 = vst.msk [vmem:[%s394 + $0x174] sm:$0xff] %vm250, %v393
        %v427 = vld [vmem:[#allocation2] sm:$0xff]
        %v428 = vld [vmem:[#allocation2 + $0x8] sm:$0xff]
        %v429 = vld [vmem:[#allocation2 + $0x18] sm:$0xff]
        %v430 = vld [vmem:[#allocation2 + $0x20] sm:$0xff]
        %v431 = vld [vmem:[#allocation2 + $0x30] sm:$0xff]
        %v432 = vld [vmem:[#allocation2 + $0x38] sm:$0xff]
        %v433 = vld [vmem:[#allocation2 + $0x48] sm:$0xff]
        %v434 = vld [vmem:[#allocation2 + $0x50] sm:$0xff]
        %v435 = vld [vmem:[#allocation2 + $0x60] sm:$0xff]
        %v436 = vld [vmem:[#allocation2 + $0x68] sm:$0xff]
        %v437 = vld [vmem:[#allocation2 + $0x78] sm:$0xff]
        %v438 = vld [vmem:[#allocation2 + $0x80] sm:$0xff]
        %v439 = vld [vmem:[#allocation2 + $0x90] sm:$0xff]
        %v440 = vld [vmem:[#allocation2 + $0x98] sm:$0xff]
        %v441 = vld [vmem:[#allocation2 + $0xa8] sm:$0xff]
        %v442 = vld [vmem:[#allocation2 + $0xb0] sm:$0xff]
        %v443 = vld [vmem:[#allocation2 + $0xc0] sm:$0xff]
        %v444 = vld [vmem:[#allocation2 + $0xc8] sm:$0xff]
        %v445 = vld [vmem:[#allocation2 + $0xd8] sm:$0xff]
        %v446 = vld [vmem:[#allocation2 + $0xe0] sm:$0xff]
        %v447 = vld [vmem:[#allocation2 + $0xf0] sm:$0xff]
        %v448 = vld [vmem:[#allocation2 + $0xf8] sm:$0xff]
        %v449 = vld [vmem:[#allocation2 + $0x108] sm:$0xff]
        %v450 = vld [vmem:[#allocation2 + $0x110] sm:$0xff]
        %v451 = vld [vmem:[#allocation2 + $0x120] sm:$0xff]
        %v452 = vld [vmem:[#allocation2 + $0x128] sm:$0xff]
        %v453 = vld [vmem:[#allocation2 + $0x138] sm:$0xff]
        %v454 = vld [vmem:[#allocation2 + $0x140] sm:$0xff]
        %v455 = vld [vmem:[#allocation2 + $0x150] sm:$0xff]
        %v456 = vld [vmem:[#allocation2 + $0x158] sm:$0xff]
        %v457 = vld [vmem:[#allocation2 + $0x168] sm:$0xff]
        %v458 = vld [vmem:[#allocation2 + $0x170] sm:$0xff]
        %v459 = vld [vmem:[#allocation2 + $0x4] sm:$0xff]
        %v460 = vld [vmem:[#allocation2 + $0xc] sm:$0xff]
        %v461 = vld [vmem:[#allocation2 + $0x1c] sm:$0xff]
        %v462 = vld [vmem:[#allocation2 + $0x24] sm:$0xff]
        %v463 = vld [vmem:[#allocation2 + $0x34] sm:$0xff]
        %v464 = vld [vmem:[#allocation2 + $0x3c] sm:$0xff]
        %v465 = vld [vmem:[#allocation2 + $0x4c] sm:$0xff]
        %v466 = vld [vmem:[#allocation2 + $0x54] sm:$0xff]
        %v467 = vld [vmem:[#allocation2 + $0x64] sm:$0xff]
        %v468 = vld [vmem:[#allocation2 + $0x6c] sm:$0xff]
        %v469 = vld [vmem:[#allocation2 + $0x7c] sm:$0xff]
        %v470 = vld [vmem:[#allocation2 + $0x84] sm:$0xff]
        %v471 = vld [vmem:[#allocation2 + $0x94] sm:$0xff]
        %v472 = vld [vmem:[#allocation2 + $0x9c] sm:$0xff]
        %v473 = vld [vmem:[#allocation2 + $0xac] sm:$0xff]
        %v474 = vld [vmem:[#allocation2 + $0xb4] sm:$0xff]
        %v475 = vld [vmem:[#allocation2 + $0xc4] sm:$0xff]
        %v476 = vld [vmem:[#allocation2 + $0xcc] sm:$0xff]
        %v477 = vld [vmem:[#allocation2 + $0xdc] sm:$0xff]
        %v478 = vld [vmem:[#allocation2 + $0xe4] sm:$0xff]
        %v479 = vld [vmem:[#allocation2 + $0xf4] sm:$0xff]
        %v480 = vld [vmem:[#allocation2 + $0xfc] sm:$0xff]
        %v481 = vld [vmem:[#allocation2 + $0x10c] sm:$0xff]
        %v482 = vld [vmem:[#allocation2 + $0x114] sm:$0xff]
        %v483 = vld [vmem:[#allocation2 + $0x124] sm:$0xff]
        %v484 = vld [vmem:[#allocation2 + $0x12c] sm:$0xff]
        %v485 = vld [vmem:[#allocation2 + $0x13c] sm:$0xff]
        %v486 = vld [vmem:[#allocation2 + $0x144] sm:$0xff]
        %v487 = vld [vmem:[#allocation2 + $0x154] sm:$0xff]
        %v488 = vld [vmem:[#allocation2 + $0x15c] sm:$0xff]
        %v489 = vld [vmem:[#allocation2 + $0x16c] sm:$0xff]
        %v490 = vld [vmem:[#allocation2 + $0x174] sm:$0xff]
        %v491 = vld [vmem:[#allocation2 + $0x10] sm:$0xff]
        %v492 = vld [vmem:[#allocation2 + $0x28] sm:$0xff]
        %v493 = vld [vmem:[#allocation2 + $0x40] sm:$0xff]
        %v494 = vld [vmem:[#allocation2 + $0x58] sm:$0xff]
        %v495 = vld [vmem:[#allocation2 + $0x70] sm:$0xff]
        %v496 = vld [vmem:[#allocation2 + $0x88] sm:$0xff]
        %v497 = vld [vmem:[#allocation2 + $0xa0] sm:$0xff]
        %v498 = vld [vmem:[#allocation2 + $0xb8] sm:$0xff]
        %v499 = vld [vmem:[#allocation2 + $0xd0] sm:$0xff]
        %v500 = vld [vmem:[#allocation2 + $0xe8] sm:$0xff]
        %v501 = vld [vmem:[#allocation2 + $0x100] sm:$0xff]
        %v502 = vld [vmem:[#allocation2 + $0x118] sm:$0xff]
        %v503 = vld [vmem:[#allocation2 + $0x130] sm:$0xff]
        %v504 = vld [vmem:[#allocation2 + $0x148] sm:$0xff]
        %v505 = vld [vmem:[#allocation2 + $0x160] sm:$0xff]
        %v506 = vld [vmem:[#allocation2 + $0x178] sm:$0xff]
        %v507 = vld [vmem:[%s394] sm:$0xff]
        %v508 = vld [vmem:[%s394 + $0x8] sm:$0xff]
        %v509 = vld [vmem:[%s394 + $0x18] sm:$0xff]
        %v510 = vld [vmem:[%s394 + $0x20] sm:$0xff]
        %v511 = vld [vmem:[%s394 + $0x30] sm:$0xff]
        %v512 = vld [vmem:[%s394 + $0x38] sm:$0xff]
        %v513 = vld [vmem:[%s394 + $0x48] sm:$0xff]
        %v514 = vld [vmem:[%s394 + $0x50] sm:$0xff]
        %v515 = vld [vmem:[%s394 + $0x60] sm:$0xff]
        %v516 = vld [vmem:[%s394 + $0x68] sm:$0xff]
        %v517 = vld [vmem:[%s394 + $0x78] sm:$0xff]
        %v518 = vld [vmem:[%s394 + $0x80] sm:$0xff]
        %v519 = vld [vmem:[%s394 + $0x90] sm:$0xff]
        %v520 = vld [vmem:[%s394 + $0x98] sm:$0xff]
        %v521 = vld [vmem:[%s394 + $0xa8] sm:$0xff]
        %v522 = vld [vmem:[%s394 + $0xb0] sm:$0xff]
        %v523 = vld [vmem:[%s394 + $0xc0] sm:$0xff]
        %v524 = vld [vmem:[%s394 + $0xc8] sm:$0xff]
        %v525 = vld [vmem:[%s394 + $0xd8] sm:$0xff]
        %v526 = vld [vmem:[%s394 + $0xe0] sm:$0xff]
        %v527 = vld [vmem:[%s394 + $0xf0] sm:$0xff]
        %v528 = vld [vmem:[%s394 + $0xf8] sm:$0xff]
        %v529 = vld [vmem:[%s394 + $0x108] sm:$0xff]
        %v530 = vld [vmem:[%s394 + $0x110] sm:$0xff]
        %v531 = vld [vmem:[%s394 + $0x120] sm:$0xff]
        %v532 = vld [vmem:[%s394 + $0x128] sm:$0xff]
        %v533 = vld [vmem:[%s394 + $0x138] sm:$0xff]
        %v534 = vld [vmem:[%s394 + $0x140] sm:$0xff]
        %v535 = vld [vmem:[%s394 + $0x150] sm:$0xff]
        %v536 = vld [vmem:[%s394 + $0x158] sm:$0xff]
        %v537 = vld [vmem:[%s394 + $0x168] sm:$0xff]
        %v538 = vld [vmem:[%s394 + $0x170] sm:$0xff]
        %v539 = vld [vmem:[%s394 + $0x10] sm:$0xff]
        %v540 = vld [vmem:[%s394 + $0x28] sm:$0xff]
        %v541 = vld [vmem:[%s394 + $0x40] sm:$0xff]
        %v542 = vld [vmem:[%s394 + $0x58] sm:$0xff]
        %v543 = vld [vmem:[%s394 + $0x70] sm:$0xff]
        %v544 = vld [vmem:[%s394 + $0x88] sm:$0xff]
        %v545 = vld [vmem:[%s394 + $0xa0] sm:$0xff]
        %v546 = vld [vmem:[%s394 + $0xb8] sm:$0xff]
        %v547 = vld [vmem:[%s394 + $0xd0] sm:$0xff]
        %v548 = vld [vmem:[%s394 + $0xe8] sm:$0xff]
        %v549 = vld [vmem:[%s394 + $0x100] sm:$0xff]
        %v550 = vld [vmem:[%s394 + $0x118] sm:$0xff]
        %v551 = vld [vmem:[%s394 + $0x130] sm:$0xff]
        %v552 = vld [vmem:[%s394 + $0x148] sm:$0xff]
        %v553 = vld [vmem:[%s394 + $0x160] sm:$0xff]
        %v554 = vld [vmem:[%s394 + $0x178] sm:$0xff]
        %s555 = scalar_lea.vmem [#allocation2], 192
        %v556 = vld [vmem:[%s555] sm:$0xff]
        %v557 = vld [vmem:[%s555 + $0x8] sm:$0xff]
        %v558 = vld [vmem:[%s555 + $0x18] sm:$0xff]
        %v559 = vld [vmem:[%s555 + $0x20] sm:$0xff]
        %v560 = vld [vmem:[%s555 + $0x30] sm:$0xff]
        %v561 = vld [vmem:[%s555 + $0x38] sm:$0xff]
        %v562 = vld [vmem:[%s555 + $0x48] sm:$0xff]
        %v563 = vld [vmem:[%s555 + $0x50] sm:$0xff]
        %v564 = vld [vmem:[%s555 + $0x60] sm:$0xff]
        %v565 = vld [vmem:[%s555 + $0x68] sm:$0xff]
        %v566 = vld [vmem:[%s555 + $0x78] sm:$0xff]
        %v567 = vld [vmem:[%s555 + $0x80] sm:$0xff]
        %v568 = vld [vmem:[%s555 + $0x90] sm:$0xff]
        %v569 = vld [vmem:[%s555 + $0x98] sm:$0xff]
        %v570 = vld [vmem:[%s555 + $0xa8] sm:$0xff]
        %v571 = vld [vmem:[%s555 + $0xb0] sm:$0xff]
        %v572 = vld [vmem:[%s555 + $0xc0] sm:$0xff]
        %v573 = vld [vmem:[%s555 + $0xc8] sm:$0xff]
        %v574 = vld [vmem:[%s555 + $0xd8] sm:$0xff]
        %v575 = vld [vmem:[%s555 + $0xe0] sm:$0xff]
        %v576 = vld [vmem:[%s555 + $0xf0] sm:$0xff]
        %v577 = vld [vmem:[%s555 + $0xf8] sm:$0xff]
        %v578 = vld [vmem:[%s555 + $0x108] sm:$0xff]
        %v579 = vld [vmem:[%s555 + $0x110] sm:$0xff]
        %v580 = vld [vmem:[%s555 + $0x120] sm:$0xff]
        %v581 = vld [vmem:[%s555 + $0x128] sm:$0xff]
        %v582 = vld [vmem:[%s555 + $0x138] sm:$0xff]
        %v583 = vld [vmem:[%s555 + $0x140] sm:$0xff]
        %v584 = vld [vmem:[%s555 + $0x150] sm:$0xff]
        %v585 = vld [vmem:[%s555 + $0x158] sm:$0xff]
        %v586 = vld [vmem:[%s555 + $0x168] sm:$0xff]
        %v587 = vld [vmem:[%s555 + $0x170] sm:$0xff]
        %v588 = vld [vmem:[%s555 + $0x4] sm:$0xff]
        %v589 = vld [vmem:[%s555 + $0xc] sm:$0xff]
        %v590 = vld [vmem:[%s555 + $0x1c] sm:$0xff]
        %v591 = vld [vmem:[%s555 + $0x24] sm:$0xff]
        %v592 = vld [vmem:[%s555 + $0x34] sm:$0xff]
        %v593 = vld [vmem:[%s555 + $0x3c] sm:$0xff]
        %v594 = vld [vmem:[%s555 + $0x4c] sm:$0xff]
        %v595 = vld [vmem:[%s555 + $0x54] sm:$0xff]
        %v596 = vld [vmem:[%s555 + $0x64] sm:$0xff]
        %v597 = vld [vmem:[%s555 + $0x6c] sm:$0xff]
        %v598 = vld [vmem:[%s555 + $0x7c] sm:$0xff]
        %v599 = vld [vmem:[%s555 + $0x84] sm:$0xff]
        %v600 = vld [vmem:[%s555 + $0x94] sm:$0xff]
        %v601 = vld [vmem:[%s555 + $0x9c] sm:$0xff]
        %v602 = vld [vmem:[%s555 + $0xac] sm:$0xff]
        %v603 = vld [vmem:[%s555 + $0xb4] sm:$0xff]
        %v604 = vld [vmem:[%s555 + $0xc4] sm:$0xff]
        %v605 = vld [vmem:[%s555 + $0xcc] sm:$0xff]
        %v606 = vld [vmem:[%s555 + $0xdc] sm:$0xff]
        %v607 = vld [vmem:[%s555 + $0xe4] sm:$0xff]
        %v608 = vld [vmem:[%s555 + $0xf4] sm:$0xff]
        %v609 = vld [vmem:[%s555 + $0xfc] sm:$0xff]
        %v610 = vld [vmem:[%s555 + $0x10c] sm:$0xff]
        %v611 = vld [vmem:[%s555 + $0x114] sm:$0xff]
        %v612 = vld [vmem:[%s555 + $0x124] sm:$0xff]
        %v613 = vld [vmem:[%s555 + $0x12c] sm:$0xff]
        %v614 = vld [vmem:[%s555 + $0x13c] sm:$0xff]
        %v615 = vld [vmem:[%s555 + $0x144] sm:$0xff]
        %v616 = vld [vmem:[%s555 + $0x154] sm:$0xff]
        %v617 = vld [vmem:[%s555 + $0x15c] sm:$0xff]
        %v618 = vld [vmem:[%s555 + $0x16c] sm:$0xff]
        %v619 = vld [vmem:[%s555 + $0x174] sm:$0xff]
        %v620 = vld [vmem:[%s555 + $0x10] sm:$0xff]
        %v621 = vld [vmem:[%s555 + $0x28] sm:$0xff]
        %v622 = vld [vmem:[%s555 + $0x40] sm:$0xff]
        %v623 = vld [vmem:[%s555 + $0x58] sm:$0xff]
        %v624 = vld [vmem:[%s555 + $0x70] sm:$0xff]
        %v625 = vld [vmem:[%s555 + $0x88] sm:$0xff]
        %v626 = vld [vmem:[%s555 + $0xa0] sm:$0xff]
        %v627 = vld [vmem:[%s555 + $0xb8] sm:$0xff]
        %v628 = vld [vmem:[%s555 + $0xd0] sm:$0xff]
        %v629 = vld [vmem:[%s555 + $0xe8] sm:$0xff]
        %v630 = vld [vmem:[%s555 + $0x100] sm:$0xff]
        %v631 = vld [vmem:[%s555 + $0x118] sm:$0xff]
        %v632 = vld [vmem:[%s555 + $0x130] sm:$0xff]
        %v633 = vld [vmem:[%s555 + $0x148] sm:$0xff]
        %v634 = vld [vmem:[%s555 + $0x160] sm:$0xff]
        %v635 = vld [vmem:[%s555 + $0x178] sm:$0xff]
        %668 = vrot.lane.b32.xlu0 %v459, 8
        %v669 = vpop.permute.xlu0 %668
        %670 = vrot.lane.b32.xlu0 %v460, 8
        %v671 = vpop.permute.xlu0 %670
        %672 = vrot.lane.b32.xlu0 %v461, 8
        %v673 = vpop.permute.xlu0 %672
        %674 = vrot.lane.b32.xlu0 %v462, 8
        %v675 = vpop.permute.xlu0 %674
        %676 = vrot.lane.b32.xlu0 %v463, 8
        %v677 = vpop.permute.xlu0 %676
        %678 = vrot.lane.b32.xlu0 %v464, 8
        %v679 = vpop.permute.xlu0 %678
        %680 = vrot.lane.b32.xlu0 %v465, 8
        %v681 = vpop.permute.xlu0 %680
        %682 = vrot.lane.b32.xlu0 %v466, 8
        %v683 = vpop.permute.xlu0 %682
        %684 = vrot.lane.b32.xlu0 %v467, 8
        %v685 = vpop.permute.xlu0 %684
        %686 = vrot.lane.b32.xlu0 %v468, 8
        %v687 = vpop.permute.xlu0 %686
        %688 = vrot.lane.b32.xlu0 %v469, 8
        %v689 = vpop.permute.xlu0 %688
        %690 = vrot.lane.b32.xlu0 %v470, 8
        %v691 = vpop.permute.xlu0 %690
        %692 = vrot.lane.b32.xlu0 %v471, 8
        %v693 = vpop.permute.xlu0 %692
        %694 = vrot.lane.b32.xlu0 %v472, 8
        %v695 = vpop.permute.xlu0 %694
        %696 = vrot.lane.b32.xlu0 %v473, 8
        %v697 = vpop.permute.xlu0 %696
        %698 = vrot.lane.b32.xlu0 %v474, 8
        %v699 = vpop.permute.xlu0 %698
        %700 = vrot.lane.b32.xlu0 %v475, 8
        %v701 = vpop.permute.xlu0 %700
        %702 = vrot.lane.b32.xlu0 %v476, 8
        %v703 = vpop.permute.xlu0 %702
        %704 = vrot.lane.b32.xlu0 %v477, 8
        %v705 = vpop.permute.xlu0 %704
        %706 = vrot.lane.b32.xlu0 %v478, 8
        %v707 = vpop.permute.xlu0 %706
        %708 = vrot.lane.b32.xlu0 %v479, 8
        %v709 = vpop.permute.xlu0 %708
        %710 = vrot.lane.b32.xlu0 %v480, 8
        %v711 = vpop.permute.xlu0 %710
        %712 = vrot.lane.b32.xlu0 %v481, 8
        %v713 = vpop.permute.xlu0 %712
        %714 = vrot.lane.b32.xlu0 %v482, 8
        %v715 = vpop.permute.xlu0 %714
        %716 = vrot.lane.b32.xlu0 %v483, 8
        %v717 = vpop.permute.xlu0 %716
        %718 = vrot.lane.b32.xlu0 %v484, 8
        %v719 = vpop.permute.xlu0 %718
        %720 = vrot.lane.b32.xlu0 %v485, 8
        %v721 = vpop.permute.xlu0 %720
        %722 = vrot.lane.b32.xlu0 %v486, 8
        %v723 = vpop.permute.xlu0 %722
        %724 = vrot.lane.b32.xlu0 %v487, 8
        %v725 = vpop.permute.xlu0 %724
        %726 = vrot.lane.b32.xlu0 %v488, 8
        %v727 = vpop.permute.xlu0 %726
        %728 = vrot.lane.b32.xlu0 %v489, 8
        %v729 = vpop.permute.xlu0 %728
        %730 = vrot.lane.b32.xlu0 %v490, 8
        %v731 = vpop.permute.xlu0 %730
        %796 = vrot.lane.b32.xlu0 %v428, 16
        %v797 = vpop.permute.xlu0 %796
        %798 = vrot.lane.b32.xlu0 %v491, 16
        %v799 = vpop.permute.xlu0 %798
        %800 = vrot.lane.b32.xlu0 %v430, 16
        %v801 = vpop.permute.xlu0 %800
        %802 = vrot.lane.b32.xlu0 %v492, 16
        %v803 = vpop.permute.xlu0 %802
        %804 = vrot.lane.b32.xlu0 %v432, 16
        %v805 = vpop.permute.xlu0 %804
        %806 = vrot.lane.b32.xlu0 %v493, 16
        %v807 = vpop.permute.xlu0 %806
        %808 = vrot.lane.b32.xlu0 %v434, 16
        %v809 = vpop.permute.xlu0 %808
        %810 = vrot.lane.b32.xlu0 %v494, 16
        %v811 = vpop.permute.xlu0 %810
        %812 = vrot.lane.b32.xlu0 %v436, 16
        %v813 = vpop.permute.xlu0 %812
        %814 = vrot.lane.b32.xlu0 %v495, 16
        %v815 = vpop.permute.xlu0 %814
        %816 = vrot.lane.b32.xlu0 %v438, 16
        %v817 = vpop.permute.xlu0 %816
        %818 = vrot.lane.b32.xlu0 %v496, 16
        %v819 = vpop.permute.xlu0 %818
        %820 = vrot.lane.b32.xlu0 %v440, 16
        %v821 = vpop.permute.xlu0 %820
        %822 = vrot.lane.b32.xlu0 %v497, 16
        %v823 = vpop.permute.xlu0 %822
        %824 = vrot.lane.b32.xlu0 %v442, 16
        %v825 = vpop.permute.xlu0 %824
        %826 = vrot.lane.b32.xlu0 %v498, 16
        %v827 = vpop.permute.xlu0 %826
        %828 = vrot.lane.b32.xlu0 %v444, 16
        %v829 = vpop.permute.xlu0 %828
        %830 = vrot.lane.b32.xlu0 %v499, 16
        %v831 = vpop.permute.xlu0 %830
        %832 = vrot.lane.b32.xlu0 %v446, 16
        %v833 = vpop.permute.xlu0 %832
        %834 = vrot.lane.b32.xlu0 %v500, 16
        %v835 = vpop.permute.xlu0 %834
        %836 = vrot.lane.b32.xlu0 %v448, 16
        %v837 = vpop.permute.xlu0 %836
        %838 = vrot.lane.b32.xlu0 %v501, 16
        %v839 = vpop.permute.xlu0 %838
        %840 = vrot.lane.b32.xlu0 %v450, 16
        %v841 = vpop.permute.xlu0 %840
        %842 = vrot.lane.b32.xlu0 %v502, 16
        %v843 = vpop.permute.xlu0 %842
        %844 = vrot.lane.b32.xlu0 %v452, 16
        %v845 = vpop.permute.xlu0 %844
        %846 = vrot.lane.b32.xlu0 %v503, 16
        %v847 = vpop.permute.xlu0 %846
        %848 = vrot.lane.b32.xlu0 %v454, 16
        %v849 = vpop.permute.xlu0 %848
        %850 = vrot.lane.b32.xlu0 %v504, 16
        %v851 = vpop.permute.xlu0 %850
        %852 = vrot.lane.b32.xlu0 %v456, 16
        %v853 = vpop.permute.xlu0 %852
        %854 = vrot.lane.b32.xlu0 %v505, 16
        %v855 = vpop.permute.xlu0 %854
        %856 = vrot.lane.b32.xlu0 %v458, 16
        %v857 = vpop.permute.xlu0 %856
        %858 = vrot.lane.b32.xlu0 %v506, 16
        %v859 = vpop.permute.xlu0 %858
        %924 = vrot.lane.b32.xlu0 %v507, 24
        %v925 = vpop.permute.xlu0 %924
        %926 = vrot.lane.b32.xlu0 %v508, 24
        %v927 = vpop.permute.xlu0 %926
        %928 = vrot.lane.b32.xlu0 %v509, 24
        %v929 = vpop.permute.xlu0 %928
        %930 = vrot.lane.b32.xlu0 %v510, 24
        %v931 = vpop.permute.xlu0 %930
        %932 = vrot.lane.b32.xlu0 %v511, 24
        %v933 = vpop.permute.xlu0 %932
        %934 = vrot.lane.b32.xlu0 %v512, 24
        %v935 = vpop.permute.xlu0 %934
        %936 = vrot.lane.b32.xlu0 %v513, 24
        %v937 = vpop.permute.xlu0 %936
        %938 = vrot.lane.b32.xlu0 %v514, 24
        %v939 = vpop.permute.xlu0 %938
        %940 = vrot.lane.b32.xlu0 %v515, 24
        %v941 = vpop.permute.xlu0 %940
        %942 = vrot.lane.b32.xlu0 %v516, 24
        %v943 = vpop.permute.xlu0 %942
        %944 = vrot.lane.b32.xlu0 %v517, 24
        %v945 = vpop.permute.xlu0 %944
        %946 = vrot.lane.b32.xlu0 %v518, 24
        %v947 = vpop.permute.xlu0 %946
        %948 = vrot.lane.b32.xlu0 %v519, 24
        %v949 = vpop.permute.xlu0 %948
        %950 = vrot.lane.b32.xlu0 %v520, 24
        %v951 = vpop.permute.xlu0 %950
        %952 = vrot.lane.b32.xlu0 %v521, 24
        %v953 = vpop.permute.xlu0 %952
        %954 = vrot.lane.b32.xlu0 %v522, 24
        %v955 = vpop.permute.xlu0 %954
        %956 = vrot.lane.b32.xlu0 %v523, 24
        %v957 = vpop.permute.xlu0 %956
        %958 = vrot.lane.b32.xlu0 %v524, 24
        %v959 = vpop.permute.xlu0 %958
        %960 = vrot.lane.b32.xlu0 %v525, 24
        %v961 = vpop.permute.xlu0 %960
        %962 = vrot.lane.b32.xlu0 %v526, 24
        %v963 = vpop.permute.xlu0 %962
        %964 = vrot.lane.b32.xlu0 %v527, 24
        %v965 = vpop.permute.xlu0 %964
        %966 = vrot.lane.b32.xlu0 %v528, 24
        %v967 = vpop.permute.xlu0 %966
        %968 = vrot.lane.b32.xlu0 %v529, 24
        %v969 = vpop.permute.xlu0 %968
        %970 = vrot.lane.b32.xlu0 %v530, 24
        %v971 = vpop.permute.xlu0 %970
        %972 = vrot.lane.b32.xlu0 %v531, 24
        %v973 = vpop.permute.xlu0 %972
        %974 = vrot.lane.b32.xlu0 %v532, 24
        %v975 = vpop.permute.xlu0 %974
        %976 = vrot.lane.b32.xlu0 %v533, 24
        %v977 = vpop.permute.xlu0 %976
        %978 = vrot.lane.b32.xlu0 %v534, 24
        %v979 = vpop.permute.xlu0 %978
        %980 = vrot.lane.b32.xlu0 %v535, 24
        %v981 = vpop.permute.xlu0 %980
        %982 = vrot.lane.b32.xlu0 %v536, 24
        %v983 = vpop.permute.xlu0 %982
        %984 = vrot.lane.b32.xlu0 %v537, 24
        %v985 = vpop.permute.xlu0 %984
        %986 = vrot.lane.b32.xlu0 %v538, 24
        %v987 = vpop.permute.xlu0 %986
        %1052 = vrot.lane.b32.xlu0 %v346, 32
        %v1053 = vpop.permute.xlu0 %1052
        %1054 = vrot.lane.b32.xlu0 %v347, 32
        %v1055 = vpop.permute.xlu0 %1054
        %1056 = vrot.lane.b32.xlu0 %v348, 32
        %v1057 = vpop.permute.xlu0 %1056
        %1058 = vrot.lane.b32.xlu0 %v349, 32
        %v1059 = vpop.permute.xlu0 %1058
        %1060 = vrot.lane.b32.xlu0 %v350, 32
        %v1061 = vpop.permute.xlu0 %1060
        %1062 = vrot.lane.b32.xlu0 %v351, 32
        %v1063 = vpop.permute.xlu0 %1062
        %1064 = vrot.lane.b32.xlu0 %v352, 32
        %v1065 = vpop.permute.xlu0 %1064
        %1066 = vrot.lane.b32.xlu0 %v353, 32
        %v1067 = vpop.permute.xlu0 %1066
        %1068 = vrot.lane.b32.xlu0 %v354, 32
        %v1069 = vpop.permute.xlu0 %1068
        %1070 = vrot.lane.b32.xlu0 %v355, 32
        %v1071 = vpop.permute.xlu0 %1070
        %1072 = vrot.lane.b32.xlu0 %v356, 32
        %v1073 = vpop.permute.xlu0 %1072
        %1074 = vrot.lane.b32.xlu0 %v357, 32
        %v1075 = vpop.permute.xlu0 %1074
        %1076 = vrot.lane.b32.xlu0 %v358, 32
        %v1077 = vpop.permute.xlu0 %1076
        %1078 = vrot.lane.b32.xlu0 %v359, 32
        %v1079 = vpop.permute.xlu0 %1078
        %1080 = vrot.lane.b32.xlu0 %v360, 32
        %v1081 = vpop.permute.xlu0 %1080
        %1082 = vrot.lane.b32.xlu0 %v361, 32
        %v1083 = vpop.permute.xlu0 %1082
        %1084 = vrot.lane.b32.xlu0 %v378, 32
        %v1085 = vpop.permute.xlu0 %1084
        %1086 = vrot.lane.b32.xlu0 %v379, 32
        %v1087 = vpop.permute.xlu0 %1086
        %1088 = vrot.lane.b32.xlu0 %v380, 32
        %v1089 = vpop.permute.xlu0 %1088
        %1090 = vrot.lane.b32.xlu0 %v381, 32
        %v1091 = vpop.permute.xlu0 %1090
        %1092 = vrot.lane.b32.xlu0 %v382, 32
        %v1093 = vpop.permute.xlu0 %1092
        %1094 = vrot.lane.b32.xlu0 %v383, 32
        %v1095 = vpop.permute.xlu0 %1094
        %1096 = vrot.lane.b32.xlu0 %v384, 32
        %v1097 = vpop.permute.xlu0 %1096
        %1098 = vrot.lane.b32.xlu0 %v385, 32
        %v1099 = vpop.permute.xlu0 %1098
        %1100 = vrot.lane.b32.xlu0 %v386, 32
        %v1101 = vpop.permute.xlu0 %1100
        %1102 = vrot.lane.b32.xlu0 %v387, 32
        %v1103 = vpop.permute.xlu0 %1102
        %1104 = vrot.lane.b32.xlu0 %v388, 32
        %v1105 = vpop.permute.xlu0 %1104
        %1106 = vrot.lane.b32.xlu0 %v389, 32
        %v1107 = vpop.permute.xlu0 %1106
        %1108 = vrot.lane.b32.xlu0 %v390, 32
        %v1109 = vpop.permute.xlu0 %1108
        %1110 = vrot.lane.b32.xlu0 %v391, 32
        %v1111 = vpop.permute.xlu0 %1110
        %1112 = vrot.lane.b32.xlu0 %v392, 32
        %v1113 = vpop.permute.xlu0 %1112
        %1114 = vrot.lane.b32.xlu0 %v393, 32
        %v1115 = vpop.permute.xlu0 %1114
        %1164 = vrot.lane.b32.xlu0 %v508, 40
        %v1165 = vpop.permute.xlu0 %1164
        %1166 = vrot.lane.b32.xlu0 %v539, 40
        %v1167 = vpop.permute.xlu0 %1166
        %1168 = vrot.lane.b32.xlu0 %v510, 40
        %v1169 = vpop.permute.xlu0 %1168
        %1170 = vrot.lane.b32.xlu0 %v540, 40
        %v1171 = vpop.permute.xlu0 %1170
        %1172 = vrot.lane.b32.xlu0 %v512, 40
        %v1173 = vpop.permute.xlu0 %1172
        %1174 = vrot.lane.b32.xlu0 %v541, 40
        %v1175 = vpop.permute.xlu0 %1174
        %1176 = vrot.lane.b32.xlu0 %v514, 40
        %v1177 = vpop.permute.xlu0 %1176
        %1178 = vrot.lane.b32.xlu0 %v542, 40
        %v1179 = vpop.permute.xlu0 %1178
        %1180 = vrot.lane.b32.xlu0 %v516, 40
        %v1181 = vpop.permute.xlu0 %1180
        %1182 = vrot.lane.b32.xlu0 %v543, 40
        %v1183 = vpop.permute.xlu0 %1182
        %1184 = vrot.lane.b32.xlu0 %v518, 40
        %v1185 = vpop.permute.xlu0 %1184
        %1186 = vrot.lane.b32.xlu0 %v544, 40
        %v1187 = vpop.permute.xlu0 %1186
        %1188 = vrot.lane.b32.xlu0 %v520, 40
        %v1189 = vpop.permute.xlu0 %1188
        %1190 = vrot.lane.b32.xlu0 %v545, 40
        %v1191 = vpop.permute.xlu0 %1190
        %1192 = vrot.lane.b32.xlu0 %v522, 40
        %v1193 = vpop.permute.xlu0 %1192
        %1194 = vrot.lane.b32.xlu0 %v546, 40
        %v1195 = vpop.permute.xlu0 %1194
        %1196 = vrot.lane.b32.xlu0 %v524, 40
        %v1197 = vpop.permute.xlu0 %1196
        %1198 = vrot.lane.b32.xlu0 %v547, 40
        %v1199 = vpop.permute.xlu0 %1198
        %1200 = vrot.lane.b32.xlu0 %v526, 40
        %v1201 = vpop.permute.xlu0 %1200
        %1202 = vrot.lane.b32.xlu0 %v548, 40
        %v1203 = vpop.permute.xlu0 %1202
        %1204 = vrot.lane.b32.xlu0 %v528, 40
        %v1205 = vpop.permute.xlu0 %1204
        %1206 = vrot.lane.b32.xlu0 %v549, 40
        %v1207 = vpop.permute.xlu0 %1206
        %1208 = vrot.lane.b32.xlu0 %v530, 40
        %v1209 = vpop.permute.xlu0 %1208
        %1210 = vrot.lane.b32.xlu0 %v550, 40
        %v1211 = vpop.permute.xlu0 %1210
        %1212 = vrot.lane.b32.xlu0 %v532, 40
        %v1213 = vpop.permute.xlu0 %1212
        %1214 = vrot.lane.b32.xlu0 %v551, 40
        %v1215 = vpop.permute.xlu0 %1214
        %1216 = vrot.lane.b32.xlu0 %v534, 40
        %v1217 = vpop.permute.xlu0 %1216
        %1218 = vrot.lane.b32.xlu0 %v552, 40
        %v1219 = vpop.permute.xlu0 %1218
        %1220 = vrot.lane.b32.xlu0 %v536, 40
        %v1221 = vpop.permute.xlu0 %1220
        %1222 = vrot.lane.b32.xlu0 %v553, 40
        %v1223 = vpop.permute.xlu0 %1222
        %1224 = vrot.lane.b32.xlu0 %v538, 40
        %v1225 = vpop.permute.xlu0 %1224
        %1226 = vrot.lane.b32.xlu0 %v554, 40
        %v1227 = vpop.permute.xlu0 %1226
        %1292 = vrot.lane.b32.xlu0 %v556, 48
        %v1293 = vpop.permute.xlu0 %1292
        %1294 = vrot.lane.b32.xlu0 %v557, 48
        %v1295 = vpop.permute.xlu0 %1294
        %1296 = vrot.lane.b32.xlu0 %v558, 48
        %v1297 = vpop.permute.xlu0 %1296
        %1298 = vrot.lane.b32.xlu0 %v559, 48
        %v1299 = vpop.permute.xlu0 %1298
        %1300 = vrot.lane.b32.xlu0 %v560, 48
        %v1301 = vpop.permute.xlu0 %1300
        %1302 = vrot.lane.b32.xlu0 %v561, 48
        %v1303 = vpop.permute.xlu0 %1302
        %1304 = vrot.lane.b32.xlu0 %v562, 48
        %v1305 = vpop.permute.xlu0 %1304
        %1306 = vrot.lane.b32.xlu0 %v563, 48
        %v1307 = vpop.permute.xlu0 %1306
        %1308 = vrot.lane.b32.xlu0 %v564, 48
        %v1309 = vpop.permute.xlu0 %1308
        %1310 = vrot.lane.b32.xlu0 %v565, 48
        %v1311 = vpop.permute.xlu0 %1310
        %1312 = vrot.lane.b32.xlu0 %v566, 48
        %v1313 = vpop.permute.xlu0 %1312
        %1314 = vrot.lane.b32.xlu0 %v567, 48
        %v1315 = vpop.permute.xlu0 %1314
        %1316 = vrot.lane.b32.xlu0 %v568, 48
        %v1317 = vpop.permute.xlu0 %1316
        %1318 = vrot.lane.b32.xlu0 %v569, 48
        %v1319 = vpop.permute.xlu0 %1318
        %1320 = vrot.lane.b32.xlu0 %v570, 48
        %v1321 = vpop.permute.xlu0 %1320
        %1322 = vrot.lane.b32.xlu0 %v571, 48
        %v1323 = vpop.permute.xlu0 %1322
        %1324 = vrot.lane.b32.xlu0 %v572, 48
        %v1325 = vpop.permute.xlu0 %1324
        %1326 = vrot.lane.b32.xlu0 %v573, 48
        %v1327 = vpop.permute.xlu0 %1326
        %1328 = vrot.lane.b32.xlu0 %v574, 48
        %v1329 = vpop.permute.xlu0 %1328
        %1330 = vrot.lane.b32.xlu0 %v575, 48
        %v1331 = vpop.permute.xlu0 %1330
        %1332 = vrot.lane.b32.xlu0 %v576, 48
        %v1333 = vpop.permute.xlu0 %1332
        %1334 = vrot.lane.b32.xlu0 %v577, 48
        %v1335 = vpop.permute.xlu0 %1334
        %1336 = vrot.lane.b32.xlu0 %v578, 48
        %v1337 = vpop.permute.xlu0 %1336
        %1338 = vrot.lane.b32.xlu0 %v579, 48
        %v1339 = vpop.permute.xlu0 %1338
        %1340 = vrot.lane.b32.xlu0 %v580, 48
        %v1341 = vpop.permute.xlu0 %1340
        %1342 = vrot.lane.b32.xlu0 %v581, 48
        %v1343 = vpop.permute.xlu0 %1342
        %1344 = vrot.lane.b32.xlu0 %v582, 48
        %v1345 = vpop.permute.xlu0 %1344
        %1346 = vrot.lane.b32.xlu0 %v583, 48
        %v1347 = vpop.permute.xlu0 %1346
        %1348 = vrot.lane.b32.xlu0 %v584, 48
        %v1349 = vpop.permute.xlu0 %1348
        %1350 = vrot.lane.b32.xlu0 %v585, 48
        %v1351 = vpop.permute.xlu0 %1350
        %1352 = vrot.lane.b32.xlu0 %v586, 48
        %v1353 = vpop.permute.xlu0 %1352
        %1354 = vrot.lane.b32.xlu0 %v587, 48
        %v1355 = vpop.permute.xlu0 %1354
        %1420 = vrot.lane.b32.xlu0 %v588, 56
        %v1421 = vpop.permute.xlu0 %1420
        %1422 = vrot.lane.b32.xlu0 %v589, 56
        %v1423 = vpop.permute.xlu0 %1422
        %1424 = vrot.lane.b32.xlu0 %v590, 56
        %v1425 = vpop.permute.xlu0 %1424
        %1426 = vrot.lane.b32.xlu0 %v591, 56
        %v1427 = vpop.permute.xlu0 %1426
        %1428 = vrot.lane.b32.xlu0 %v592, 56
        %v1429 = vpop.permute.xlu0 %1428
        %1430 = vrot.lane.b32.xlu0 %v593, 56
        %v1431 = vpop.permute.xlu0 %1430
        %1432 = vrot.lane.b32.xlu0 %v594, 56
        %v1433 = vpop.permute.xlu0 %1432
        %1434 = vrot.lane.b32.xlu0 %v595, 56
        %v1435 = vpop.permute.xlu0 %1434
        %1436 = vrot.lane.b32.xlu0 %v596, 56
        %v1437 = vpop.permute.xlu0 %1436
        %1438 = vrot.lane.b32.xlu0 %v597, 56
        %v1439 = vpop.permute.xlu0 %1438
        %1440 = vrot.lane.b32.xlu0 %v598, 56
        %v1441 = vpop.permute.xlu0 %1440
        %1442 = vrot.lane.b32.xlu0 %v599, 56
        %v1443 = vpop.permute.xlu0 %1442
        %1444 = vrot.lane.b32.xlu0 %v600, 56
        %v1445 = vpop.permute.xlu0 %1444
        %1446 = vrot.lane.b32.xlu0 %v601, 56
        %v1447 = vpop.permute.xlu0 %1446
        %1448 = vrot.lane.b32.xlu0 %v602, 56
        %v1449 = vpop.permute.xlu0 %1448
        %1450 = vrot.lane.b32.xlu0 %v603, 56
        %v1451 = vpop.permute.xlu0 %1450
        %1452 = vrot.lane.b32.xlu0 %v604, 56
        %v1453 = vpop.permute.xlu0 %1452
        %1454 = vrot.lane.b32.xlu0 %v605, 56
        %v1455 = vpop.permute.xlu0 %1454
        %1456 = vrot.lane.b32.xlu0 %v606, 56
        %v1457 = vpop.permute.xlu0 %1456
        %1458 = vrot.lane.b32.xlu0 %v607, 56
        %v1459 = vpop.permute.xlu0 %1458
        %1460 = vrot.lane.b32.xlu0 %v608, 56
        %v1461 = vpop.permute.xlu0 %1460
        %1462 = vrot.lane.b32.xlu0 %v609, 56
        %v1463 = vpop.permute.xlu0 %1462
        %1464 = vrot.lane.b32.xlu0 %v610, 56
        %v1465 = vpop.permute.xlu0 %1464
        %1466 = vrot.lane.b32.xlu0 %v611, 56
        %v1467 = vpop.permute.xlu0 %1466
        %1468 = vrot.lane.b32.xlu0 %v612, 56
        %v1469 = vpop.permute.xlu0 %1468
        %1470 = vrot.lane.b32.xlu0 %v613, 56
        %v1471 = vpop.permute.xlu0 %1470
        %1472 = vrot.lane.b32.xlu0 %v614, 56
        %v1473 = vpop.permute.xlu0 %1472
        %1474 = vrot.lane.b32.xlu0 %v615, 56
        %v1475 = vpop.permute.xlu0 %1474
        %1476 = vrot.lane.b32.xlu0 %v616, 56
        %v1477 = vpop.permute.xlu0 %1476
        %1478 = vrot.lane.b32.xlu0 %v617, 56
        %v1479 = vpop.permute.xlu0 %1478
        %1480 = vrot.lane.b32.xlu0 %v618, 56
        %v1481 = vpop.permute.xlu0 %1480
        %1482 = vrot.lane.b32.xlu0 %v619, 56
        %v1483 = vpop.permute.xlu0 %1482
        %1532 = vrot.lane.b32.xlu0 %v557, 64
        %v1533 = vpop.permute.xlu0 %1532
        %1534 = vrot.lane.b32.xlu0 %v620, 64
        %v1535 = vpop.permute.xlu0 %1534
        %1536 = vrot.lane.b32.xlu0 %v559, 64
        %v1537 = vpop.permute.xlu0 %1536
        %1538 = vrot.lane.b32.xlu0 %v621, 64
        %v1539 = vpop.permute.xlu0 %1538
        %1540 = vrot.lane.b32.xlu0 %v561, 64
        %v1541 = vpop.permute.xlu0 %1540
        %1542 = vrot.lane.b32.xlu0 %v622, 64
        %v1543 = vpop.permute.xlu0 %1542
        %1544 = vrot.lane.b32.xlu0 %v563, 64
        %v1545 = vpop.permute.xlu0 %1544
        %1546 = vrot.lane.b32.xlu0 %v623, 64
        %v1547 = vpop.permute.xlu0 %1546
        %1548 = vrot.lane.b32.xlu0 %v565, 64
        %v1549 = vpop.permute.xlu0 %1548
        %1550 = vrot.lane.b32.xlu0 %v624, 64
        %v1551 = vpop.permute.xlu0 %1550
        %1552 = vrot.lane.b32.xlu0 %v567, 64
        %v1553 = vpop.permute.xlu0 %1552
        %1554 = vrot.lane.b32.xlu0 %v625, 64
        %v1555 = vpop.permute.xlu0 %1554
        %1556 = vrot.lane.b32.xlu0 %v569, 64
        %v1557 = vpop.permute.xlu0 %1556
        %1558 = vrot.lane.b32.xlu0 %v626, 64
        %v1559 = vpop.permute.xlu0 %1558
        %1560 = vrot.lane.b32.xlu0 %v571, 64
        %v1561 = vpop.permute.xlu0 %1560
        %1562 = vrot.lane.b32.xlu0 %v627, 64
        %v1563 = vpop.permute.xlu0 %1562
        %1564 = vrot.lane.b32.xlu0 %v573, 64
        %v1565 = vpop.permute.xlu0 %1564
        %1566 = vrot.lane.b32.xlu0 %v628, 64
        %v1567 = vpop.permute.xlu0 %1566
        %1568 = vrot.lane.b32.xlu0 %v575, 64
        %v1569 = vpop.permute.xlu0 %1568
        %1570 = vrot.lane.b32.xlu0 %v629, 64
        %v1571 = vpop.permute.xlu0 %1570
        %1572 = vrot.lane.b32.xlu0 %v577, 64
        %v1573 = vpop.permute.xlu0 %1572
        %1574 = vrot.lane.b32.xlu0 %v630, 64
        %v1575 = vpop.permute.xlu0 %1574
        %1576 = vrot.lane.b32.xlu0 %v579, 64
        %v1577 = vpop.permute.xlu0 %1576
        %1578 = vrot.lane.b32.xlu0 %v631, 64
        %v1579 = vpop.permute.xlu0 %1578
        %1580 = vrot.lane.b32.xlu0 %v581, 64
        %v1581 = vpop.permute.xlu0 %1580
        %1582 = vrot.lane.b32.xlu0 %v632, 64
        %v1583 = vpop.permute.xlu0 %1582
        %1584 = vrot.lane.b32.xlu0 %v583, 64
        %v1585 = vpop.permute.xlu0 %1584
        %1586 = vrot.lane.b32.xlu0 %v633, 64
        %v1587 = vpop.permute.xlu0 %1586
        %1588 = vrot.lane.b32.xlu0 %v585, 64
        %v1589 = vpop.permute.xlu0 %1588
        %1590 = vrot.lane.b32.xlu0 %v634, 64
        %v1591 = vpop.permute.xlu0 %1590
        %1592 = vrot.lane.b32.xlu0 %v587, 64
        %v1593 = vpop.permute.xlu0 %1592
        %1594 = vrot.lane.b32.xlu0 %v635, 64
        %v1595 = vpop.permute.xlu0 %1594
        %v1628 = vsel %vm250, %v427, %v669
        %v1629 = vsel %vm250, %v428, %v671
        %v1630 = vsel %vm250, %v429, %v673
        %v1631 = vsel %vm250, %v430, %v675
        %v1632 = vsel %vm250, %v431, %v677
        %v1633 = vsel %vm250, %v432, %v679
        %v1634 = vsel %vm250, %v433, %v681
        %v1635 = vsel %vm250, %v434, %v683
        %v1636 = vsel %vm250, %v435, %v685
        %v1637 = vsel %vm250, %v436, %v687
        %v1638 = vsel %vm250, %v437, %v689
        %v1639 = vsel %vm250, %v438, %v691
        %v1640 = vsel %vm250, %v439, %v693
        %v1641 = vsel %vm250, %v440, %v695
        %v1642 = vsel %vm250, %v441, %v697
        %v1643 = vsel %vm250, %v442, %v699
        %v1644 = vsel %vm250, %v443, %v701
        %v1645 = vsel %vm250, %v444, %v703
        %v1646 = vsel %vm250, %v445, %v705
        %v1647 = vsel %vm250, %v446, %v707
        %v1648 = vsel %vm250, %v447, %v709
        %v1649 = vsel %vm250, %v448, %v711
        %v1650 = vsel %vm250, %v449, %v713
        %v1651 = vsel %vm250, %v450, %v715
        %v1652 = vsel %vm250, %v451, %v717
        %v1653 = vsel %vm250, %v452, %v719
        %v1654 = vsel %vm250, %v453, %v721
        %v1655 = vsel %vm250, %v454, %v723
        %v1656 = vsel %vm250, %v455, %v725
        %v1657 = vsel %vm250, %v456, %v727
        %v1658 = vsel %vm250, %v457, %v729
        %v1659 = vsel %vm250, %v458, %v731
        %vm1660 = vcmask 130048
        %v1661 = vsel %vm1660, %v1628, %v797
        %v1662 = vsel %vm1660, %v1629, %v799
        %v1663 = vsel %vm1660, %v1630, %v801
        %v1664 = vsel %vm1660, %v1631, %v803
        %v1665 = vsel %vm1660, %v1632, %v805
        %v1666 = vsel %vm1660, %v1633, %v807
        %v1667 = vsel %vm1660, %v1634, %v809
        %v1668 = vsel %vm1660, %v1635, %v811
        %v1669 = vsel %vm1660, %v1636, %v813
        %v1670 = vsel %vm1660, %v1637, %v815
        %v1671 = vsel %vm1660, %v1638, %v817
        %v1672 = vsel %vm1660, %v1639, %v819
        %v1673 = vsel %vm1660, %v1640, %v821
        %v1674 = vsel %vm1660, %v1641, %v823
        %v1675 = vsel %vm1660, %v1642, %v825
        %v1676 = vsel %vm1660, %v1643, %v827
        %v1677 = vsel %vm1660, %v1644, %v829
        %v1678 = vsel %vm1660, %v1645, %v831
        %v1679 = vsel %vm1660, %v1646, %v833
        %v1680 = vsel %vm1660, %v1647, %v835
        %v1681 = vsel %vm1660, %v1648, %v837
        %v1682 = vsel %vm1660, %v1649, %v839
        %v1683 = vsel %vm1660, %v1650, %v841
        %v1684 = vsel %vm1660, %v1651, %v843
        %v1685 = vsel %vm1660, %v1652, %v845
        %v1686 = vsel %vm1660, %v1653, %v847
        %v1687 = vsel %vm1660, %v1654, %v849
        %v1688 = vsel %vm1660, %v1655, %v851
        %v1689 = vsel %vm1660, %v1656, %v853
        %v1690 = vsel %vm1660, %v1657, %v855
        %v1691 = vsel %vm1660, %v1658, %v857
        %v1692 = vsel %vm1660, %v1659, %v859
        %vm1693 = vcmask 195584
        %v1694 = vsel %vm1693, %v1661, %v925
        %v1695 = vsel %vm1693, %v1662, %v927
        %v1696 = vsel %vm1693, %v1663, %v929
        %v1697 = vsel %vm1693, %v1664, %v931
        %v1698 = vsel %vm1693, %v1665, %v933
        %v1699 = vsel %vm1693, %v1666, %v935
        %v1700 = vsel %vm1693, %v1667, %v937
        %v1701 = vsel %vm1693, %v1668, %v939
        %v1702 = vsel %vm1693, %v1669, %v941
        %v1703 = vsel %vm1693, %v1670, %v943
        %v1704 = vsel %vm1693, %v1671, %v945
        %v1705 = vsel %vm1693, %v1672, %v947
        %v1706 = vsel %vm1693, %v1673, %v949
        %v1707 = vsel %vm1693, %v1674, %v951
        %v1708 = vsel %vm1693, %v1675, %v953
        %v1709 = vsel %vm1693, %v1676, %v955
        %v1710 = vsel %vm1693, %v1677, %v957
        %v1711 = vsel %vm1693, %v1678, %v959
        %v1712 = vsel %vm1693, %v1679, %v961
        %v1713 = vsel %vm1693, %v1680, %v963
        %v1714 = vsel %vm1693, %v1681, %v965
        %v1715 = vsel %vm1693, %v1682, %v967
        %v1716 = vsel %vm1693, %v1683, %v969
        %v1717 = vsel %vm1693, %v1684, %v971
        %v1718 = vsel %vm1693, %v1685, %v973
        %v1719 = vsel %vm1693, %v1686, %v975
        %v1720 = vsel %vm1693, %v1687, %v977
        %v1721 = vsel %vm1693, %v1688, %v979
        %v1722 = vsel %vm1693, %v1689, %v981
        %v1723 = vsel %vm1693, %v1690, %v983
        %v1724 = vsel %vm1693, %v1691, %v985
        %v1725 = vsel %vm1693, %v1692, %v987
        %vm1726 = vcmask 261120
        %v1727 = vsel %vm1726, %v1694, %v1053
        %v1728 = vsel %vm1726, %v1695, %v1055
        %v1729 = vsel %vm1726, %v1696, %v1057
        %v1730 = vsel %vm1726, %v1697, %v1059
        %v1731 = vsel %vm1726, %v1698, %v1061
        %v1732 = vsel %vm1726, %v1699, %v1063
        %v1733 = vsel %vm1726, %v1700, %v1065
        %v1734 = vsel %vm1726, %v1701, %v1067
        %v1735 = vsel %vm1726, %v1702, %v1069
        %v1736 = vsel %vm1726, %v1703, %v1071
        %v1737 = vsel %vm1726, %v1704, %v1073
        %v1738 = vsel %vm1726, %v1705, %v1075
        %v1739 = vsel %vm1726, %v1706, %v1077
        %v1740 = vsel %vm1726, %v1707, %v1079
        %v1741 = vsel %vm1726, %v1708, %v1081
        %v1742 = vsel %vm1726, %v1709, %v1083
        %v1743 = vsel %vm1726, %v1710, %v1085
        %v1744 = vsel %vm1726, %v1711, %v1087
        %v1745 = vsel %vm1726, %v1712, %v1089
        %v1746 = vsel %vm1726, %v1713, %v1091
        %v1747 = vsel %vm1726, %v1714, %v1093
        %v1748 = vsel %vm1726, %v1715, %v1095
        %v1749 = vsel %vm1726, %v1716, %v1097
        %v1750 = vsel %vm1726, %v1717, %v1099
        %v1751 = vsel %vm1726, %v1718, %v1101
        %v1752 = vsel %vm1726, %v1719, %v1103
        %v1753 = vsel %vm1726, %v1720, %v1105
        %v1754 = vsel %vm1726, %v1721, %v1107
        %v1755 = vsel %vm1726, %v1722, %v1109
        %v1756 = vsel %vm1726, %v1723, %v1111
        %v1757 = vsel %vm1726, %v1724, %v1113
        %v1758 = vsel %vm1726, %v1725, %v1115
        %vm1759 = vcmask 326656
        %v1760 = vsel %vm1759, %v1727, %v1165
        %v1761 = vsel %vm1759, %v1728, %v1167
        %v1762 = vsel %vm1759, %v1729, %v1169
        %v1763 = vsel %vm1759, %v1730, %v1171
        %v1764 = vsel %vm1759, %v1731, %v1173
        %v1765 = vsel %vm1759, %v1732, %v1175
        %v1766 = vsel %vm1759, %v1733, %v1177
        %v1767 = vsel %vm1759, %v1734, %v1179
        %v1768 = vsel %vm1759, %v1735, %v1181
        %v1769 = vsel %vm1759, %v1736, %v1183
        %v1770 = vsel %vm1759, %v1737, %v1185
        %v1771 = vsel %vm1759, %v1738, %v1187
        %v1772 = vsel %vm1759, %v1739, %v1189
        %v1773 = vsel %vm1759, %v1740, %v1191
        %v1774 = vsel %vm1759, %v1741, %v1193
        %v1775 = vsel %vm1759, %v1742, %v1195
        %v1776 = vsel %vm1759, %v1743, %v1197
        %v1777 = vsel %vm1759, %v1744, %v1199
        %v1778 = vsel %vm1759, %v1745, %v1201
        %v1779 = vsel %vm1759, %v1746, %v1203
        %v1780 = vsel %vm1759, %v1747, %v1205
        %v1781 = vsel %vm1759, %v1748, %v1207
        %v1782 = vsel %vm1759, %v1749, %v1209
        %v1783 = vsel %vm1759, %v1750, %v1211
        %v1784 = vsel %vm1759, %v1751, %v1213
        %v1785 = vsel %vm1759, %v1752, %v1215
        %v1786 = vsel %vm1759, %v1753, %v1217
        %v1787 = vsel %vm1759, %v1754, %v1219
        %v1788 = vsel %vm1759, %v1755, %v1221
        %v1789 = vsel %vm1759, %v1756, %v1223
        %v1790 = vsel %vm1759, %v1757, %v1225
        %v1791 = vsel %vm1759, %v1758, %v1227
        %vm1792 = vcmask 392192
        %v1793 = vsel %vm1792, %v1760, %v1293
        %v1794 = vsel %vm1792, %v1761, %v1295
        %v1795 = vsel %vm1792, %v1762, %v1297
        %v1796 = vsel %vm1792, %v1763, %v1299
        %v1797 = vsel %vm1792, %v1764, %v1301
        %v1798 = vsel %vm1792, %v1765, %v1303
        %v1799 = vsel %vm1792, %v1766, %v1305
        %v1800 = vsel %vm1792, %v1767, %v1307
        %v1801 = vsel %vm1792, %v1768, %v1309
        %v1802 = vsel %vm1792, %v1769, %v1311
        %v1803 = vsel %vm1792, %v1770, %v1313
        %v1804 = vsel %vm1792, %v1771, %v1315
        %v1805 = vsel %vm1792, %v1772, %v1317
        %v1806 = vsel %vm1792, %v1773, %v1319
        %v1807 = vsel %vm1792, %v1774, %v1321
        %v1808 = vsel %vm1792, %v1775, %v1323
        %v1809 = vsel %vm1792, %v1776, %v1325
        %v1810 = vsel %vm1792, %v1777, %v1327
        %v1811 = vsel %vm1792, %v1778, %v1329
        %v1812 = vsel %vm1792, %v1779, %v1331
        %v1813 = vsel %vm1792, %v1780, %v1333
        %v1814 = vsel %vm1792, %v1781, %v1335
        %v1815 = vsel %vm1792, %v1782, %v1337
        %v1816 = vsel %vm1792, %v1783, %v1339
        %v1817 = vsel %vm1792, %v1784, %v1341
        %v1818 = vsel %vm1792, %v1785, %v1343
        %v1819 = vsel %vm1792, %v1786, %v1345
        %v1820 = vsel %vm1792, %v1787, %v1347
        %v1821 = vsel %vm1792, %v1788, %v1349
        %v1822 = vsel %vm1792, %v1789, %v1351
        %v1823 = vsel %vm1792, %v1790, %v1353
        %v1824 = vsel %vm1792, %v1791, %v1355
        %vm1825 = vcmask 457728
        %v1826 = vsel %vm1825, %v1793, %v1421
        %v1827 = vsel %vm1825, %v1794, %v1423
        %v1828 = vsel %vm1825, %v1795, %v1425
        %v1829 = vsel %vm1825, %v1796, %v1427
        %v1830 = vsel %vm1825, %v1797, %v1429
        %v1831 = vsel %vm1825, %v1798, %v1431
        %v1832 = vsel %vm1825, %v1799, %v1433
        %v1833 = vsel %vm1825, %v1800, %v1435
        %v1834 = vsel %vm1825, %v1801, %v1437
        %v1835 = vsel %vm1825, %v1802, %v1439
        %v1836 = vsel %vm1825, %v1803, %v1441
        %v1837 = vsel %vm1825, %v1804, %v1443
        %v1838 = vsel %vm1825, %v1805, %v1445
        %v1839 = vsel %vm1825, %v1806, %v1447
        %v1840 = vsel %vm1825, %v1807, %v1449
        %v1841 = vsel %vm1825, %v1808, %v1451
        %v1842 = vsel %vm1825, %v1809, %v1453
        %v1843 = vsel %vm1825, %v1810, %v1455
        %v1844 = vsel %vm1825, %v1811, %v1457
        %v1845 = vsel %vm1825, %v1812, %v1459
        %v1846 = vsel %vm1825, %v1813, %v1461
        %v1847 = vsel %vm1825, %v1814, %v1463
        %v1848 = vsel %vm1825, %v1815, %v1465
        %v1849 = vsel %vm1825, %v1816, %v1467
        %v1850 = vsel %vm1825, %v1817, %v1469
        %v1851 = vsel %vm1825, %v1818, %v1471
        %v1852 = vsel %vm1825, %v1819, %v1473
        %v1853 = vsel %vm1825, %v1820, %v1475
        %v1854 = vsel %vm1825, %v1821, %v1477
        %v1855 = vsel %vm1825, %v1822, %v1479
        %v1856 = vsel %vm1825, %v1823, %v1481
        %v1857 = vsel %vm1825, %v1824, %v1483
        %vm1858 = vcmask 523264
        %v1859 = vsel %vm1858, %v1826, %v1533
        %v1860 = vsel %vm1858, %v1827, %v1535
        %v1861 = vsel %vm1858, %v1828, %v1537
        %v1862 = vsel %vm1858, %v1829, %v1539
        %v1863 = vsel %vm1858, %v1830, %v1541
        %v1864 = vsel %vm1858, %v1831, %v1543
        %v1865 = vsel %vm1858, %v1832, %v1545
        %v1866 = vsel %vm1858, %v1833, %v1547
        %v1867 = vsel %vm1858, %v1834, %v1549
        %v1868 = vsel %vm1858, %v1835, %v1551
        %v1869 = vsel %vm1858, %v1836, %v1553
        %v1870 = vsel %vm1858, %v1837, %v1555
        %v1871 = vsel %vm1858, %v1838, %v1557
        %v1872 = vsel %vm1858, %v1839, %v1559
        %v1873 = vsel %vm1858, %v1840, %v1561
        %v1874 = vsel %vm1858, %v1841, %v1563
        %v1875 = vsel %vm1858, %v1842, %v1565
        %v1876 = vsel %vm1858, %v1843, %v1567
        %v1877 = vsel %vm1858, %v1844, %v1569
        %v1878 = vsel %vm1858, %v1845, %v1571
        %v1879 = vsel %vm1858, %v1846, %v1573
        %v1880 = vsel %vm1858, %v1847, %v1575
        %v1881 = vsel %vm1858, %v1848, %v1577
        %v1882 = vsel %vm1858, %v1849, %v1579
        %v1883 = vsel %vm1858, %v1850, %v1581
        %v1884 = vsel %vm1858, %v1851, %v1583
        %v1885 = vsel %vm1858, %v1852, %v1585
        %v1886 = vsel %vm1858, %v1853, %v1587
        %v1887 = vsel %vm1858, %v1854, %v1589
        %v1888 = vsel %vm1858, %v1855, %v1591
        %v1889 = vsel %vm1858, %v1856, %v1593
        %v1890 = vsel %vm1858, %v1857, %v1595
        %v1891 = vld [vmem:[%s1] sm:$0xff]
        %v1892 = vld [vmem:[%s1 + $0x8] sm:$0xff]
        %v1893 = vld [vmem:[%s1 + $0x10] sm:$0xff]
        %v1894 = vld [vmem:[%s1 + $0x18] sm:$0xff]
        %v1895 = vld [vmem:[%s1 + $0x20] sm:$0xff]
        %v1896 = vld [vmem:[%s1 + $0x28] sm:$0xff]
        %v1897 = vld [vmem:[%s1 + $0x30] sm:$0xff]
        %v1898 = vld [vmem:[%s1 + $0x38] sm:$0xff]
        %v1899 = vld [vmem:[%s1 + $0x40] sm:$0xff]
        %vm1900 = vcmask 588800
        %v1902 = vsel %vm1900, %v1859, 0
        %v1905 = vsel %vm1900, %v1860, 0
        %v1908 = vsel %vm1900, %v1861, 0
        %v1911 = vsel %vm1900, %v1862, 0
        %v1914 = vsel %vm1900, %v1863, 0
        %v1917 = vsel %vm1900, %v1864, 0
        %v1920 = vsel %vm1900, %v1865, 0
        %v1923 = vsel %vm1900, %v1866, 0
        %v1926 = vsel %vm1900, %v1867, 0
        %v1929 = vsel %vm1900, %v1868, 0
        %v1932 = vsel %vm1900, %v1869, 0
        %v1935 = vsel %vm1900, %v1870, 0
        %v1938 = vsel %vm1900, %v1871, 0
        %v1941 = vsel %vm1900, %v1872, 0
        %v1944 = vsel %vm1900, %v1873, 0
        %v1947 = vsel %vm1900, %v1874, 0
        %v1950 = vsel %vm1900, %v1875, 0
        %v1953 = vsel %vm1900, %v1876, 0
        %v1956 = vsel %vm1900, %v1877, 0
        %v1959 = vsel %vm1900, %v1878, 0
        %v1962 = vsel %vm1900, %v1879, 0
        %v1965 = vsel %vm1900, %v1880, 0
        %v1968 = vsel %vm1900, %v1881, 0
        %v1971 = vsel %vm1900, %v1882, 0
        %v1974 = vsel %vm1900, %v1883, 0
        %v1977 = vsel %vm1900, %v1884, 0
        %v1980 = vsel %vm1900, %v1885, 0
        %v1983 = vsel %vm1900, %v1886, 0
        %v1986 = vsel %vm1900, %v1887, 0
        %v1989 = vsel %vm1900, %v1888, 0
        %v1992 = vsel %vm1900, %v1889, 0
        %v1995 = vsel %vm1900, %v1890, 0
        %1997 = vmatpush.msra.mxu0 0.0
        %1998 = vmatpush.msra.mxu0 0.0
        %1999 = vmatpush.msra.mxu0 0.0
        %2000 = vmatpush.msra.mxu0 0.0
        %2001 = vmatpush.msra.mxu0 0.0
        %2002 = vmatpush.msra.mxu0 0.0
        %2003 = vmatpush.msra.mxu0 0.0
        %2004 = vmatpush.msra.mxu0 %v1899
        %2005 = vmatpush.msra.mxu0 %v1898
        %2006 = vmatpush.msra.mxu0 %v1897
        %2007 = vmatpush.msra.mxu0 %v1896
        %2008 = vmatpush.msra.mxu0 %v1895
        %2009 = vmatpush.msra.mxu0 %v1894
        %2010 = vmatpush.msra.mxu0 %v1893
        %2011 = vmatpush.msra.mxu0 %v1892
        %2012 = vmatpush.msra.mxu0 %v1891
        %2013 = vmatmul.f32.gmra.mxu0 %v1902
        %v2014 = vpop.f32.mrf.mxu0
        %v2015 = vadd.f32 0.0, %v2014
        %2016 = vmatmul.f32.gmra.mxu0 %v1905
        %v2017 = vpop.f32.mrf.mxu0
        %v2018 = vadd.f32 0.0, %v2017
        %2019 = vmatmul.f32.gmra.mxu0 %v1908
        %v2020 = vpop.f32.mrf.mxu0
        %v2021 = vadd.f32 0.0, %v2020
        %2022 = vmatmul.f32.gmra.mxu0 %v1911
        %v2023 = vpop.f32.mrf.mxu0
        %v2024 = vadd.f32 0.0, %v2023
        %2025 = vmatmul.f32.gmra.mxu0 %v1914
        %v2026 = vpop.f32.mrf.mxu0
        %v2027 = vadd.f32 0.0, %v2026
        %2028 = vmatmul.f32.gmra.mxu0 %v1917
        %v2029 = vpop.f32.mrf.mxu0
        %v2030 = vadd.f32 0.0, %v2029
        %2031 = vmatmul.f32.gmra.mxu0 %v1920
        %v2032 = vpop.f32.mrf.mxu0
        %v2033 = vadd.f32 0.0, %v2032
        %2034 = vmatmul.f32.gmra.mxu0 %v1923
        %v2035 = vpop.f32.mrf.mxu0
        %v2036 = vadd.f32 0.0, %v2035
        %2037 = vmatmul.f32.gmra.mxu0 %v1926
        %v2038 = vpop.f32.mrf.mxu0
        %v2039 = vadd.f32 0.0, %v2038
        %2040 = vmatmul.f32.gmra.mxu0 %v1929
        %v2041 = vpop.f32.mrf.mxu0
        %v2042 = vadd.f32 0.0, %v2041
        %2043 = vmatmul.f32.gmra.mxu0 %v1932
        %v2044 = vpop.f32.mrf.mxu0
        %v2045 = vadd.f32 0.0, %v2044
        %2046 = vmatmul.f32.gmra.mxu0 %v1935
        %v2047 = vpop.f32.mrf.mxu0
        %v2048 = vadd.f32 0.0, %v2047
        %2049 = vmatmul.f32.gmra.mxu0 %v1938
        %v2050 = vpop.f32.mrf.mxu0
        %v2051 = vadd.f32 0.0, %v2050
        %2052 = vmatmul.f32.gmra.mxu0 %v1941
        %v2053 = vpop.f32.mrf.mxu0
        %v2054 = vadd.f32 0.0, %v2053
        %2055 = vmatmul.f32.gmra.mxu0 %v1944
        %v2056 = vpop.f32.mrf.mxu0
        %v2057 = vadd.f32 0.0, %v2056
        %2058 = vmatmul.f32.gmra.mxu0 %v1947
        %v2059 = vpop.f32.mrf.mxu0
        %v2060 = vadd.f32 0.0, %v2059
        %2061 = vmatmul.f32.gmra.mxu0 %v1950
        %v2062 = vpop.f32.mrf.mxu0
        %v2063 = vadd.f32 0.0, %v2062
        %2064 = vmatmul.f32.gmra.mxu0 %v1953
        %v2065 = vpop.f32.mrf.mxu0
        %v2066 = vadd.f32 0.0, %v2065
        %2067 = vmatmul.f32.gmra.mxu0 %v1956
        %v2068 = vpop.f32.mrf.mxu0
        %v2069 = vadd.f32 0.0, %v2068
        %2070 = vmatmul.f32.gmra.mxu0 %v1959
        %v2071 = vpop.f32.mrf.mxu0
        %v2072 = vadd.f32 0.0, %v2071
        %2073 = vmatmul.f32.gmra.mxu0 %v1962
        %v2074 = vpop.f32.mrf.mxu0
        %v2075 = vadd.f32 0.0, %v2074
        %2076 = vmatmul.f32.gmra.mxu0 %v1965
        %v2077 = vpop.f32.mrf.mxu0
        %v2078 = vadd.f32 0.0, %v2077
        %2079 = vmatmul.f32.gmra.mxu0 %v1968
        %v2080 = vpop.f32.mrf.mxu0
        %v2081 = vadd.f32 0.0, %v2080
        %2082 = vmatmul.f32.gmra.mxu0 %v1971
        %v2083 = vpop.f32.mrf.mxu0
        %v2084 = vadd.f32 0.0, %v2083
        %2085 = vmatmul.f32.gmra.mxu0 %v1974
        %v2086 = vpop.f32.mrf.mxu0
        %v2087 = vadd.f32 0.0, %v2086
        %2088 = vmatmul.f32.gmra.mxu0 %v1977
        %v2089 = vpop.f32.mrf.mxu0
        %v2090 = vadd.f32 0.0, %v2089
        %2091 = vmatmul.f32.gmra.mxu0 %v1980
        %v2092 = vpop.f32.mrf.mxu0
        %v2093 = vadd.f32 0.0, %v2092
        %2094 = vmatmul.f32.gmra.mxu0 %v1983
        %v2095 = vpop.f32.mrf.mxu0
        %v2096 = vadd.f32 0.0, %v2095
        %2097 = vmatmul.f32.gmra.mxu0 %v1986
        %v2098 = vpop.f32.mrf.mxu0
        %v2099 = vadd.f32 0.0, %v2098
        %2100 = vmatmul.f32.gmra.mxu0 %v1989
        %v2101 = vpop.f32.mrf.mxu0
        %v2102 = vadd.f32 0.0, %v2101
        %2103 = vmatmul.f32.gmra.mxu0 %v1992
        %v2104 = vpop.f32.mrf.mxu0
        %v2105 = vadd.f32 0.0, %v2104
        %2106 = vmatmul.f32.gmra.mxu0 %v1995
        %v2107 = vpop.f32.mrf.mxu0
        %v2108 = vadd.f32 0.0, %v2107
        %2109 = vdwg.mxu0
        %vm2110 = vcmp.gt.f32.partialorder %v2015, 0.0
        %vm2111 = vcmp.gt.f32.partialorder %v2018, 0.0
        %vm2112 = vcmp.gt.f32.partialorder %v2021, 0.0
        %vm2113 = vcmp.gt.f32.partialorder %v2024, 0.0
        %vm2114 = vcmp.gt.f32.partialorder %v2027, 0.0
        %vm2115 = vcmp.gt.f32.partialorder %v2030, 0.0
        %vm2116 = vcmp.gt.f32.partialorder %v2033, 0.0
        %vm2117 = vcmp.gt.f32.partialorder %v2036, 0.0
        %vm2118 = vcmp.gt.f32.partialorder %v2039, 0.0
        %vm2119 = vcmp.gt.f32.partialorder %v2042, 0.0
        %vm2120 = vcmp.gt.f32.partialorder %v2045, 0.0
        %vm2121 = vcmp.gt.f32.partialorder %v2048, 0.0
        %vm2122 = vcmp.gt.f32.partialorder %v2051, 0.0
        %vm2123 = vcmp.gt.f32.partialorder %v2054, 0.0
        %vm2124 = vcmp.gt.f32.partialorder %v2057, 0.0
        %vm2125 = vcmp.gt.f32.partialorder %v2060, 0.0
        %vm2126 = vcmp.gt.f32.partialorder %v2063, 0.0
        %vm2127 = vcmp.gt.f32.partialorder %v2066, 0.0
        %vm2128 = vcmp.gt.f32.partialorder %v2069, 0.0
        %vm2129 = vcmp.gt.f32.partialorder %v2072, 0.0
        %vm2130 = vcmp.gt.f32.partialorder %v2075, 0.0
        %vm2131 = vcmp.gt.f32.partialorder %v2078, 0.0
        %vm2132 = vcmp.gt.f32.partialorder %v2081, 0.0
        %vm2133 = vcmp.gt.f32.partialorder %v2084, 0.0
        %vm2134 = vcmp.gt.f32.partialorder %v2087, 0.0
        %vm2135 = vcmp.gt.f32.partialorder %v2090, 0.0
        %vm2136 = vcmp.gt.f32.partialorder %v2093, 0.0
        %vm2137 = vcmp.gt.f32.partialorder %v2096, 0.0
        %vm2138 = vcmp.gt.f32.partialorder %v2099, 0.0
        %vm2139 = vcmp.gt.f32.partialorder %v2102, 0.0
        %vm2140 = vcmp.gt.f32.partialorder %v2105, 0.0
        %vm2141 = vcmp.gt.f32.partialorder %v2108, 0.0
        %v2142 = vmul.f32 %v2015, 0.2
        %v2143 = vmul.f32 %v2018, 0.2
        %v2144 = vmul.f32 %v2021, 0.2
        %v2145 = vmul.f32 %v2024, 0.2
        %v2146 = vmul.f32 %v2027, 0.2
        %v2147 = vmul.f32 %v2030, 0.2
        %v2148 = vmul.f32 %v2033, 0.2
        %v2149 = vmul.f32 %v2036, 0.2
        %v2150 = vmul.f32 %v2039, 0.2
        %v2151 = vmul.f32 %v2042, 0.2
        %v2152 = vmul.f32 %v2045, 0.2
        %v2153 = vmul.f32 %v2048, 0.2
        %v2154 = vmul.f32 %v2051, 0.2
        %v2155 = vmul.f32 %v2054, 0.2
        %v2156 = vmul.f32 %v2057, 0.2
        %v2157 = vmul.f32 %v2060, 0.2
        %v2158 = vmul.f32 %v2063, 0.2
        %v2159 = vmul.f32 %v2066, 0.2
        %v2160 = vmul.f32 %v2069, 0.2
        %v2161 = vmul.f32 %v2072, 0.2
        %v2162 = vmul.f32 %v2075, 0.2
        %v2163 = vmul.f32 %v2078, 0.2
        %v2164 = vmul.f32 %v2081, 0.2
        %v2165 = vmul.f32 %v2084, 0.2
        %v2166 = vmul.f32 %v2087, 0.2
        %v2167 = vmul.f32 %v2090, 0.2
        %v2168 = vmul.f32 %v2093, 0.2
        %v2169 = vmul.f32 %v2096, 0.2
        %v2170 = vmul.f32 %v2099, 0.2
        %v2171 = vmul.f32 %v2102, 0.2
        %v2172 = vmul.f32 %v2105, 0.2
        %v2173 = vmul.f32 %v2108, 0.2
        %v2174 = vsel %vm2110, %v2015, %v2142
        %v2175 = vsel %vm2111, %v2018, %v2143
        %v2176 = vsel %vm2112, %v2021, %v2144
        %v2177 = vsel %vm2113, %v2024, %v2145
        %v2178 = vsel %vm2114, %v2027, %v2146
        %v2179 = vsel %vm2115, %v2030, %v2147
        %v2180 = vsel %vm2116, %v2033, %v2148
        %v2181 = vsel %vm2117, %v2036, %v2149
        %v2182 = vsel %vm2118, %v2039, %v2150
        %v2183 = vsel %vm2119, %v2042, %v2151
        %v2184 = vsel %vm2120, %v2045, %v2152
        %v2185 = vsel %vm2121, %v2048, %v2153
        %v2186 = vsel %vm2122, %v2051, %v2154
        %v2187 = vsel %vm2123, %v2054, %v2155
        %v2188 = vsel %vm2124, %v2057, %v2156
        %v2189 = vsel %vm2125, %v2060, %v2157
        %v2190 = vsel %vm2126, %v2063, %v2158
        %v2191 = vsel %vm2127, %v2066, %v2159
        %v2192 = vsel %vm2128, %v2069, %v2160
        %v2193 = vsel %vm2129, %v2072, %v2161
        %v2194 = vsel %vm2130, %v2075, %v2162
        %v2195 = vsel %vm2131, %v2078, %v2163
        %v2196 = vsel %vm2132, %v2081, %v2164
        %v2197 = vsel %vm2133, %v2084, %v2165
        %v2198 = vsel %vm2134, %v2087, %v2166
        %v2199 = vsel %vm2135, %v2090, %v2167
        %v2200 = vsel %vm2136, %v2093, %v2168
        %v2201 = vsel %vm2137, %v2096, %v2169
        %v2202 = vsel %vm2138, %v2099, %v2170
        %v2203 = vsel %vm2139, %v2102, %v2171
        %v2204 = vsel %vm2140, %v2105, %v2172
        %v2205 = vsel %vm2141, %v2108, %v2173
        %v2207 = vsel %vm250, %v2174, 0
        %v2210 = vsel %vm250, %v2175, 0
        %v2213 = vsel %vm250, %v2176, 0
        %v2216 = vsel %vm250, %v2177, 0
        %v2219 = vsel %vm250, %v2178, 0
        %v2222 = vsel %vm250, %v2179, 0
        %v2225 = vsel %vm250, %v2180, 0
        %v2228 = vsel %vm250, %v2181, 0
        %v2231 = vsel %vm250, %v2182, 0
        %v2234 = vsel %vm250, %v2183, 0
        %v2237 = vsel %vm250, %v2184, 0
        %v2240 = vsel %vm250, %v2185, 0
        %v2243 = vsel %vm250, %v2186, 0
        %v2246 = vsel %vm250, %v2187, 0
        %v2249 = vsel %vm250, %v2188, 0
        %v2252 = vsel %vm250, %v2189, 0
        %v2255 = vsel %vm250, %v2190, 0
        %v2258 = vsel %vm250, %v2191, 0
        %v2261 = vsel %vm250, %v2192, 0
        %v2264 = vsel %vm250, %v2193, 0
        %v2267 = vsel %vm250, %v2194, 0
        %v2270 = vsel %vm250, %v2195, 0
        %v2273 = vsel %vm250, %v2196, 0
        %v2276 = vsel %vm250, %v2197, 0
        %v2279 = vsel %vm250, %v2198, 0
        %v2282 = vsel %vm250, %v2199, 0
        %v2285 = vsel %vm250, %v2200, 0
        %v2288 = vsel %vm250, %v2201, 0
        %v2291 = vsel %vm250, %v2202, 0
        %v2294 = vsel %vm250, %v2203, 0
        %v2297 = vsel %vm250, %v2204, 0
        %v2300 = vsel %vm250, %v2205, 0
        %2302 = vmatpush.msra.mxu0 0.0
        %2303 = vmatpush.msra.mxu0 0.0
        %2304 = vmatpush.msra.mxu0 0.0
        %2305 = vmatpush.msra.mxu0 0.0
        %2306 = vmatpush.msra.mxu0 0.0
        %2307 = vmatpush.msra.mxu0 0.0
        %2308 = vmatpush.msra.mxu0 0.0
        %2309 = vmatpush.msra.mxu0 0.0
        %2310 = vmatpush.msra.mxu0 0.0
        %2311 = vmatpush.msra.mxu0 0.0
        %2312 = vmatpush.msra.mxu0 0.0
        %2313 = vmatpush.msra.mxu0 0.0
        %2314 = vmatpush.msra.mxu0 0.0
        %2315 = vmatpush.msra.mxu0 0.0
        %2316 = vmatpush.msra.mxu0 0.0
        %2317 = vmatpush.msra.mxu0 %v323
        %2318 = vmatmul.f32.gmra.mxu0 %v2207
        %v2319 = vpop.f32.mrf.mxu0
        %v2320 = vadd.f32 0.0, %v2319
        %2321 = vmatmul.f32.gmra.mxu0 %v2210
        %v2322 = vpop.f32.mrf.mxu0
        %v2323 = vadd.f32 0.0, %v2322
        %2324 = vmatmul.f32.gmra.mxu0 %v2213
        %v2325 = vpop.f32.mrf.mxu0
        %v2326 = vadd.f32 0.0, %v2325
        %2327 = vmatmul.f32.gmra.mxu0 %v2216
        %v2328 = vpop.f32.mrf.mxu0
        %v2329 = vadd.f32 0.0, %v2328
        %2330 = vmatmul.f32.gmra.mxu0 %v2219
        %v2331 = vpop.f32.mrf.mxu0
        %v2332 = vadd.f32 0.0, %v2331
        %2333 = vmatmul.f32.gmra.mxu0 %v2222
        %v2334 = vpop.f32.mrf.mxu0
        %v2335 = vadd.f32 0.0, %v2334
        %2336 = vmatmul.f32.gmra.mxu0 %v2225
        %v2337 = vpop.f32.mrf.mxu0
        %v2338 = vadd.f32 0.0, %v2337
        %2339 = vmatmul.f32.gmra.mxu0 %v2228
        %v2340 = vpop.f32.mrf.mxu0
        %v2341 = vadd.f32 0.0, %v2340
        %2342 = vmatmul.f32.gmra.mxu0 %v2231
        %v2343 = vpop.f32.mrf.mxu0
        %v2344 = vadd.f32 0.0, %v2343
        %2345 = vmatmul.f32.gmra.mxu0 %v2234
        %v2346 = vpop.f32.mrf.mxu0
        %v2347 = vadd.f32 0.0, %v2346
        %2348 = vmatmul.f32.gmra.mxu0 %v2237
        %v2349 = vpop.f32.mrf.mxu0
        %v2350 = vadd.f32 0.0, %v2349
        %2351 = vmatmul.f32.gmra.mxu0 %v2240
        %v2352 = vpop.f32.mrf.mxu0
        %v2353 = vadd.f32 0.0, %v2352
        %2354 = vmatmul.f32.gmra.mxu0 %v2243
        %v2355 = vpop.f32.mrf.mxu0
        %v2356 = vadd.f32 0.0, %v2355
        %2357 = vmatmul.f32.gmra.mxu0 %v2246
        %v2358 = vpop.f32.mrf.mxu0
        %v2359 = vadd.f32 0.0, %v2358
        %2360 = vmatmul.f32.gmra.mxu0 %v2249
        %v2361 = vpop.f32.mrf.mxu0
        %v2362 = vadd.f32 0.0, %v2361
        %2363 = vmatmul.f32.gmra.mxu0 %v2252
        %v2364 = vpop.f32.mrf.mxu0
        %v2365 = vadd.f32 0.0, %v2364
        %2366 = vmatmul.f32.gmra.mxu0 %v2255
        %v2367 = vpop.f32.mrf.mxu0
        %v2368 = vadd.f32 0.0, %v2367
        %2369 = vmatmul.f32.gmra.mxu0 %v2258
        %v2370 = vpop.f32.mrf.mxu0
        %v2371 = vadd.f32 0.0, %v2370
        %2372 = vmatmul.f32.gmra.mxu0 %v2261
        %v2373 = vpop.f32.mrf.mxu0
        %v2374 = vadd.f32 0.0, %v2373
        %2375 = vmatmul.f32.gmra.mxu0 %v2264
        %v2376 = vpop.f32.mrf.mxu0
        %v2377 = vadd.f32 0.0, %v2376
        %2378 = vmatmul.f32.gmra.mxu0 %v2267
        %v2379 = vpop.f32.mrf.mxu0
        %v2380 = vadd.f32 0.0, %v2379
        %2381 = vmatmul.f32.gmra.mxu0 %v2270
        %v2382 = vpop.f32.mrf.mxu0
        %v2383 = vadd.f32 0.0, %v2382
        %2384 = vmatmul.f32.gmra.mxu0 %v2273
        %v2385 = vpop.f32.mrf.mxu0
        %v2386 = vadd.f32 0.0, %v2385
        %2387 = vmatmul.f32.gmra.mxu0 %v2276
        %v2388 = vpop.f32.mrf.mxu0
        %v2389 = vadd.f32 0.0, %v2388
        %2390 = vmatmul.f32.gmra.mxu0 %v2279
        %v2391 = vpop.f32.mrf.mxu0
        %v2392 = vadd.f32 0.0, %v2391
        %2393 = vmatmul.f32.gmra.mxu0 %v2282
        %v2394 = vpop.f32.mrf.mxu0
        %v2395 = vadd.f32 0.0, %v2394
        %2396 = vmatmul.f32.gmra.mxu0 %v2285
        %v2397 = vpop.f32.mrf.mxu0
        %v2398 = vadd.f32 0.0, %v2397
        %2399 = vmatmul.f32.gmra.mxu0 %v2288
        %v2400 = vpop.f32.mrf.mxu0
        %v2401 = vadd.f32 0.0, %v2400
        %2402 = vmatmul.f32.gmra.mxu0 %v2291
        %v2403 = vpop.f32.mrf.mxu0
        %v2404 = vadd.f32 0.0, %v2403
        %2405 = vmatmul.f32.gmra.mxu0 %v2294
        %v2406 = vpop.f32.mrf.mxu0
        %v2407 = vadd.f32 0.0, %v2406
        %2408 = vmatmul.f32.gmra.mxu0 %v2297
        %v2409 = vpop.f32.mrf.mxu0
        %v2410 = vadd.f32 0.0, %v2409
        %2411 = vmatmul.f32.gmra.mxu0 %v2300
        %v2412 = vpop.f32.mrf.mxu0
        %v2413 = vadd.f32 0.0, %v2412
        %2414 = vdwg.mxu0
        %v2415 = vsel %vm250, %v2320, 0.0
        %v2416 = vsel %vm250, %v2323, 0.0
        %v2417 = vadd.f32 %v2415, %v2416
        %v2418 = vsel %vm250, %v2326, 0.0
        %v2419 = vadd.f32 %v2417, %v2418
        %v2420 = vsel %vm250, %v2329, 0.0
        %v2421 = vadd.f32 %v2419, %v2420
        %v2422 = vsel %vm250, %v2332, 0.0
        %v2423 = vadd.f32 %v2421, %v2422
        %v2424 = vsel %vm250, %v2335, 0.0
        %v2425 = vadd.f32 %v2423, %v2424
        %v2426 = vsel %vm250, %v2338, 0.0
        %v2427 = vadd.f32 %v2425, %v2426
        %v2428 = vsel %vm250, %v2341, 0.0
        %v2429 = vadd.f32 %v2427, %v2428
        %v2430 = vsel %vm250, %v2344, 0.0
        %v2431 = vadd.f32 %v2429, %v2430
        %v2432 = vsel %vm250, %v2347, 0.0
        %v2433 = vadd.f32 %v2431, %v2432
        %v2434 = vsel %vm250, %v2350, 0.0
        %v2435 = vadd.f32 %v2433, %v2434
        %v2436 = vsel %vm250, %v2353, 0.0
        %v2437 = vadd.f32 %v2435, %v2436
        %v2438 = vsel %vm250, %v2356, 0.0
        %v2439 = vadd.f32 %v2437, %v2438
        %v2440 = vsel %vm250, %v2359, 0.0
        %v2441 = vadd.f32 %v2439, %v2440
        %v2442 = vsel %vm250, %v2362, 0.0
        %v2443 = vadd.f32 %v2441, %v2442
        %v2444 = vsel %vm250, %v2365, 0.0
        %v2445 = vadd.f32 %v2443, %v2444
        %v2446 = vsel %vm250, %v2368, 0.0
        %v2447 = vadd.f32 %v2445, %v2446
        %v2448 = vsel %vm250, %v2371, 0.0
        %v2449 = vadd.f32 %v2447, %v2448
        %v2450 = vsel %vm250, %v2374, 0.0
        %v2451 = vadd.f32 %v2449, %v2450
        %v2452 = vsel %vm250, %v2377, 0.0
        %v2453 = vadd.f32 %v2451, %v2452
        %v2454 = vsel %vm250, %v2380, 0.0
        %v2455 = vadd.f32 %v2453, %v2454
        %v2456 = vsel %vm250, %v2383, 0.0
        %v2457 = vadd.f32 %v2455, %v2456
        %v2458 = vsel %vm250, %v2386, 0.0
        %v2459 = vadd.f32 %v2457, %v2458
        %v2460 = vsel %vm250, %v2389, 0.0
        %v2461 = vadd.f32 %v2459, %v2460
        %v2462 = vsel %vm250, %v2392, 0.0
        %v2463 = vadd.f32 %v2461, %v2462
        %v2464 = vsel %vm250, %v2395, 0.0
        %v2465 = vadd.f32 %v2463, %v2464
        %v2466 = vsel %vm250, %v2398, 0.0
        %v2467 = vadd.f32 %v2465, %v2466
        %v2468 = vsel %vm250, %v2401, 0.0
        %v2469 = vadd.f32 %v2467, %v2468
        %v2470 = vsel %vm250, %v2404, 0.0
        %v2471 = vadd.f32 %v2469, %v2470
        %v2472 = vsel %vm250, %v2407, 0.0
        %v2473 = vadd.f32 %v2471, %v2472
        %v2474 = vsel %vm250, %v2410, 0.0
        %v2475 = vadd.f32 %v2473, %v2474
        %v2476 = vsel %vm250, %v2413, 0.0
        %v2477 = vadd.f32 %v2475, %v2476
        %v2478 = vrot.slane %v2477, 4
        %v2479 = vadd.f32 %v2477, %v2478
        %v2480 = vrot.slane %v2479, 2
        %v2481 = vadd.f32 %v2479, %v2480
        %v2482 = vrot.slane %v2481, 1
        %v2483 = vadd.f32 %v2481, %v2482
        %v2484 = vrcp.pop 512.0
        %v2485 = vmul.f32 512.0, %v2484
        %v2486 = vsub.f32 1.0, %v2485
        %v2487 = vmul.f32 %v2484, %v2486
        %v2488 = vadd.f32 %v2484, %v2487
        %vm2489 = vweird.f32 %v2484
        %v2490 = vsel %vm2489, %v2484, %v2488
        %v2491 = vmul.f32 %v2483, %v2490
        %v2492 = vmul.f32 %v2174, %v2174
        %v2493 = vmul.f32 %v2175, %v2175
        %v2494 = vmul.f32 %v2176, %v2176
        %v2495 = vmul.f32 %v2177, %v2177
        %v2496 = vmul.f32 %v2178, %v2178
        %v2497 = vmul.f32 %v2179, %v2179
        %v2498 = vmul.f32 %v2180, %v2180
        %v2499 = vmul.f32 %v2181, %v2181
        %v2500 = vmul.f32 %v2182, %v2182
        %v2501 = vmul.f32 %v2183, %v2183
        %v2502 = vmul.f32 %v2184, %v2184
        %v2503 = vmul.f32 %v2185, %v2185
        %v2504 = vmul.f32 %v2186, %v2186
        %v2505 = vmul.f32 %v2187, %v2187
        %v2506 = vmul.f32 %v2188, %v2188
        %v2507 = vmul.f32 %v2189, %v2189
        %v2508 = vmul.f32 %v2190, %v2190
        %v2509 = vmul.f32 %v2191, %v2191
        %v2510 = vmul.f32 %v2192, %v2192
        %v2511 = vmul.f32 %v2193, %v2193
        %v2512 = vmul.f32 %v2194, %v2194
        %v2513 = vmul.f32 %v2195, %v2195
        %v2514 = vmul.f32 %v2196, %v2196
        %v2515 = vmul.f32 %v2197, %v2197
        %v2516 = vmul.f32 %v2198, %v2198
        %v2517 = vmul.f32 %v2199, %v2199
        %v2518 = vmul.f32 %v2200, %v2200
        %v2519 = vmul.f32 %v2201, %v2201
        %v2520 = vmul.f32 %v2202, %v2202
        %v2521 = vmul.f32 %v2203, %v2203
        %v2522 = vmul.f32 %v2204, %v2204
        %v2523 = vmul.f32 %v2205, %v2205
        %v2525 = vsel %vm250, %v2492, 0
        %v2528 = vsel %vm250, %v2493, 0
        %v2531 = vsel %vm250, %v2494, 0
        %v2534 = vsel %vm250, %v2495, 0
        %v2537 = vsel %vm250, %v2496, 0
        %v2540 = vsel %vm250, %v2497, 0
        %v2543 = vsel %vm250, %v2498, 0
        %v2546 = vsel %vm250, %v2499, 0
        %v2549 = vsel %vm250, %v2500, 0
        %v2552 = vsel %vm250, %v2501, 0
        %v2555 = vsel %vm250, %v2502, 0
        %v2558 = vsel %vm250, %v2503, 0
        %v2561 = vsel %vm250, %v2504, 0
        %v2564 = vsel %vm250, %v2505, 0
        %v2567 = vsel %vm250, %v2506, 0
        %v2570 = vsel %vm250, %v2507, 0
        %v2573 = vsel %vm250, %v2508, 0
        %v2576 = vsel %vm250, %v2509, 0
        %v2579 = vsel %vm250, %v2510, 0
        %v2582 = vsel %vm250, %v2511, 0
        %v2585 = vsel %vm250, %v2512, 0
        %v2588 = vsel %vm250, %v2513, 0
        %v2591 = vsel %vm250, %v2514, 0
        %v2594 = vsel %vm250, %v2515, 0
        %v2597 = vsel %vm250, %v2516, 0
        %v2600 = vsel %vm250, %v2517, 0
        %v2603 = vsel %vm250, %v2518, 0
        %v2606 = vsel %vm250, %v2519, 0
        %v2609 = vsel %vm250, %v2520, 0
        %v2612 = vsel %vm250, %v2521, 0
        %v2615 = vsel %vm250, %v2522, 0
        %v2618 = vsel %vm250, %v2523, 0
        %2620 = vmatpush.msra.mxu0 0.0
        %2621 = vmatpush.msra.mxu0 0.0
        %2622 = vmatpush.msra.mxu0 0.0
        %2623 = vmatpush.msra.mxu0 0.0
        %2624 = vmatpush.msra.mxu0 0.0
        %2625 = vmatpush.msra.mxu0 0.0
        %2626 = vmatpush.msra.mxu0 0.0
        %2627 = vmatpush.msra.mxu0 0.0
        %2628 = vmatpush.msra.mxu0 0.0
        %2629 = vmatpush.msra.mxu0 0.0
        %2630 = vmatpush.msra.mxu0 0.0
        %2631 = vmatpush.msra.mxu0 0.0
        %2632 = vmatpush.msra.mxu0 0.0
        %2633 = vmatpush.msra.mxu0 0.0
        %2634 = vmatpush.msra.mxu0 0.0
        %2635 = vmatpush.msra.mxu0 %v323
        %2636 = vmatmul.f32.gmra.mxu0 %v2525
        %v2637 = vpop.f32.mrf.mxu0
        %v2638 = vadd.f32 0.0, %v2637
        %2639 = vmatmul.f32.gmra.mxu0 %v2528
        %v2640 = vpop.f32.mrf.mxu0
        %v2641 = vadd.f32 0.0, %v2640
        %2642 = vmatmul.f32.gmra.mxu0 %v2531
        %v2643 = vpop.f32.mrf.mxu0
        %v2644 = vadd.f32 0.0, %v2643
        %2645 = vmatmul.f32.gmra.mxu0 %v2534
        %v2646 = vpop.f32.mrf.mxu0
        %v2647 = vadd.f32 0.0, %v2646
        %2648 = vmatmul.f32.gmra.mxu0 %v2537
        %v2649 = vpop.f32.mrf.mxu0
        %v2650 = vadd.f32 0.0, %v2649
        %2651 = vmatmul.f32.gmra.mxu0 %v2540
        %v2652 = vpop.f32.mrf.mxu0
        %v2653 = vadd.f32 0.0, %v2652
        %2654 = vmatmul.f32.gmra.mxu0 %v2543
        %v2655 = vpop.f32.mrf.mxu0
        %v2656 = vadd.f32 0.0, %v2655
        %2657 = vmatmul.f32.gmra.mxu0 %v2546
        %v2658 = vpop.f32.mrf.mxu0
        %v2659 = vadd.f32 0.0, %v2658
        %2660 = vmatmul.f32.gmra.mxu0 %v2549
        %v2661 = vpop.f32.mrf.mxu0
        %v2662 = vadd.f32 0.0, %v2661
        %2663 = vmatmul.f32.gmra.mxu0 %v2552
        %v2664 = vpop.f32.mrf.mxu0
        %v2665 = vadd.f32 0.0, %v2664
        %2666 = vmatmul.f32.gmra.mxu0 %v2555
        %v2667 = vpop.f32.mrf.mxu0
        %v2668 = vadd.f32 0.0, %v2667
        %2669 = vmatmul.f32.gmra.mxu0 %v2558
        %v2670 = vpop.f32.mrf.mxu0
        %v2671 = vadd.f32 0.0, %v2670
        %2672 = vmatmul.f32.gmra.mxu0 %v2561
        %v2673 = vpop.f32.mrf.mxu0
        %v2674 = vadd.f32 0.0, %v2673
        %2675 = vmatmul.f32.gmra.mxu0 %v2564
        %v2676 = vpop.f32.mrf.mxu0
        %v2677 = vadd.f32 0.0, %v2676
        %2678 = vmatmul.f32.gmra.mxu0 %v2567
        %v2679 = vpop.f32.mrf.mxu0
        %v2680 = vadd.f32 0.0, %v2679
        %2681 = vmatmul.f32.gmra.mxu0 %v2570
        %v2682 = vpop.f32.mrf.mxu0
        %v2683 = vadd.f32 0.0, %v2682
        %2684 = vmatmul.f32.gmra.mxu0 %v2573
        %v2685 = vpop.f32.mrf.mxu0
        %v2686 = vadd.f32 0.0, %v2685
        %2687 = vmatmul.f32.gmra.mxu0 %v2576
        %v2688 = vpop.f32.mrf.mxu0
        %v2689 = vadd.f32 0.0, %v2688
        %2690 = vmatmul.f32.gmra.mxu0 %v2579
        %v2691 = vpop.f32.mrf.mxu0
        %v2692 = vadd.f32 0.0, %v2691
        %2693 = vmatmul.f32.gmra.mxu0 %v2582
        %v2694 = vpop.f32.mrf.mxu0
        %v2695 = vadd.f32 0.0, %v2694
        %2696 = vmatmul.f32.gmra.mxu0 %v2585
        %v2697 = vpop.f32.mrf.mxu0
        %v2698 = vadd.f32 0.0, %v2697
        %2699 = vmatmul.f32.gmra.mxu0 %v2588
        %v2700 = vpop.f32.mrf.mxu0
        %v2701 = vadd.f32 0.0, %v2700
        %2702 = vmatmul.f32.gmra.mxu0 %v2591
        %v2703 = vpop.f32.mrf.mxu0
        %v2704 = vadd.f32 0.0, %v2703
        %2705 = vmatmul.f32.gmra.mxu0 %v2594
        %v2706 = vpop.f32.mrf.mxu0
        %v2707 = vadd.f32 0.0, %v2706
        %2708 = vmatmul.f32.gmra.mxu0 %v2597
        %v2709 = vpop.f32.mrf.mxu0
        %v2710 = vadd.f32 0.0, %v2709
        %2711 = vmatmul.f32.gmra.mxu0 %v2600
        %v2712 = vpop.f32.mrf.mxu0
        %v2713 = vadd.f32 0.0, %v2712
        %2714 = vmatmul.f32.gmra.mxu0 %v2603
        %v2715 = vpop.f32.mrf.mxu0
        %v2716 = vadd.f32 0.0, %v2715
        %2717 = vmatmul.f32.gmra.mxu0 %v2606
        %v2718 = vpop.f32.mrf.mxu0
        %v2719 = vadd.f32 0.0, %v2718
        %2720 = vmatmul.f32.gmra.mxu0 %v2609
        %v2721 = vpop.f32.mrf.mxu0
        %v2722 = vadd.f32 0.0, %v2721
        %2723 = vmatmul.f32.gmra.mxu0 %v2612
        %v2724 = vpop.f32.mrf.mxu0
        %v2725 = vadd.f32 0.0, %v2724
        %2726 = vmatmul.f32.gmra.mxu0 %v2615
        %v2727 = vpop.f32.mrf.mxu0
        %v2728 = vadd.f32 0.0, %v2727
        %2729 = vmatmul.f32.gmra.mxu0 %v2618
        %v2730 = vpop.f32.mrf.mxu0
        %v2731 = vadd.f32 0.0, %v2730
        %2732 = vdwg.mxu0
        %v2733 = vsel %vm250, %v2638, 0.0
        %v2734 = vsel %vm250, %v2641, 0.0
        %v2735 = vadd.f32 %v2733, %v2734
        %v2736 = vsel %vm250, %v2644, 0.0
        %v2737 = vadd.f32 %v2735, %v2736
        %v2738 = vsel %vm250, %v2647, 0.0
        %v2739 = vadd.f32 %v2737, %v2738
        %v2740 = vsel %vm250, %v2650, 0.0
        %v2741 = vadd.f32 %v2739, %v2740
        %v2742 = vsel %vm250, %v2653, 0.0
        %v2743 = vadd.f32 %v2741, %v2742
        %v2744 = vsel %vm250, %v2656, 0.0
        %v2745 = vadd.f32 %v2743, %v2744
        %v2746 = vsel %vm250, %v2659, 0.0
        %v2747 = vadd.f32 %v2745, %v2746
        %v2748 = vsel %vm250, %v2662, 0.0
        %v2749 = vadd.f32 %v2747, %v2748
        %v2750 = vsel %vm250, %v2665, 0.0
        %v2751 = vadd.f32 %v2749, %v2750
        %v2752 = vsel %vm250, %v2668, 0.0
        %v2753 = vadd.f32 %v2751, %v2752
        %v2754 = vsel %vm250, %v2671, 0.0
        %v2755 = vadd.f32 %v2753, %v2754
        %v2756 = vsel %vm250, %v2674, 0.0
        %v2757 = vadd.f32 %v2755, %v2756
        %v2758 = vsel %vm250, %v2677, 0.0
        %v2759 = vadd.f32 %v2757, %v2758
        %v2760 = vsel %vm250, %v2680, 0.0
        %v2761 = vadd.f32 %v2759, %v2760
        %v2762 = vsel %vm250, %v2683, 0.0
        %v2763 = vadd.f32 %v2761, %v2762
        %v2764 = vsel %vm250, %v2686, 0.0
        %v2765 = vadd.f32 %v2763, %v2764
        %v2766 = vsel %vm250, %v2689, 0.0
        %v2767 = vadd.f32 %v2765, %v2766
        %v2768 = vsel %vm250, %v2692, 0.0
        %v2769 = vadd.f32 %v2767, %v2768
        %v2770 = vsel %vm250, %v2695, 0.0
        %v2771 = vadd.f32 %v2769, %v2770
        %v2772 = vsel %vm250, %v2698, 0.0
        %v2773 = vadd.f32 %v2771, %v2772
        %v2774 = vsel %vm250, %v2701, 0.0
        %v2775 = vadd.f32 %v2773, %v2774
        %v2776 = vsel %vm250, %v2704, 0.0
        %v2777 = vadd.f32 %v2775, %v2776
        %v2778 = vsel %vm250, %v2707, 0.0
        %v2779 = vadd.f32 %v2777, %v2778
        %v2780 = vsel %vm250, %v2710, 0.0
        %v2781 = vadd.f32 %v2779, %v2780
        %v2782 = vsel %vm250, %v2713, 0.0
        %v2783 = vadd.f32 %v2781, %v2782
        %v2784 = vsel %vm250, %v2716, 0.0
        %v2785 = vadd.f32 %v2783, %v2784
        %v2786 = vsel %vm250, %v2719, 0.0
        %v2787 = vadd.f32 %v2785, %v2786
        %v2788 = vsel %vm250, %v2722, 0.0
        %v2789 = vadd.f32 %v2787, %v2788
        %v2790 = vsel %vm250, %v2725, 0.0
        %v2791 = vadd.f32 %v2789, %v2790
        %v2792 = vsel %vm250, %v2728, 0.0
        %v2793 = vadd.f32 %v2791, %v2792
        %v2794 = vsel %vm250, %v2731, 0.0
        %v2795 = vadd.f32 %v2793, %v2794
        %v2796 = vrot.slane %v2795, 4
        %v2797 = vadd.f32 %v2795, %v2796
        %v2798 = vrot.slane %v2797, 2
        %v2799 = vadd.f32 %v2797, %v2798
        %v2800 = vrot.slane %v2799, 1
        %v2801 = vadd.f32 %v2799, %v2800
        %v2802 = vmul.f32 %v2801, %v2490
        %v2803 = vmul.f32 %v2491, %v2491
        %v2804 = vsub.f32 %v2802, %v2803
        %v2805 = vadd.f32 %v2804, 1e-05
        %v2806 = vrsqrt.pop %v2805
        %v2807 = vmul.f32 %v2806, %v2805
        %v2808 = vmul.f32 %v2807, %v2806
        %v2809 = vmul.f32 0.5, %v2808
        %v2810 = vsub.f32 1.5, %v2809
        %v2811 = vmul.f32 %v2806, %v2810
        %vm2812 = vweird.f32 %v2805
        %vm2813 = vweird.f32 %v2806
        %vm2814 = vmor %vm2812, %vm2813
        %v2815 = vsel %vm2814, %v2806, %v2811
        %v2816 = vmul.f32 %v2815, %v324
        %v2817 = vmul.f32 %v2491, %v2816
        %v2818 = vsub.f32 %v325, %v2817
        %v2819 = vperm.slane %v2816, 0
        %v2820 = vmul.f32 %v2174, %v2819
        %v2821 = vmul.f32 %v2175, %v2819
        %v2822 = vmul.f32 %v2176, %v2819
        %v2823 = vmul.f32 %v2177, %v2819
        %v2824 = vmul.f32 %v2178, %v2819
        %v2825 = vmul.f32 %v2179, %v2819
        %v2826 = vmul.f32 %v2180, %v2819
        %v2827 = vmul.f32 %v2181, %v2819
        %v2828 = vmul.f32 %v2182, %v2819
        %v2829 = vmul.f32 %v2183, %v2819
        %v2830 = vmul.f32 %v2184, %v2819
        %v2831 = vmul.f32 %v2185, %v2819
        %v2832 = vmul.f32 %v2186, %v2819
        %v2833 = vmul.f32 %v2187, %v2819
        %v2834 = vmul.f32 %v2188, %v2819
        %v2835 = vmul.f32 %v2189, %v2819
        %v2836 = vmul.f32 %v2190, %v2819
        %v2837 = vmul.f32 %v2191, %v2819
        %v2838 = vmul.f32 %v2192, %v2819
        %v2839 = vmul.f32 %v2193, %v2819
        %v2840 = vmul.f32 %v2194, %v2819
        %v2841 = vmul.f32 %v2195, %v2819
        %v2842 = vmul.f32 %v2196, %v2819
        %v2843 = vmul.f32 %v2197, %v2819
        %v2844 = vmul.f32 %v2198, %v2819
        %v2845 = vmul.f32 %v2199, %v2819
        %v2846 = vmul.f32 %v2200, %v2819
        %v2847 = vmul.f32 %v2201, %v2819
        %v2848 = vmul.f32 %v2202, %v2819
        %v2849 = vmul.f32 %v2203, %v2819
        %v2850 = vmul.f32 %v2204, %v2819
        %v2851 = vmul.f32 %v2205, %v2819
        %v2852 = vperm.slane %v2818, 0
        %v2853 = vadd.f32 %v2820, %v2852
        %v2854 = vadd.f32 %v2821, %v2852
        %v2855 = vadd.f32 %v2822, %v2852
        %v2856 = vadd.f32 %v2823, %v2852
        %v2857 = vadd.f32 %v2824, %v2852
        %v2858 = vadd.f32 %v2825, %v2852
        %v2859 = vadd.f32 %v2826, %v2852
        %v2860 = vadd.f32 %v2827, %v2852
        %v2861 = vadd.f32 %v2828, %v2852
        %v2862 = vadd.f32 %v2829, %v2852
        %v2863 = vadd.f32 %v2830, %v2852
        %v2864 = vadd.f32 %v2831, %v2852
        %v2865 = vadd.f32 %v2832, %v2852
        %v2866 = vadd.f32 %v2833, %v2852
        %v2867 = vadd.f32 %v2834, %v2852
        %v2868 = vadd.f32 %v2835, %v2852
        %v2869 = vadd.f32 %v2836, %v2852
        %v2870 = vadd.f32 %v2837, %v2852
        %v2871 = vadd.f32 %v2838, %v2852
        %v2872 = vadd.f32 %v2839, %v2852
        %v2873 = vadd.f32 %v2840, %v2852
        %v2874 = vadd.f32 %v2841, %v2852
        %v2875 = vadd.f32 %v2842, %v2852
        %v2876 = vadd.f32 %v2843, %v2852
        %v2877 = vadd.f32 %v2844, %v2852
        %v2878 = vadd.f32 %v2845, %v2852
        %v2879 = vadd.f32 %v2846, %v2852
        %v2880 = vadd.f32 %v2847, %v2852
        %v2881 = vadd.f32 %v2848, %v2852
        %v2882 = vadd.f32 %v2849, %v2852
        %v2883 = vadd.f32 %v2850, %v2852
        %v2884 = vadd.f32 %v2851, %v2852
        %2885 = vst.msk [vmem:[%s394 + $0x4] sm:$0xff] %vm250, %v2853
        %2886 = vst.msk [vmem:[%s394 + $0xc] sm:$0xff] %vm250, %v2854
        %2887 = vst.msk [vmem:[%s394 + $0x1c] sm:$0xff] %vm250, %v2855
        %2888 = vst.msk [vmem:[%s394 + $0x24] sm:$0xff] %vm250, %v2856
        %2889 = vst.msk [vmem:[%s394 + $0x34] sm:$0xff] %vm250, %v2857
        %2890 = vst.msk [vmem:[%s394 + $0x3c] sm:$0xff] %vm250, %v2858
        %2891 = vst.msk [vmem:[%s394 + $0x4c] sm:$0xff] %vm250, %v2859
        %2892 = vst.msk [vmem:[%s394 + $0x54] sm:$0xff] %vm250, %v2860
        %2893 = vst.msk [vmem:[%s394 + $0x64] sm:$0xff] %vm250, %v2861
        %2894 = vst.msk [vmem:[%s394 + $0x6c] sm:$0xff] %vm250, %v2862
        %2895 = vst.msk [vmem:[%s394 + $0x7c] sm:$0xff] %vm250, %v2863
        %2896 = vst.msk [vmem:[%s394 + $0x84] sm:$0xff] %vm250, %v2864
        %2897 = vst.msk [vmem:[%s394 + $0x94] sm:$0xff] %vm250, %v2865
        %2898 = vst.msk [vmem:[%s394 + $0x9c] sm:$0xff] %vm250, %v2866
        %2899 = vst.msk [vmem:[%s394 + $0xac] sm:$0xff] %vm250, %v2867
        %2900 = vst.msk [vmem:[%s394 + $0xb4] sm:$0xff] %vm250, %v2868
        %2901 = vst.msk [vmem:[%s394 + $0xc4] sm:$0xff] %vm250, %v2869
        %2902 = vst.msk [vmem:[%s394 + $0xcc] sm:$0xff] %vm250, %v2870
        %2903 = vst.msk [vmem:[%s394 + $0xdc] sm:$0xff] %vm250, %v2871
        %2904 = vst.msk [vmem:[%s394 + $0xe4] sm:$0xff] %vm250, %v2872
        %2905 = vst.msk [vmem:[%s394 + $0xf4] sm:$0xff] %vm250, %v2873
        %2906 = vst.msk [vmem:[%s394 + $0xfc] sm:$0xff] %vm250, %v2874
        %2907 = vst.msk [vmem:[%s394 + $0x10c] sm:$0xff] %vm250, %v2875
        %2908 = vst.msk [vmem:[%s394 + $0x114] sm:$0xff] %vm250, %v2876
        %2909 = vst.msk [vmem:[%s394 + $0x124] sm:$0xff] %vm250, %v2877
        %2910 = vst.msk [vmem:[%s394 + $0x12c] sm:$0xff] %vm250, %v2878
        %2911 = vst.msk [vmem:[%s394 + $0x13c] sm:$0xff] %vm250, %v2879
        %2912 = vst.msk [vmem:[%s394 + $0x144] sm:$0xff] %vm250, %v2880
        %2913 = vst.msk [vmem:[%s394 + $0x154] sm:$0xff] %vm250, %v2881
        %2914 = vst.msk [vmem:[%s394 + $0x15c] sm:$0xff] %vm250, %v2882
        %2915 = vst.msk [vmem:[%s394 + $0x16c] sm:$0xff] %vm250, %v2883
        %2916 = vst.msk [vmem:[%s394 + $0x174] sm:$0xff] %vm250, %v2884
        %v2917 = vld [vmem:[#allocation2] sm:$0xff]
        %v2918 = vld [vmem:[#allocation2 + $0x8] sm:$0xff]
        %v2919 = vld [vmem:[#allocation2 + $0x18] sm:$0xff]
        %v2920 = vld [vmem:[#allocation2 + $0x20] sm:$0xff]
        %v2921 = vld [vmem:[#allocation2 + $0x30] sm:$0xff]
        %v2922 = vld [vmem:[#allocation2 + $0x38] sm:$0xff]
        %v2923 = vld [vmem:[#allocation2 + $0x48] sm:$0xff]
        %v2924 = vld [vmem:[#allocation2 + $0x50] sm:$0xff]
        %v2925 = vld [vmem:[#allocation2 + $0x60] sm:$0xff]
        %v2926 = vld [vmem:[#allocation2 + $0x68] sm:$0xff]
        %v2927 = vld [vmem:[#allocation2 + $0x78] sm:$0xff]
        %v2928 = vld [vmem:[#allocation2 + $0x80] sm:$0xff]
        %v2929 = vld [vmem:[#allocation2 + $0x90] sm:$0xff]
        %v2930 = vld [vmem:[#allocation2 + $0x98] sm:$0xff]
        %v2931 = vld [vmem:[#allocation2 + $0xa8] sm:$0xff]
        %v2932 = vld [vmem:[#allocation2 + $0xb0] sm:$0xff]
        %v2933 = vld [vmem:[#allocation2 + $0xc0] sm:$0xff]
        %v2934 = vld [vmem:[#allocation2 + $0xc8] sm:$0xff]
        %v2935 = vld [vmem:[#allocation2 + $0xd8] sm:$0xff]
        %v2936 = vld [vmem:[#allocation2 + $0xe0] sm:$0xff]
        %v2937 = vld [vmem:[#allocation2 + $0xf0] sm:$0xff]
        %v2938 = vld [vmem:[#allocation2 + $0xf8] sm:$0xff]
        %v2939 = vld [vmem:[#allocation2 + $0x108] sm:$0xff]
        %v2940 = vld [vmem:[#allocation2 + $0x110] sm:$0xff]
        %v2941 = vld [vmem:[#allocation2 + $0x120] sm:$0xff]
        %v2942 = vld [vmem:[#allocation2 + $0x128] sm:$0xff]
        %v2943 = vld [vmem:[#allocation2 + $0x138] sm:$0xff]
        %v2944 = vld [vmem:[#allocation2 + $0x140] sm:$0xff]
        %v2945 = vld [vmem:[#allocation2 + $0x150] sm:$0xff]
        %v2946 = vld [vmem:[#allocation2 + $0x158] sm:$0xff]
        %v2947 = vld [vmem:[#allocation2 + $0x168] sm:$0xff]
        %v2948 = vld [vmem:[#allocation2 + $0x170] sm:$0xff]
        %v2949 = vld [vmem:[#allocation2 + $0x4] sm:$0xff]
        %v2950 = vld [vmem:[#allocation2 + $0xc] sm:$0xff]
        %v2951 = vld [vmem:[#allocation2 + $0x1c] sm:$0xff]
        %v2952 = vld [vmem:[#allocation2 + $0x24] sm:$0xff]
        %v2953 = vld [vmem:[#allocation2 + $0x34] sm:$0xff]
        %v2954 = vld [vmem:[#allocation2 + $0x3c] sm:$0xff]
        %v2955 = vld [vmem:[#allocation2 + $0x4c] sm:$0xff]
        %v2956 = vld [vmem:[#allocation2 + $0x54] sm:$0xff]
        %v2957 = vld [vmem:[#allocation2 + $0x64] sm:$0xff]
        %v2958 = vld [vmem:[#allocation2 + $0x6c] sm:$0xff]
        %v2959 = vld [vmem:[#allocation2 + $0x7c] sm:$0xff]
        %v2960 = vld [vmem:[#allocation2 + $0x84] sm:$0xff]
        %v2961 = vld [vmem:[#allocation2 + $0x94] sm:$0xff]
        %v2962 = vld [vmem:[#allocation2 + $0x9c] sm:$0xff]
        %v2963 = vld [vmem:[#allocation2 + $0xac] sm:$0xff]
        %v2964 = vld [vmem:[#allocation2 + $0xb4] sm:$0xff]
        %v2965 = vld [vmem:[#allocation2 + $0xc4] sm:$0xff]
        %v2966 = vld [vmem:[#allocation2 + $0xcc] sm:$0xff]
        %v2967 = vld [vmem:[#allocation2 + $0xdc] sm:$0xff]
        %v2968 = vld [vmem:[#allocation2 + $0xe4] sm:$0xff]
        %v2969 = vld [vmem:[#allocation2 + $0xf4] sm:$0xff]
        %v2970 = vld [vmem:[#allocation2 + $0xfc] sm:$0xff]
        %v2971 = vld [vmem:[#allocation2 + $0x10c] sm:$0xff]
        %v2972 = vld [vmem:[#allocation2 + $0x114] sm:$0xff]
        %v2973 = vld [vmem:[#allocation2 + $0x124] sm:$0xff]
        %v2974 = vld [vmem:[#allocation2 + $0x12c] sm:$0xff]
        %v2975 = vld [vmem:[#allocation2 + $0x13c] sm:$0xff]
        %v2976 = vld [vmem:[#allocation2 + $0x144] sm:$0xff]
        %v2977 = vld [vmem:[#allocation2 + $0x154] sm:$0xff]
        %v2978 = vld [vmem:[#allocation2 + $0x15c] sm:$0xff]
        %v2979 = vld [vmem:[#allocation2 + $0x16c] sm:$0xff]
        %v2980 = vld [vmem:[#allocation2 + $0x174] sm:$0xff]
        %v2981 = vld [vmem:[#allocation2 + $0x10] sm:$0xff]
        %v2982 = vld [vmem:[#allocation2 + $0x28] sm:$0xff]
        %v2983 = vld [vmem:[#allocation2 + $0x40] sm:$0xff]
        %v2984 = vld [vmem:[#allocation2 + $0x58] sm:$0xff]
        %v2985 = vld [vmem:[#allocation2 + $0x70] sm:$0xff]
        %v2986 = vld [vmem:[#allocation2 + $0x88] sm:$0xff]
        %v2987 = vld [vmem:[#allocation2 + $0xa0] sm:$0xff]
        %v2988 = vld [vmem:[#allocation2 + $0xb8] sm:$0xff]
        %v2989 = vld [vmem:[#allocation2 + $0xd0] sm:$0xff]
        %v2990 = vld [vmem:[#allocation2 + $0xe8] sm:$0xff]
        %v2991 = vld [vmem:[#allocation2 + $0x100] sm:$0xff]
        %v2992 = vld [vmem:[#allocation2 + $0x118] sm:$0xff]
        %v2993 = vld [vmem:[#allocation2 + $0x130] sm:$0xff]
        %v2994 = vld [vmem:[#allocation2 + $0x148] sm:$0xff]
        %v2995 = vld [vmem:[#allocation2 + $0x160] sm:$0xff]
        %v2996 = vld [vmem:[#allocation2 + $0x178] sm:$0xff]
        %v2997 = vld [vmem:[%s394] sm:$0xff]
        %v2998 = vld [vmem:[%s394 + $0x8] sm:$0xff]
        %v2999 = vld [vmem:[%s394 + $0x18] sm:$0xff]
        %v3000 = vld [vmem:[%s394 + $0x20] sm:$0xff]
        %v3001 = vld [vmem:[%s394 + $0x30] sm:$0xff]
        %v3002 = vld [vmem:[%s394 + $0x38] sm:$0xff]
        %v3003 = vld [vmem:[%s394 + $0x48] sm:$0xff]
        %v3004 = vld [vmem:[%s394 + $0x50] sm:$0xff]
        %v3005 = vld [vmem:[%s394 + $0x60] sm:$0xff]
        %v3006 = vld [vmem:[%s394 + $0x68] sm:$0xff]
        %v3007 = vld [vmem:[%s394 + $0x78] sm:$0xff]
        %v3008 = vld [vmem:[%s394 + $0x80] sm:$0xff]
        %v3009 = vld [vmem:[%s394 + $0x90] sm:$0xff]
        %v3010 = vld [vmem:[%s394 + $0x98] sm:$0xff]
        %v3011 = vld [vmem:[%s394 + $0xa8] sm:$0xff]
        %v3012 = vld [vmem:[%s394 + $0xb0] sm:$0xff]
        %v3013 = vld [vmem:[%s394 + $0xc0] sm:$0xff]
        %v3014 = vld [vmem:[%s394 + $0xc8] sm:$0xff]
        %v3015 = vld [vmem:[%s394 + $0xd8] sm:$0xff]
        %v3016 = vld [vmem:[%s394 + $0xe0] sm:$0xff]
        %v3017 = vld [vmem:[%s394 + $0xf0] sm:$0xff]
        %v3018 = vld [vmem:[%s394 + $0xf8] sm:$0xff]
        %v3019 = vld [vmem:[%s394 + $0x108] sm:$0xff]
        %v3020 = vld [vmem:[%s394 + $0x110] sm:$0xff]
        %v3021 = vld [vmem:[%s394 + $0x120] sm:$0xff]
        %v3022 = vld [vmem:[%s394 + $0x128] sm:$0xff]
        %v3023 = vld [vmem:[%s394 + $0x138] sm:$0xff]
        %v3024 = vld [vmem:[%s394 + $0x140] sm:$0xff]
        %v3025 = vld [vmem:[%s394 + $0x150] sm:$0xff]
        %v3026 = vld [vmem:[%s394 + $0x158] sm:$0xff]
        %v3027 = vld [vmem:[%s394 + $0x168] sm:$0xff]
        %v3028 = vld [vmem:[%s394 + $0x170] sm:$0xff]
        %v3029 = vld [vmem:[%s394 + $0x10] sm:$0xff]
        %v3030 = vld [vmem:[%s394 + $0x28] sm:$0xff]
        %v3031 = vld [vmem:[%s394 + $0x40] sm:$0xff]
        %v3032 = vld [vmem:[%s394 + $0x58] sm:$0xff]
        %v3033 = vld [vmem:[%s394 + $0x70] sm:$0xff]
        %v3034 = vld [vmem:[%s394 + $0x88] sm:$0xff]
        %v3035 = vld [vmem:[%s394 + $0xa0] sm:$0xff]
        %v3036 = vld [vmem:[%s394 + $0xb8] sm:$0xff]
        %v3037 = vld [vmem:[%s394 + $0xd0] sm:$0xff]
        %v3038 = vld [vmem:[%s394 + $0xe8] sm:$0xff]
        %v3039 = vld [vmem:[%s394 + $0x100] sm:$0xff]
        %v3040 = vld [vmem:[%s394 + $0x118] sm:$0xff]
        %v3041 = vld [vmem:[%s394 + $0x130] sm:$0xff]
        %v3042 = vld [vmem:[%s394 + $0x148] sm:$0xff]
        %v3043 = vld [vmem:[%s394 + $0x160] sm:$0xff]
        %v3044 = vld [vmem:[%s394 + $0x178] sm:$0xff]
        %v3045 = vld [vmem:[%s555] sm:$0xff]
        %v3046 = vld [vmem:[%s555 + $0x8] sm:$0xff]
        %v3047 = vld [vmem:[%s555 + $0x18] sm:$0xff]
        %v3048 = vld [vmem:[%s555 + $0x20] sm:$0xff]
        %v3049 = vld [vmem:[%s555 + $0x30] sm:$0xff]
        %v3050 = vld [vmem:[%s555 + $0x38] sm:$0xff]
        %v3051 = vld [vmem:[%s555 + $0x48] sm:$0xff]
        %v3052 = vld [vmem:[%s555 + $0x50] sm:$0xff]
        %v3053 = vld [vmem:[%s555 + $0x60] sm:$0xff]
        %v3054 = vld [vmem:[%s555 + $0x68] sm:$0xff]
        %v3055 = vld [vmem:[%s555 + $0x78] sm:$0xff]
        %v3056 = vld [vmem:[%s555 + $0x80] sm:$0xff]
        %v3057 = vld [vmem:[%s555 + $0x90] sm:$0xff]
        %v3058 = vld [vmem:[%s555 + $0x98] sm:$0xff]
        %v3059 = vld [vmem:[%s555 + $0xa8] sm:$0xff]
        %v3060 = vld [vmem:[%s555 + $0xb0] sm:$0xff]
        %v3061 = vld [vmem:[%s555 + $0xc0] sm:$0xff]
        %v3062 = vld [vmem:[%s555 + $0xc8] sm:$0xff]
        %v3063 = vld [vmem:[%s555 + $0xd8] sm:$0xff]
        %v3064 = vld [vmem:[%s555 + $0xe0] sm:$0xff]
        %v3065 = vld [vmem:[%s555 + $0xf0] sm:$0xff]
        %v3066 = vld [vmem:[%s555 + $0xf8] sm:$0xff]
        %v3067 = vld [vmem:[%s555 + $0x108] sm:$0xff]
        %v3068 = vld [vmem:[%s555 + $0x110] sm:$0xff]
        %v3069 = vld [vmem:[%s555 + $0x120] sm:$0xff]
        %v3070 = vld [vmem:[%s555 + $0x128] sm:$0xff]
        %v3071 = vld [vmem:[%s555 + $0x138] sm:$0xff]
        %v3072 = vld [vmem:[%s555 + $0x140] sm:$0xff]
        %v3073 = vld [vmem:[%s555 + $0x150] sm:$0xff]
        %v3074 = vld [vmem:[%s555 + $0x158] sm:$0xff]
        %v3075 = vld [vmem:[%s555 + $0x168] sm:$0xff]
        %v3076 = vld [vmem:[%s555 + $0x170] sm:$0xff]
        %v3077 = vld [vmem:[%s555 + $0x4] sm:$0xff]
        %v3078 = vld [vmem:[%s555 + $0xc] sm:$0xff]
        %v3079 = vld [vmem:[%s555 + $0x1c] sm:$0xff]
        %v3080 = vld [vmem:[%s555 + $0x24] sm:$0xff]
        %v3081 = vld [vmem:[%s555 + $0x34] sm:$0xff]
        %v3082 = vld [vmem:[%s555 + $0x3c] sm:$0xff]
        %v3083 = vld [vmem:[%s555 + $0x4c] sm:$0xff]
        %v3084 = vld [vmem:[%s555 + $0x54] sm:$0xff]
        %v3085 = vld [vmem:[%s555 + $0x64] sm:$0xff]
        %v3086 = vld [vmem:[%s555 + $0x6c] sm:$0xff]
        %v3087 = vld [vmem:[%s555 + $0x7c] sm:$0xff]
        %v3088 = vld [vmem:[%s555 + $0x84] sm:$0xff]
        %v3089 = vld [vmem:[%s555 + $0x94] sm:$0xff]
        %v3090 = vld [vmem:[%s555 + $0x9c] sm:$0xff]
        %v3091 = vld [vmem:[%s555 + $0xac] sm:$0xff]
        %v3092 = vld [vmem:[%s555 + $0xb4] sm:$0xff]
        %v3093 = vld [vmem:[%s555 + $0xc4] sm:$0xff]
        %v3094 = vld [vmem:[%s555 + $0xcc] sm:$0xff]
        %v3095 = vld [vmem:[%s555 + $0xdc] sm:$0xff]
        %v3096 = vld [vmem:[%s555 + $0xe4] sm:$0xff]
        %v3097 = vld [vmem:[%s555 + $0xf4] sm:$0xff]
        %v3098 = vld [vmem:[%s555 + $0xfc] sm:$0xff]
        %v3099 = vld [vmem:[%s555 + $0x10c] sm:$0xff]
        %v3100 = vld [vmem:[%s555 + $0x114] sm:$0xff]
        %v3101 = vld [vmem:[%s555 + $0x124] sm:$0xff]
        %v3102 = vld [vmem:[%s555 + $0x12c] sm:$0xff]
        %v3103 = vld [vmem:[%s555 + $0x13c] sm:$0xff]
        %v3104 = vld [vmem:[%s555 + $0x144] sm:$0xff]
        %v3105 = vld [vmem:[%s555 + $0x154] sm:$0xff]
        %v3106 = vld [vmem:[%s555 + $0x15c] sm:$0xff]
        %v3107 = vld [vmem:[%s555 + $0x16c] sm:$0xff]
        %v3108 = vld [vmem:[%s555 + $0x174] sm:$0xff]
        %v3109 = vld [vmem:[%s555 + $0x10] sm:$0xff]
        %v3110 = vld [vmem:[%s555 + $0x28] sm:$0xff]
        %v3111 = vld [vmem:[%s555 + $0x40] sm:$0xff]
        %v3112 = vld [vmem:[%s555 + $0x58] sm:$0xff]
        %v3113 = vld [vmem:[%s555 + $0x70] sm:$0xff]
        %v3114 = vld [vmem:[%s555 + $0x88] sm:$0xff]
        %v3115 = vld [vmem:[%s555 + $0xa0] sm:$0xff]
        %v3116 = vld [vmem:[%s555 + $0xb8] sm:$0xff]
        %v3117 = vld [vmem:[%s555 + $0xd0] sm:$0xff]
        %v3118 = vld [vmem:[%s555 + $0xe8] sm:$0xff]
        %v3119 = vld [vmem:[%s555 + $0x100] sm:$0xff]
        %v3120 = vld [vmem:[%s555 + $0x118] sm:$0xff]
        %v3121 = vld [vmem:[%s555 + $0x130] sm:$0xff]
        %v3122 = vld [vmem:[%s555 + $0x148] sm:$0xff]
        %v3123 = vld [vmem:[%s555 + $0x160] sm:$0xff]
        %v3124 = vld [vmem:[%s555 + $0x178] sm:$0xff]
        %3157 = vrot.lane.b32.xlu0 %v2949, 8
        %v3158 = vpop.permute.xlu0 %3157
        %3159 = vrot.lane.b32.xlu0 %v2950, 8
        %v3160 = vpop.permute.xlu0 %3159
        %3161 = vrot.lane.b32.xlu0 %v2951, 8
        %v3162 = vpop.permute.xlu0 %3161
        %3163 = vrot.lane.b32.xlu0 %v2952, 8
        %v3164 = vpop.permute.xlu0 %3163
        %3165 = vrot.lane.b32.xlu0 %v2953, 8
        %v3166 = vpop.permute.xlu0 %3165
        %3167 = vrot.lane.b32.xlu0 %v2954, 8
        %v3168 = vpop.permute.xlu0 %3167
        %3169 = vrot.lane.b32.xlu0 %v2955, 8
        %v3170 = vpop.permute.xlu0 %3169
        %3171 = vrot.lane.b32.xlu0 %v2956, 8
        %v3172 = vpop.permute.xlu0 %3171
        %3173 = vrot.lane.b32.xlu0 %v2957, 8
        %v3174 = vpop.permute.xlu0 %3173
        %3175 = vrot.lane.b32.xlu0 %v2958, 8
        %v3176 = vpop.permute.xlu0 %3175
        %3177 = vrot.lane.b32.xlu0 %v2959, 8
        %v3178 = vpop.permute.xlu0 %3177
        %3179 = vrot.lane.b32.xlu0 %v2960, 8
        %v3180 = vpop.permute.xlu0 %3179
        %3181 = vrot.lane.b32.xlu0 %v2961, 8
        %v3182 = vpop.permute.xlu0 %3181
        %3183 = vrot.lane.b32.xlu0 %v2962, 8
        %v3184 = vpop.permute.xlu0 %3183
        %3185 = vrot.lane.b32.xlu0 %v2963, 8
        %v3186 = vpop.permute.xlu0 %3185
        %3187 = vrot.lane.b32.xlu0 %v2964, 8
        %v3188 = vpop.permute.xlu0 %3187
        %3189 = vrot.lane.b32.xlu0 %v2965, 8
        %v3190 = vpop.permute.xlu0 %3189
        %3191 = vrot.lane.b32.xlu0 %v2966, 8
        %v3192 = vpop.permute.xlu0 %3191
        %3193 = vrot.lane.b32.xlu0 %v2967, 8
        %v3194 = vpop.permute.xlu0 %3193
        %3195 = vrot.lane.b32.xlu0 %v2968, 8
        %v3196 = vpop.permute.xlu0 %3195
        %3197 = vrot.lane.b32.xlu0 %v2969, 8
        %v3198 = vpop.permute.xlu0 %3197
        %3199 = vrot.lane.b32.xlu0 %v2970, 8
        %v3200 = vpop.permute.xlu0 %3199
        %3201 = vrot.lane.b32.xlu0 %v2971, 8
        %v3202 = vpop.permute.xlu0 %3201
        %3203 = vrot.lane.b32.xlu0 %v2972, 8
        %v3204 = vpop.permute.xlu0 %3203
        %3205 = vrot.lane.b32.xlu0 %v2973, 8
        %v3206 = vpop.permute.xlu0 %3205
        %3207 = vrot.lane.b32.xlu0 %v2974, 8
        %v3208 = vpop.permute.xlu0 %3207
        %3209 = vrot.lane.b32.xlu0 %v2975, 8
        %v3210 = vpop.permute.xlu0 %3209
        %3211 = vrot.lane.b32.xlu0 %v2976, 8
        %v3212 = vpop.permute.xlu0 %3211
        %3213 = vrot.lane.b32.xlu0 %v2977, 8
        %v3214 = vpop.permute.xlu0 %3213
        %3215 = vrot.lane.b32.xlu0 %v2978, 8
        %v3216 = vpop.permute.xlu0 %3215
        %3217 = vrot.lane.b32.xlu0 %v2979, 8
        %v3218 = vpop.permute.xlu0 %3217
        %3219 = vrot.lane.b32.xlu0 %v2980, 8
        %v3220 = vpop.permute.xlu0 %3219
        %3285 = vrot.lane.b32.xlu0 %v2918, 16
        %v3286 = vpop.permute.xlu0 %3285
        %3287 = vrot.lane.b32.xlu0 %v2981, 16
        %v3288 = vpop.permute.xlu0 %3287
        %3289 = vrot.lane.b32.xlu0 %v2920, 16
        %v3290 = vpop.permute.xlu0 %3289
        %3291 = vrot.lane.b32.xlu0 %v2982, 16
        %v3292 = vpop.permute.xlu0 %3291
        %3293 = vrot.lane.b32.xlu0 %v2922, 16
        %v3294 = vpop.permute.xlu0 %3293
        %3295 = vrot.lane.b32.xlu0 %v2983, 16
        %v3296 = vpop.permute.xlu0 %3295
        %3297 = vrot.lane.b32.xlu0 %v2924, 16
        %v3298 = vpop.permute.xlu0 %3297
        %3299 = vrot.lane.b32.xlu0 %v2984, 16
        %v3300 = vpop.permute.xlu0 %3299
        %3301 = vrot.lane.b32.xlu0 %v2926, 16
        %v3302 = vpop.permute.xlu0 %3301
        %3303 = vrot.lane.b32.xlu0 %v2985, 16
        %v3304 = vpop.permute.xlu0 %3303
        %3305 = vrot.lane.b32.xlu0 %v2928, 16
        %v3306 = vpop.permute.xlu0 %3305
        %3307 = vrot.lane.b32.xlu0 %v2986, 16
        %v3308 = vpop.permute.xlu0 %3307
        %3309 = vrot.lane.b32.xlu0 %v2930, 16
        %v3310 = vpop.permute.xlu0 %3309
        %3311 = vrot.lane.b32.xlu0 %v2987, 16
        %v3312 = vpop.permute.xlu0 %3311
        %3313 = vrot.lane.b32.xlu0 %v2932, 16
        %v3314 = vpop.permute.xlu0 %3313
        %3315 = vrot.lane.b32.xlu0 %v2988, 16
        %v3316 = vpop.permute.xlu0 %3315
        %3317 = vrot.lane.b32.xlu0 %v2934, 16
        %v3318 = vpop.permute.xlu0 %3317
        %3319 = vrot.lane.b32.xlu0 %v2989, 16
        %v3320 = vpop.permute.xlu0 %3319
        %3321 = vrot.lane.b32.xlu0 %v2936, 16
        %v3322 = vpop.permute.xlu0 %3321
        %3323 = vrot.lane.b32.xlu0 %v2990, 16
        %v3324 = vpop.permute.xlu0 %3323
        %3325 = vrot.lane.b32.xlu0 %v2938, 16
        %v3326 = vpop.permute.xlu0 %3325
        %3327 = vrot.lane.b32.xlu0 %v2991, 16
        %v3328 = vpop.permute.xlu0 %3327
        %3329 = vrot.lane.b32.xlu0 %v2940, 16
        %v3330 = vpop.permute.xlu0 %3329
        %3331 = vrot.lane.b32.xlu0 %v2992, 16
        %v3332 = vpop.permute.xlu0 %3331
        %3333 = vrot.lane.b32.xlu0 %v2942, 16
        %v3334 = vpop.permute.xlu0 %3333
        %3335 = vrot.lane.b32.xlu0 %v2993, 16
        %v3336 = vpop.permute.xlu0 %3335
        %3337 = vrot.lane.b32.xlu0 %v2944, 16
        %v3338 = vpop.permute.xlu0 %3337
        %3339 = vrot.lane.b32.xlu0 %v2994, 16
        %v3340 = vpop.permute.xlu0 %3339
        %3341 = vrot.lane.b32.xlu0 %v2946, 16
        %v3342 = vpop.permute.xlu0 %3341
        %3343 = vrot.lane.b32.xlu0 %v2995, 16
        %v3344 = vpop.permute.xlu0 %3343
        %3345 = vrot.lane.b32.xlu0 %v2948, 16
        %v3346 = vpop.permute.xlu0 %3345
        %3347 = vrot.lane.b32.xlu0 %v2996, 16
        %v3348 = vpop.permute.xlu0 %3347
        %3413 = vrot.lane.b32.xlu0 %v2997, 24
        %v3414 = vpop.permute.xlu0 %3413
        %3415 = vrot.lane.b32.xlu0 %v2998, 24
        %v3416 = vpop.permute.xlu0 %3415
        %3417 = vrot.lane.b32.xlu0 %v2999, 24
        %v3418 = vpop.permute.xlu0 %3417
        %3419 = vrot.lane.b32.xlu0 %v3000, 24
        %v3420 = vpop.permute.xlu0 %3419
        %3421 = vrot.lane.b32.xlu0 %v3001, 24
        %v3422 = vpop.permute.xlu0 %3421
        %3423 = vrot.lane.b32.xlu0 %v3002, 24
        %v3424 = vpop.permute.xlu0 %3423
        %3425 = vrot.lane.b32.xlu0 %v3003, 24
        %v3426 = vpop.permute.xlu0 %3425
        %3427 = vrot.lane.b32.xlu0 %v3004, 24
        %v3428 = vpop.permute.xlu0 %3427
        %3429 = vrot.lane.b32.xlu0 %v3005, 24
        %v3430 = vpop.permute.xlu0 %3429
        %3431 = vrot.lane.b32.xlu0 %v3006, 24
        %v3432 = vpop.permute.xlu0 %3431
        %3433 = vrot.lane.b32.xlu0 %v3007, 24
        %v3434 = vpop.permute.xlu0 %3433
        %3435 = vrot.lane.b32.xlu0 %v3008, 24
        %v3436 = vpop.permute.xlu0 %3435
        %3437 = vrot.lane.b32.xlu0 %v3009, 24
        %v3438 = vpop.permute.xlu0 %3437
        %3439 = vrot.lane.b32.xlu0 %v3010, 24
        %v3440 = vpop.permute.xlu0 %3439
        %3441 = vrot.lane.b32.xlu0 %v3011, 24
        %v3442 = vpop.permute.xlu0 %3441
        %3443 = vrot.lane.b32.xlu0 %v3012, 24
        %v3444 = vpop.permute.xlu0 %3443
        %3445 = vrot.lane.b32.xlu0 %v3013, 24
        %v3446 = vpop.permute.xlu0 %3445
        %3447 = vrot.lane.b32.xlu0 %v3014, 24
        %v3448 = vpop.permute.xlu0 %3447
        %3449 = vrot.lane.b32.xlu0 %v3015, 24
        %v3450 = vpop.permute.xlu0 %3449
        %3451 = vrot.lane.b32.xlu0 %v3016, 24
        %v3452 = vpop.permute.xlu0 %3451
        %3453 = vrot.lane.b32.xlu0 %v3017, 24
        %v3454 = vpop.permute.xlu0 %3453
        %3455 = vrot.lane.b32.xlu0 %v3018, 24
        %v3456 = vpop.permute.xlu0 %3455
        %3457 = vrot.lane.b32.xlu0 %v3019, 24
        %v3458 = vpop.permute.xlu0 %3457
        %3459 = vrot.lane.b32.xlu0 %v3020, 24
        %v3460 = vpop.permute.xlu0 %3459
        %3461 = vrot.lane.b32.xlu0 %v3021, 24
        %v3462 = vpop.permute.xlu0 %3461
        %3463 = vrot.lane.b32.xlu0 %v3022, 24
        %v3464 = vpop.permute.xlu0 %3463
        %3465 = vrot.lane.b32.xlu0 %v3023, 24
        %v3466 = vpop.permute.xlu0 %3465
        %3467 = vrot.lane.b32.xlu0 %v3024, 24
        %v3468 = vpop.permute.xlu0 %3467
        %3469 = vrot.lane.b32.xlu0 %v3025, 24
        %v3470 = vpop.permute.xlu0 %3469
        %3471 = vrot.lane.b32.xlu0 %v3026, 24
        %v3472 = vpop.permute.xlu0 %3471
        %3473 = vrot.lane.b32.xlu0 %v3027, 24
        %v3474 = vpop.permute.xlu0 %3473
        %3475 = vrot.lane.b32.xlu0 %v3028, 24
        %v3476 = vpop.permute.xlu0 %3475
        %3541 = vrot.lane.b32.xlu0 %v2853, 32
        %v3542 = vpop.permute.xlu0 %3541
        %3543 = vrot.lane.b32.xlu0 %v2854, 32
        %v3544 = vpop.permute.xlu0 %3543
        %3545 = vrot.lane.b32.xlu0 %v2855, 32
        %v3546 = vpop.permute.xlu0 %3545
        %3547 = vrot.lane.b32.xlu0 %v2856, 32
        %v3548 = vpop.permute.xlu0 %3547
        %3549 = vrot.lane.b32.xlu0 %v2857, 32
        %v3550 = vpop.permute.xlu0 %3549
        %3551 = vrot.lane.b32.xlu0 %v2858, 32
        %v3552 = vpop.permute.xlu0 %3551
        %3553 = vrot.lane.b32.xlu0 %v2859, 32
        %v3554 = vpop.permute.xlu0 %3553
        %3555 = vrot.lane.b32.xlu0 %v2860, 32
        %v3556 = vpop.permute.xlu0 %3555
        %3557 = vrot.lane.b32.xlu0 %v2861, 32
        %v3558 = vpop.permute.xlu0 %3557
        %3559 = vrot.lane.b32.xlu0 %v2862, 32
        %v3560 = vpop.permute.xlu0 %3559
        %3561 = vrot.lane.b32.xlu0 %v2863, 32
        %v3562 = vpop.permute.xlu0 %3561
        %3563 = vrot.lane.b32.xlu0 %v2864, 32
        %v3564 = vpop.permute.xlu0 %3563
        %3565 = vrot.lane.b32.xlu0 %v2865, 32
        %v3566 = vpop.permute.xlu0 %3565
        %3567 = vrot.lane.b32.xlu0 %v2866, 32
        %v3568 = vpop.permute.xlu0 %3567
        %3569 = vrot.lane.b32.xlu0 %v2867, 32
        %v3570 = vpop.permute.xlu0 %3569
        %3571 = vrot.lane.b32.xlu0 %v2868, 32
        %v3572 = vpop.permute.xlu0 %3571
        %3573 = vrot.lane.b32.xlu0 %v2869, 32
        %v3574 = vpop.permute.xlu0 %3573
        %3575 = vrot.lane.b32.xlu0 %v2870, 32
        %v3576 = vpop.permute.xlu0 %3575
        %3577 = vrot.lane.b32.xlu0 %v2871, 32
        %v3578 = vpop.permute.xlu0 %3577
        %3579 = vrot.lane.b32.xlu0 %v2872, 32
        %v3580 = vpop.permute.xlu0 %3579
        %3581 = vrot.lane.b32.xlu0 %v2873, 32
        %v3582 = vpop.permute.xlu0 %3581
        %3583 = vrot.lane.b32.xlu0 %v2874, 32
        %v3584 = vpop.permute.xlu0 %3583
        %3585 = vrot.lane.b32.xlu0 %v2875, 32
        %v3586 = vpop.permute.xlu0 %3585
        %3587 = vrot.lane.b32.xlu0 %v2876, 32
        %v3588 = vpop.permute.xlu0 %3587
        %3589 = vrot.lane.b32.xlu0 %v2877, 32
        %v3590 = vpop.permute.xlu0 %3589
        %3591 = vrot.lane.b32.xlu0 %v2878, 32
        %v3592 = vpop.permute.xlu0 %3591
        %3593 = vrot.lane.b32.xlu0 %v2879, 32
        %v3594 = vpop.permute.xlu0 %3593
        %3595 = vrot.lane.b32.xlu0 %v2880, 32
        %v3596 = vpop.permute.xlu0 %3595
        %3597 = vrot.lane.b32.xlu0 %v2881, 32
        %v3598 = vpop.permute.xlu0 %3597
        %3599 = vrot.lane.b32.xlu0 %v2882, 32
        %v3600 = vpop.permute.xlu0 %3599
        %3601 = vrot.lane.b32.xlu0 %v2883, 32
        %v3602 = vpop.permute.xlu0 %3601
        %3603 = vrot.lane.b32.xlu0 %v2884, 32
        %v3604 = vpop.permute.xlu0 %3603
        %3653 = vrot.lane.b32.xlu0 %v2998, 40
        %v3654 = vpop.permute.xlu0 %3653
        %3655 = vrot.lane.b32.xlu0 %v3029, 40
        %v3656 = vpop.permute.xlu0 %3655
        %3657 = vrot.lane.b32.xlu0 %v3000, 40
        %v3658 = vpop.permute.xlu0 %3657
        %3659 = vrot.lane.b32.xlu0 %v3030, 40
        %v3660 = vpop.permute.xlu0 %3659
        %3661 = vrot.lane.b32.xlu0 %v3002, 40
        %v3662 = vpop.permute.xlu0 %3661
        %3663 = vrot.lane.b32.xlu0 %v3031, 40
        %v3664 = vpop.permute.xlu0 %3663
        %3665 = vrot.lane.b32.xlu0 %v3004, 40
        %v3666 = vpop.permute.xlu0 %3665
        %3667 = vrot.lane.b32.xlu0 %v3032, 40
        %v3668 = vpop.permute.xlu0 %3667
        %3669 = vrot.lane.b32.xlu0 %v3006, 40
        %v3670 = vpop.permute.xlu0 %3669
        %3671 = vrot.lane.b32.xlu0 %v3033, 40
        %v3672 = vpop.permute.xlu0 %3671
        %3673 = vrot.lane.b32.xlu0 %v3008, 40
        %v3674 = vpop.permute.xlu0 %3673
        %3675 = vrot.lane.b32.xlu0 %v3034, 40
        %v3676 = vpop.permute.xlu0 %3675
        %3677 = vrot.lane.b32.xlu0 %v3010, 40
        %v3678 = vpop.permute.xlu0 %3677
        %3679 = vrot.lane.b32.xlu0 %v3035, 40
        %v3680 = vpop.permute.xlu0 %3679
        %3681 = vrot.lane.b32.xlu0 %v3012, 40
        %v3682 = vpop.permute.xlu0 %3681
        %3683 = vrot.lane.b32.xlu0 %v3036, 40
        %v3684 = vpop.permute.xlu0 %3683
        %3685 = vrot.lane.b32.xlu0 %v3014, 40
        %v3686 = vpop.permute.xlu0 %3685
        %3687 = vrot.lane.b32.xlu0 %v3037, 40
        %v3688 = vpop.permute.xlu0 %3687
        %3689 = vrot.lane.b32.xlu0 %v3016, 40
        %v3690 = vpop.permute.xlu0 %3689
        %3691 = vrot.lane.b32.xlu0 %v3038, 40
        %v3692 = vpop.permute.xlu0 %3691
        %3693 = vrot.lane.b32.xlu0 %v3018, 40
        %v3694 = vpop.permute.xlu0 %3693
        %3695 = vrot.lane.b32.xlu0 %v3039, 40
        %v3696 = vpop.permute.xlu0 %3695
        %3697 = vrot.lane.b32.xlu0 %v3020, 40
        %v3698 = vpop.permute.xlu0 %3697
        %3699 = vrot.lane.b32.xlu0 %v3040, 40
        %v3700 = vpop.permute.xlu0 %3699
        %3701 = vrot.lane.b32.xlu0 %v3022, 40
        %v3702 = vpop.permute.xlu0 %3701
        %3703 = vrot.lane.b32.xlu0 %v3041, 40
        %v3704 = vpop.permute.xlu0 %3703
        %3705 = vrot.lane.b32.xlu0 %v3024, 40
        %v3706 = vpop.permute.xlu0 %3705
        %3707 = vrot.lane.b32.xlu0 %v3042, 40
        %v3708 = vpop.permute.xlu0 %3707
        %3709 = vrot.lane.b32.xlu0 %v3026, 40
        %v3710 = vpop.permute.xlu0 %3709
        %3711 = vrot.lane.b32.xlu0 %v3043, 40
        %v3712 = vpop.permute.xlu0 %3711
        %3713 = vrot.lane.b32.xlu0 %v3028, 40
        %v3714 = vpop.permute.xlu0 %3713
        %3715 = vrot.lane.b32.xlu0 %v3044, 40
        %v3716 = vpop.permute.xlu0 %3715
        %3781 = vrot.lane.b32.xlu0 %v3045, 48
        %v3782 = vpop.permute.xlu0 %3781
        %3783 = vrot.lane.b32.xlu0 %v3046, 48
        %v3784 = vpop.permute.xlu0 %3783
        %3785 = vrot.lane.b32.xlu0 %v3047, 48
        %v3786 = vpop.permute.xlu0 %3785
        %3787 = vrot.lane.b32.xlu0 %v3048, 48
        %v3788 = vpop.permute.xlu0 %3787
        %3789 = vrot.lane.b32.xlu0 %v3049, 48
        %v3790 = vpop.permute.xlu0 %3789
        %3791 = vrot.lane.b32.xlu0 %v3050, 48
        %v3792 = vpop.permute.xlu0 %3791
        %3793 = vrot.lane.b32.xlu0 %v3051, 48
        %v3794 = vpop.permute.xlu0 %3793
        %3795 = vrot.lane.b32.xlu0 %v3052, 48
        %v3796 = vpop.permute.xlu0 %3795
        %3797 = vrot.lane.b32.xlu0 %v3053, 48
        %v3798 = vpop.permute.xlu0 %3797
        %3799 = vrot.lane.b32.xlu0 %v3054, 48
        %v3800 = vpop.permute.xlu0 %3799
        %3801 = vrot.lane.b32.xlu0 %v3055, 48
        %v3802 = vpop.permute.xlu0 %3801
        %3803 = vrot.lane.b32.xlu0 %v3056, 48
        %v3804 = vpop.permute.xlu0 %3803
        %3805 = vrot.lane.b32.xlu0 %v3057, 48
        %v3806 = vpop.permute.xlu0 %3805
        %3807 = vrot.lane.b32.xlu0 %v3058, 48
        %v3808 = vpop.permute.xlu0 %3807
        %3809 = vrot.lane.b32.xlu0 %v3059, 48
        %v3810 = vpop.permute.xlu0 %3809
        %3811 = vrot.lane.b32.xlu0 %v3060, 48
        %v3812 = vpop.permute.xlu0 %3811
        %3813 = vrot.lane.b32.xlu0 %v3061, 48
        %v3814 = vpop.permute.xlu0 %3813
        %3815 = vrot.lane.b32.xlu0 %v3062, 48
        %v3816 = vpop.permute.xlu0 %3815
        %3817 = vrot.lane.b32.xlu0 %v3063, 48
        %v3818 = vpop.permute.xlu0 %3817
        %3819 = vrot.lane.b32.xlu0 %v3064, 48
        %v3820 = vpop.permute.xlu0 %3819
        %3821 = vrot.lane.b32.xlu0 %v3065, 48
        %v3822 = vpop.permute.xlu0 %3821
        %3823 = vrot.lane.b32.xlu0 %v3066, 48
        %v3824 = vpop.permute.xlu0 %3823
        %3825 = vrot.lane.b32.xlu0 %v3067, 48
        %v3826 = vpop.permute.xlu0 %3825
        %3827 = vrot.lane.b32.xlu0 %v3068, 48
        %v3828 = vpop.permute.xlu0 %3827
        %3829 = vrot.lane.b32.xlu0 %v3069, 48
        %v3830 = vpop.permute.xlu0 %3829
        %3831 = vrot.lane.b32.xlu0 %v3070, 48
        %v3832 = vpop.permute.xlu0 %3831
        %3833 = vrot.lane.b32.xlu0 %v3071, 48
        %v3834 = vpop.permute.xlu0 %3833
        %3835 = vrot.lane.b32.xlu0 %v3072, 48
        %v3836 = vpop.permute.xlu0 %3835
        %3837 = vrot.lane.b32.xlu0 %v3073, 48
        %v3838 = vpop.permute.xlu0 %3837
        %3839 = vrot.lane.b32.xlu0 %v3074, 48
        %v3840 = vpop.permute.xlu0 %3839
        %3841 = vrot.lane.b32.xlu0 %v3075, 48
        %v3842 = vpop.permute.xlu0 %3841
        %3843 = vrot.lane.b32.xlu0 %v3076, 48
        %v3844 = vpop.permute.xlu0 %3843
        %3909 = vrot.lane.b32.xlu0 %v3077, 56
        %v3910 = vpop.permute.xlu0 %3909
        %3911 = vrot.lane.b32.xlu0 %v3078, 56
        %v3912 = vpop.permute.xlu0 %3911
        %3913 = vrot.lane.b32.xlu0 %v3079, 56
        %v3914 = vpop.permute.xlu0 %3913
        %3915 = vrot.lane.b32.xlu0 %v3080, 56
        %v3916 = vpop.permute.xlu0 %3915
        %3917 = vrot.lane.b32.xlu0 %v3081, 56
        %v3918 = vpop.permute.xlu0 %3917
        %3919 = vrot.lane.b32.xlu0 %v3082, 56
        %v3920 = vpop.permute.xlu0 %3919
        %3921 = vrot.lane.b32.xlu0 %v3083, 56
        %v3922 = vpop.permute.xlu0 %3921
        %3923 = vrot.lane.b32.xlu0 %v3084, 56
        %v3924 = vpop.permute.xlu0 %3923
        %3925 = vrot.lane.b32.xlu0 %v3085, 56
        %v3926 = vpop.permute.xlu0 %3925
        %3927 = vrot.lane.b32.xlu0 %v3086, 56
        %v3928 = vpop.permute.xlu0 %3927
        %3929 = vrot.lane.b32.xlu0 %v3087, 56
        %v3930 = vpop.permute.xlu0 %3929
        %3931 = vrot.lane.b32.xlu0 %v3088, 56
        %v3932 = vpop.permute.xlu0 %3931
        %3933 = vrot.lane.b32.xlu0 %v3089, 56
        %v3934 = vpop.permute.xlu0 %3933
        %3935 = vrot.lane.b32.xlu0 %v3090, 56
        %v3936 = vpop.permute.xlu0 %3935
        %3937 = vrot.lane.b32.xlu0 %v3091, 56
        %v3938 = vpop.permute.xlu0 %3937
        %3939 = vrot.lane.b32.xlu0 %v3092, 56
        %v3940 = vpop.permute.xlu0 %3939
        %3941 = vrot.lane.b32.xlu0 %v3093, 56
        %v3942 = vpop.permute.xlu0 %3941
        %3943 = vrot.lane.b32.xlu0 %v3094, 56
        %v3944 = vpop.permute.xlu0 %3943
        %3945 = vrot.lane.b32.xlu0 %v3095, 56
        %v3946 = vpop.permute.xlu0 %3945
        %3947 = vrot.lane.b32.xlu0 %v3096, 56
        %v3948 = vpop.permute.xlu0 %3947
        %3949 = vrot.lane.b32.xlu0 %v3097, 56
        %v3950 = vpop.permute.xlu0 %3949
        %3951 = vrot.lane.b32.xlu0 %v3098, 56
        %v3952 = vpop.permute.xlu0 %3951
        %3953 = vrot.lane.b32.xlu0 %v3099, 56
        %v3954 = vpop.permute.xlu0 %3953
        %3955 = vrot.lane.b32.xlu0 %v3100, 56
        %v3956 = vpop.permute.xlu0 %3955
        %3957 = vrot.lane.b32.xlu0 %v3101, 56
        %v3958 = vpop.permute.xlu0 %3957
        %3959 = vrot.lane.b32.xlu0 %v3102, 56
        %v3960 = vpop.permute.xlu0 %3959
        %3961 = vrot.lane.b32.xlu0 %v3103, 56
        %v3962 = vpop.permute.xlu0 %3961
        %3963 = vrot.lane.b32.xlu0 %v3104, 56
        %v3964 = vpop.permute.xlu0 %3963
        %3965 = vrot.lane.b32.xlu0 %v3105, 56
        %v3966 = vpop.permute.xlu0 %3965
        %3967 = vrot.lane.b32.xlu0 %v3106, 56
        %v3968 = vpop.permute.xlu0 %3967
        %3969 = vrot.lane.b32.xlu0 %v3107, 56
        %v3970 = vpop.permute.xlu0 %3969
        %3971 = vrot.lane.b32.xlu0 %v3108, 56
        %v3972 = vpop.permute.xlu0 %3971
        %4021 = vrot.lane.b32.xlu0 %v3046, 64
        %v4022 = vpop.permute.xlu0 %4021
        %4023 = vrot.lane.b32.xlu0 %v3109, 64
        %v4024 = vpop.permute.xlu0 %4023
        %4025 = vrot.lane.b32.xlu0 %v3048, 64
        %v4026 = vpop.permute.xlu0 %4025
        %4027 = vrot.lane.b32.xlu0 %v3110, 64
        %v4028 = vpop.permute.xlu0 %4027
        %4029 = vrot.lane.b32.xlu0 %v3050, 64
        %v4030 = vpop.permute.xlu0 %4029
        %4031 = vrot.lane.b32.xlu0 %v3111, 64
        %v4032 = vpop.permute.xlu0 %4031
        %4033 = vrot.lane.b32.xlu0 %v3052, 64
        %v4034 = vpop.permute.xlu0 %4033
        %4035 = vrot.lane.b32.xlu0 %v3112, 64
        %v4036 = vpop.permute.xlu0 %4035
        %4037 = vrot.lane.b32.xlu0 %v3054, 64
        %v4038 = vpop.permute.xlu0 %4037
        %4039 = vrot.lane.b32.xlu0 %v3113, 64
        %v4040 = vpop.permute.xlu0 %4039
        %4041 = vrot.lane.b32.xlu0 %v3056, 64
        %v4042 = vpop.permute.xlu0 %4041
        %4043 = vrot.lane.b32.xlu0 %v3114, 64
        %v4044 = vpop.permute.xlu0 %4043
        %4045 = vrot.lane.b32.xlu0 %v3058, 64
        %v4046 = vpop.permute.xlu0 %4045
        %4047 = vrot.lane.b32.xlu0 %v3115, 64
        %v4048 = vpop.permute.xlu0 %4047
        %4049 = vrot.lane.b32.xlu0 %v3060, 64
        %v4050 = vpop.permute.xlu0 %4049
        %4051 = vrot.lane.b32.xlu0 %v3116, 64
        %v4052 = vpop.permute.xlu0 %4051
        %4053 = vrot.lane.b32.xlu0 %v3062, 64
        %v4054 = vpop.permute.xlu0 %4053
        %4055 = vrot.lane.b32.xlu0 %v3117, 64
        %v4056 = vpop.permute.xlu0 %4055
        %4057 = vrot.lane.b32.xlu0 %v3064, 64
        %v4058 = vpop.permute.xlu0 %4057
        %4059 = vrot.lane.b32.xlu0 %v3118, 64
        %v4060 = vpop.permute.xlu0 %4059
        %4061 = vrot.lane.b32.xlu0 %v3066, 64
        %v4062 = vpop.permute.xlu0 %4061
        %4063 = vrot.lane.b32.xlu0 %v3119, 64
        %v4064 = vpop.permute.xlu0 %4063
        %4065 = vrot.lane.b32.xlu0 %v3068, 64
        %v4066 = vpop.permute.xlu0 %4065
        %4067 = vrot.lane.b32.xlu0 %v3120, 64
        %v4068 = vpop.permute.xlu0 %4067
        %4069 = vrot.lane.b32.xlu0 %v3070, 64
        %v4070 = vpop.permute.xlu0 %4069
        %4071 = vrot.lane.b32.xlu0 %v3121, 64
        %v4072 = vpop.permute.xlu0 %4071
        %4073 = vrot.lane.b32.xlu0 %v3072, 64
        %v4074 = vpop.permute.xlu0 %4073
        %4075 = vrot.lane.b32.xlu0 %v3122, 64
        %v4076 = vpop.permute.xlu0 %4075
        %4077 = vrot.lane.b32.xlu0 %v3074, 64
        %v4078 = vpop.permute.xlu0 %4077
        %4079 = vrot.lane.b32.xlu0 %v3123, 64
        %v4080 = vpop.permute.xlu0 %4079
        %4081 = vrot.lane.b32.xlu0 %v3076, 64
        %v4082 = vpop.permute.xlu0 %4081
        %4083 = vrot.lane.b32.xlu0 %v3124, 64
        %v4084 = vpop.permute.xlu0 %4083
        %v4117 = vsel %vm250, %v2917, %v3158
        %v4118 = vsel %vm250, %v2918, %v3160
        %v4119 = vsel %vm250, %v2919, %v3162
        %v4120 = vsel %vm250, %v2920, %v3164
        %v4121 = vsel %vm250, %v2921, %v3166
        %v4122 = vsel %vm250, %v2922, %v3168
        %v4123 = vsel %vm250, %v2923, %v3170
        %v4124 = vsel %vm250, %v2924, %v3172
        %v4125 = vsel %vm250, %v2925, %v3174
        %v4126 = vsel %vm250, %v2926, %v3176
        %v4127 = vsel %vm250, %v2927, %v3178
        %v4128 = vsel %vm250, %v2928, %v3180
        %v4129 = vsel %vm250, %v2929, %v3182
        %v4130 = vsel %vm250, %v2930, %v3184
        %v4131 = vsel %vm250, %v2931, %v3186
        %v4132 = vsel %vm250, %v2932, %v3188
        %v4133 = vsel %vm250, %v2933, %v3190
        %v4134 = vsel %vm250, %v2934, %v3192
        %v4135 = vsel %vm250, %v2935, %v3194
        %v4136 = vsel %vm250, %v2936, %v3196
        %v4137 = vsel %vm250, %v2937, %v3198
        %v4138 = vsel %vm250, %v2938, %v3200
        %v4139 = vsel %vm250, %v2939, %v3202
        %v4140 = vsel %vm250, %v2940, %v3204
        %v4141 = vsel %vm250, %v2941, %v3206
        %v4142 = vsel %vm250, %v2942, %v3208
        %v4143 = vsel %vm250, %v2943, %v3210
        %v4144 = vsel %vm250, %v2944, %v3212
        %v4145 = vsel %vm250, %v2945, %v3214
        %v4146 = vsel %vm250, %v2946, %v3216
        %v4147 = vsel %vm250, %v2947, %v3218
        %v4148 = vsel %vm250, %v2948, %v3220
        %v4149 = vsel %vm1660, %v4117, %v3286
        %v4150 = vsel %vm1660, %v4118, %v3288
        %v4151 = vsel %vm1660, %v4119, %v3290
        %v4152 = vsel %vm1660, %v4120, %v3292
        %v4153 = vsel %vm1660, %v4121, %v3294
        %v4154 = vsel %vm1660, %v4122, %v3296
        %v4155 = vsel %vm1660, %v4123, %v3298
        %v4156 = vsel %vm1660, %v4124, %v3300
        %v4157 = vsel %vm1660, %v4125, %v3302
        %v4158 = vsel %vm1660, %v4126, %v3304
        %v4159 = vsel %vm1660, %v4127, %v3306
        %v4160 = vsel %vm1660, %v4128, %v3308
        %v4161 = vsel %vm1660, %v4129, %v3310
        %v4162 = vsel %vm1660, %v4130, %v3312
        %v4163 = vsel %vm1660, %v4131, %v3314
        %v4164 = vsel %vm1660, %v4132, %v3316
        %v4165 = vsel %vm1660, %v4133, %v3318
        %v4166 = vsel %vm1660, %v4134, %v3320
        %v4167 = vsel %vm1660, %v4135, %v3322
        %v4168 = vsel %vm1660, %v4136, %v3324
        %v4169 = vsel %vm1660, %v4137, %v3326
        %v4170 = vsel %vm1660, %v4138, %v3328
        %v4171 = vsel %vm1660, %v4139, %v3330
        %v4172 = vsel %vm1660, %v4140, %v3332
        %v4173 = vsel %vm1660, %v4141, %v3334
        %v4174 = vsel %vm1660, %v4142, %v3336
        %v4175 = vsel %vm1660, %v4143, %v3338
        %v4176 = vsel %vm1660, %v4144, %v3340
        %v4177 = vsel %vm1660, %v4145, %v3342
        %v4178 = vsel %vm1660, %v4146, %v3344
        %v4179 = vsel %vm1660, %v4147, %v3346
        %v4180 = vsel %vm1660, %v4148, %v3348
        %v4181 = vsel %vm1693, %v4149, %v3414
        %v4182 = vsel %vm1693, %v4150, %v3416
        %v4183 = vsel %vm1693, %v4151, %v3418
        %v4184 = vsel %vm1693, %v4152, %v3420
        %v4185 = vsel %vm1693, %v4153, %v3422
        %v4186 = vsel %vm1693, %v4154, %v3424
        %v4187 = vsel %vm1693, %v4155, %v3426
        %v4188 = vsel %vm1693, %v4156, %v3428
        %v4189 = vsel %vm1693, %v4157, %v3430
        %v4190 = vsel %vm1693, %v4158, %v3432
        %v4191 = vsel %vm1693, %v4159, %v3434
        %v4192 = vsel %vm1693, %v4160, %v3436
        %v4193 = vsel %vm1693, %v4161, %v3438
        %v4194 = vsel %vm1693, %v4162, %v3440
        %v4195 = vsel %vm1693, %v4163, %v3442
        %v4196 = vsel %vm1693, %v4164, %v3444
        %v4197 = vsel %vm1693, %v4165, %v3446
        %v4198 = vsel %vm1693, %v4166, %v3448
        %v4199 = vsel %vm1693, %v4167, %v3450
        %v4200 = vsel %vm1693, %v4168, %v3452
        %v4201 = vsel %vm1693, %v4169, %v3454
        %v4202 = vsel %vm1693, %v4170, %v3456
        %v4203 = vsel %vm1693, %v4171, %v3458
        %v4204 = vsel %vm1693, %v4172, %v3460
        %v4205 = vsel %vm1693, %v4173, %v3462
        %v4206 = vsel %vm1693, %v4174, %v3464
        %v4207 = vsel %vm1693, %v4175, %v3466
        %v4208 = vsel %vm1693, %v4176, %v3468
        %v4209 = vsel %vm1693, %v4177, %v3470
        %v4210 = vsel %vm1693, %v4178, %v3472
        %v4211 = vsel %vm1693, %v4179, %v3474
        %v4212 = vsel %vm1693, %v4180, %v3476
        %v4213 = vsel %vm1726, %v4181, %v3542
        %v4214 = vsel %vm1726, %v4182, %v3544
        %v4215 = vsel %vm1726, %v4183, %v3546
        %v4216 = vsel %vm1726, %v4184, %v3548
        %v4217 = vsel %vm1726, %v4185, %v3550
        %v4218 = vsel %vm1726, %v4186, %v3552
        %v4219 = vsel %vm1726, %v4187, %v3554
        %v4220 = vsel %vm1726, %v4188, %v3556
        %v4221 = vsel %vm1726, %v4189, %v3558
        %v4222 = vsel %vm1726, %v4190, %v3560
        %v4223 = vsel %vm1726, %v4191, %v3562
        %v4224 = vsel %vm1726, %v4192, %v3564
        %v4225 = vsel %vm1726, %v4193, %v3566
        %v4226 = vsel %vm1726, %v4194, %v3568
        %v4227 = vsel %vm1726, %v4195, %v3570
        %v4228 = vsel %vm1726, %v4196, %v3572
        %v4229 = vsel %vm1726, %v4197, %v3574
        %v4230 = vsel %vm1726, %v4198, %v3576
        %v4231 = vsel %vm1726, %v4199, %v3578
        %v4232 = vsel %vm1726, %v4200, %v3580
        %v4233 = vsel %vm1726, %v4201, %v3582
        %v4234 = vsel %vm1726, %v4202, %v3584
        %v4235 = vsel %vm1726, %v4203, %v3586
        %v4236 = vsel %vm1726, %v4204, %v3588
        %v4237 = vsel %vm1726, %v4205, %v3590
        %v4238 = vsel %vm1726, %v4206, %v3592
        %v4239 = vsel %vm1726, %v4207, %v3594
        %v4240 = vsel %vm1726, %v4208, %v3596
        %v4241 = vsel %vm1726, %v4209, %v3598
        %v4242 = vsel %vm1726, %v4210, %v3600
        %v4243 = vsel %vm1726, %v4211, %v3602
        %v4244 = vsel %vm1726, %v4212, %v3604
        %v4245 = vsel %vm1759, %v4213, %v3654
        %v4246 = vsel %vm1759, %v4214, %v3656
        %v4247 = vsel %vm1759, %v4215, %v3658
        %v4248 = vsel %vm1759, %v4216, %v3660
        %v4249 = vsel %vm1759, %v4217, %v3662
        %v4250 = vsel %vm1759, %v4218, %v3664
        %v4251 = vsel %vm1759, %v4219, %v3666
        %v4252 = vsel %vm1759, %v4220, %v3668
        %v4253 = vsel %vm1759, %v4221, %v3670
        %v4254 = vsel %vm1759, %v4222, %v3672
        %v4255 = vsel %vm1759, %v4223, %v3674
        %v4256 = vsel %vm1759, %v4224, %v3676
        %v4257 = vsel %vm1759, %v4225, %v3678
        %v4258 = vsel %vm1759, %v4226, %v3680
        %v4259 = vsel %vm1759, %v4227, %v3682
        %v4260 = vsel %vm1759, %v4228, %v3684
        %v4261 = vsel %vm1759, %v4229, %v3686
        %v4262 = vsel %vm1759, %v4230, %v3688
        %v4263 = vsel %vm1759, %v4231, %v3690
        %v4264 = vsel %vm1759, %v4232, %v3692
        %v4265 = vsel %vm1759, %v4233, %v3694
        %v4266 = vsel %vm1759, %v4234, %v3696
        %v4267 = vsel %vm1759, %v4235, %v3698
        %v4268 = vsel %vm1759, %v4236, %v3700
        %v4269 = vsel %vm1759, %v4237, %v3702
        %v4270 = vsel %vm1759, %v4238, %v3704
        %v4271 = vsel %vm1759, %v4239, %v3706
        %v4272 = vsel %vm1759, %v4240, %v3708
        %v4273 = vsel %vm1759, %v4241, %v3710
        %v4274 = vsel %vm1759, %v4242, %v3712
        %v4275 = vsel %vm1759, %v4243, %v3714
        %v4276 = vsel %vm1759, %v4244, %v3716
        %v4277 = vsel %vm1792, %v4245, %v3782
        %v4278 = vsel %vm1792, %v4246, %v3784
        %v4279 = vsel %vm1792, %v4247, %v3786
        %v4280 = vsel %vm1792, %v4248, %v3788
        %v4281 = vsel %vm1792, %v4249, %v3790
        %v4282 = vsel %vm1792, %v4250, %v3792
        %v4283 = vsel %vm1792, %v4251, %v3794
        %v4284 = vsel %vm1792, %v4252, %v3796
        %v4285 = vsel %vm1792, %v4253, %v3798
        %v4286 = vsel %vm1792, %v4254, %v3800
        %v4287 = vsel %vm1792, %v4255, %v3802
        %v4288 = vsel %vm1792, %v4256, %v3804
        %v4289 = vsel %vm1792, %v4257, %v3806
        %v4290 = vsel %vm1792, %v4258, %v3808
        %v4291 = vsel %vm1792, %v4259, %v3810
        %v4292 = vsel %vm1792, %v4260, %v3812
        %v4293 = vsel %vm1792, %v4261, %v3814
        %v4294 = vsel %vm1792, %v4262, %v3816
        %v4295 = vsel %vm1792, %v4263, %v3818
        %v4296 = vsel %vm1792, %v4264, %v3820
        %v4297 = vsel %vm1792, %v4265, %v3822
        %v4298 = vsel %vm1792, %v4266, %v3824
        %v4299 = vsel %vm1792, %v4267, %v3826
        %v4300 = vsel %vm1792, %v4268, %v3828
        %v4301 = vsel %vm1792, %v4269, %v3830
        %v4302 = vsel %vm1792, %v4270, %v3832
        %v4303 = vsel %vm1792, %v4271, %v3834
        %v4304 = vsel %vm1792, %v4272, %v3836
        %v4305 = vsel %vm1792, %v4273, %v3838
        %v4306 = vsel %vm1792, %v4274, %v3840
        %v4307 = vsel %vm1792, %v4275, %v3842
        %v4308 = vsel %vm1792, %v4276, %v3844
        %v4309 = vsel %vm1825, %v4277, %v3910
        %v4310 = vsel %vm1825, %v4278, %v3912
        %v4311 = vsel %vm1825, %v4279, %v3914
        %v4312 = vsel %vm1825, %v4280, %v3916
        %v4313 = vsel %vm1825, %v4281, %v3918
        %v4314 = vsel %vm1825, %v4282, %v3920
        %v4315 = vsel %vm1825, %v4283, %v3922
        %v4316 = vsel %vm1825, %v4284, %v3924
        %v4317 = vsel %vm1825, %v4285, %v3926
        %v4318 = vsel %vm1825, %v4286, %v3928
        %v4319 = vsel %vm1825, %v4287, %v3930
        %v4320 = vsel %vm1825, %v4288, %v3932
        %v4321 = vsel %vm1825, %v4289, %v3934
        %v4322 = vsel %vm1825, %v4290, %v3936
        %v4323 = vsel %vm1825, %v4291, %v3938
        %v4324 = vsel %vm1825, %v4292, %v3940
        %v4325 = vsel %vm1825, %v4293, %v3942
        %v4326 = vsel %vm1825, %v4294, %v3944
        %v4327 = vsel %vm1825, %v4295, %v3946
        %v4328 = vsel %vm1825, %v4296, %v3948
        %v4329 = vsel %vm1825, %v4297, %v3950
        %v4330 = vsel %vm1825, %v4298, %v3952
        %v4331 = vsel %vm1825, %v4299, %v3954
        %v4332 = vsel %vm1825, %v4300, %v3956
        %v4333 = vsel %vm1825, %v4301, %v3958
        %v4334 = vsel %vm1825, %v4302, %v3960
        %v4335 = vsel %vm1825, %v4303, %v3962
        %v4336 = vsel %vm1825, %v4304, %v3964
        %v4337 = vsel %vm1825, %v4305, %v3966
        %v4338 = vsel %vm1825, %v4306, %v3968
        %v4339 = vsel %vm1825, %v4307, %v3970
        %v4340 = vsel %vm1825, %v4308, %v3972
        %v4341 = vsel %vm1858, %v4309, %v4022
        %v4342 = vsel %vm1858, %v4310, %v4024
        %v4343 = vsel %vm1858, %v4311, %v4026
        %v4344 = vsel %vm1858, %v4312, %v4028
        %v4345 = vsel %vm1858, %v4313, %v4030
        %v4346 = vsel %vm1858, %v4314, %v4032
        %v4347 = vsel %vm1858, %v4315, %v4034
        %v4348 = vsel %vm1858, %v4316, %v4036
        %v4349 = vsel %vm1858, %v4317, %v4038
        %v4350 = vsel %vm1858, %v4318, %v4040
        %v4351 = vsel %vm1858, %v4319, %v4042
        %v4352 = vsel %vm1858, %v4320, %v4044
        %v4353 = vsel %vm1858, %v4321, %v4046
        %v4354 = vsel %vm1858, %v4322, %v4048
        %v4355 = vsel %vm1858, %v4323, %v4050
        %v4356 = vsel %vm1858, %v4324, %v4052
        %v4357 = vsel %vm1858, %v4325, %v4054
        %v4358 = vsel %vm1858, %v4326, %v4056
        %v4359 = vsel %vm1858, %v4327, %v4058
        %v4360 = vsel %vm1858, %v4328, %v4060
        %v4361 = vsel %vm1858, %v4329, %v4062
        %v4362 = vsel %vm1858, %v4330, %v4064
        %v4363 = vsel %vm1858, %v4331, %v4066
        %v4364 = vsel %vm1858, %v4332, %v4068
        %v4365 = vsel %vm1858, %v4333, %v4070
        %v4366 = vsel %vm1858, %v4334, %v4072
        %v4367 = vsel %vm1858, %v4335, %v4074
        %v4368 = vsel %vm1858, %v4336, %v4076
        %v4369 = vsel %vm1858, %v4337, %v4078
        %v4370 = vsel %vm1858, %v4338, %v4080
        %v4371 = vsel %vm1858, %v4339, %v4082
        %v4372 = vsel %vm1858, %v4340, %v4084
        %v4373 = vld [vmem:[%s2] sm:$0xff]
        %v4374 = vld [vmem:[%s2 + $0x8] sm:$0xff]
        %v4375 = vld [vmem:[%s2 + $0x10] sm:$0xff]
        %v4376 = vld [vmem:[%s2 + $0x18] sm:$0xff]
        %v4377 = vld [vmem:[%s2 + $0x20] sm:$0xff]
        %v4378 = vld [vmem:[%s2 + $0x28] sm:$0xff]
        %v4379 = vld [vmem:[%s2 + $0x30] sm:$0xff]
        %v4380 = vld [vmem:[%s2 + $0x38] sm:$0xff]
        %v4381 = vld [vmem:[%s2 + $0x40] sm:$0xff]
        %v4383 = vsel %vm1900, %v4341, 0
        %v4386 = vsel %vm1900, %v4342, 0
        %v4389 = vsel %vm1900, %v4343, 0
        %v4392 = vsel %vm1900, %v4344, 0
        %v4395 = vsel %vm1900, %v4345, 0
        %v4398 = vsel %vm1900, %v4346, 0
        %v4401 = vsel %vm1900, %v4347, 0
        %v4404 = vsel %vm1900, %v4348, 0
        %v4407 = vsel %vm1900, %v4349, 0
        %v4410 = vsel %vm1900, %v4350, 0
        %v4413 = vsel %vm1900, %v4351, 0
        %v4416 = vsel %vm1900, %v4352, 0
        %v4419 = vsel %vm1900, %v4353, 0
        %v4422 = vsel %vm1900, %v4354, 0
        %v4425 = vsel %vm1900, %v4355, 0
        %v4428 = vsel %vm1900, %v4356, 0
        %v4431 = vsel %vm1900, %v4357, 0
        %v4434 = vsel %vm1900, %v4358, 0
        %v4437 = vsel %vm1900, %v4359, 0
        %v4440 = vsel %vm1900, %v4360, 0
        %v4443 = vsel %vm1900, %v4361, 0
        %v4446 = vsel %vm1900, %v4362, 0
        %v4449 = vsel %vm1900, %v4363, 0
        %v4452 = vsel %vm1900, %v4364, 0
        %v4455 = vsel %vm1900, %v4365, 0
        %v4458 = vsel %vm1900, %v4366, 0
        %v4461 = vsel %vm1900, %v4367, 0
        %v4464 = vsel %vm1900, %v4368, 0
        %v4467 = vsel %vm1900, %v4369, 0
        %v4470 = vsel %vm1900, %v4370, 0
        %v4473 = vsel %vm1900, %v4371, 0
        %v4476 = vsel %vm1900, %v4372, 0
        %4478 = vmatpush.msra.mxu0 0.0
        %4479 = vmatpush.msra.mxu0 0.0
        %4480 = vmatpush.msra.mxu0 0.0
        %4481 = vmatpush.msra.mxu0 0.0
        %4482 = vmatpush.msra.mxu0 0.0
        %4483 = vmatpush.msra.mxu0 0.0
        %4484 = vmatpush.msra.mxu0 0.0
        %4485 = vmatpush.msra.mxu0 %v4381
        %4486 = vmatpush.msra.mxu0 %v4380
        %4487 = vmatpush.msra.mxu0 %v4379
        %4488 = vmatpush.msra.mxu0 %v4378
        %4489 = vmatpush.msra.mxu0 %v4377
        %4490 = vmatpush.msra.mxu0 %v4376
        %4491 = vmatpush.msra.mxu0 %v4375
        %4492 = vmatpush.msra.mxu0 %v4374
        %4493 = vmatpush.msra.mxu0 %v4373
        %4494 = vmatmul.f32.gmra.mxu0 %v4383
        %v4495 = vpop.f32.mrf.mxu0
        %v4496 = vadd.f32 0.0, %v4495
        %4497 = vmatmul.f32.gmra.mxu0 %v4386
        %v4498 = vpop.f32.mrf.mxu0
        %v4499 = vadd.f32 0.0, %v4498
        %4500 = vmatmul.f32.gmra.mxu0 %v4389
        %v4501 = vpop.f32.mrf.mxu0
        %v4502 = vadd.f32 0.0, %v4501
        %4503 = vmatmul.f32.gmra.mxu0 %v4392
        %v4504 = vpop.f32.mrf.mxu0
        %v4505 = vadd.f32 0.0, %v4504
        %4506 = vmatmul.f32.gmra.mxu0 %v4395
        %v4507 = vpop.f32.mrf.mxu0
        %v4508 = vadd.f32 0.0, %v4507
        %4509 = vmatmul.f32.gmra.mxu0 %v4398
        %v4510 = vpop.f32.mrf.mxu0
        %v4511 = vadd.f32 0.0, %v4510
        %4512 = vmatmul.f32.gmra.mxu0 %v4401
        %v4513 = vpop.f32.mrf.mxu0
        %v4514 = vadd.f32 0.0, %v4513
        %4515 = vmatmul.f32.gmra.mxu0 %v4404
        %v4516 = vpop.f32.mrf.mxu0
        %v4517 = vadd.f32 0.0, %v4516
        %4518 = vmatmul.f32.gmra.mxu0 %v4407
        %v4519 = vpop.f32.mrf.mxu0
        %v4520 = vadd.f32 0.0, %v4519
        %4521 = vmatmul.f32.gmra.mxu0 %v4410
        %v4522 = vpop.f32.mrf.mxu0
        %v4523 = vadd.f32 0.0, %v4522
        %4524 = vmatmul.f32.gmra.mxu0 %v4413
        %v4525 = vpop.f32.mrf.mxu0
        %v4526 = vadd.f32 0.0, %v4525
        %4527 = vmatmul.f32.gmra.mxu0 %v4416
        %v4528 = vpop.f32.mrf.mxu0
        %v4529 = vadd.f32 0.0, %v4528
        %4530 = vmatmul.f32.gmra.mxu0 %v4419
        %v4531 = vpop.f32.mrf.mxu0
        %v4532 = vadd.f32 0.0, %v4531
        %4533 = vmatmul.f32.gmra.mxu0 %v4422
        %v4534 = vpop.f32.mrf.mxu0
        %v4535 = vadd.f32 0.0, %v4534
        %4536 = vmatmul.f32.gmra.mxu0 %v4425
        %v4537 = vpop.f32.mrf.mxu0
        %v4538 = vadd.f32 0.0, %v4537
        %4539 = vmatmul.f32.gmra.mxu0 %v4428
        %v4540 = vpop.f32.mrf.mxu0
        %v4541 = vadd.f32 0.0, %v4540
        %4542 = vmatmul.f32.gmra.mxu0 %v4431
        %v4543 = vpop.f32.mrf.mxu0
        %v4544 = vadd.f32 0.0, %v4543
        %4545 = vmatmul.f32.gmra.mxu0 %v4434
        %v4546 = vpop.f32.mrf.mxu0
        %v4547 = vadd.f32 0.0, %v4546
        %4548 = vmatmul.f32.gmra.mxu0 %v4437
        %v4549 = vpop.f32.mrf.mxu0
        %v4550 = vadd.f32 0.0, %v4549
        %4551 = vmatmul.f32.gmra.mxu0 %v4440
        %v4552 = vpop.f32.mrf.mxu0
        %v4553 = vadd.f32 0.0, %v4552
        %4554 = vmatmul.f32.gmra.mxu0 %v4443
        %v4555 = vpop.f32.mrf.mxu0
        %v4556 = vadd.f32 0.0, %v4555
        %4557 = vmatmul.f32.gmra.mxu0 %v4446
        %v4558 = vpop.f32.mrf.mxu0
        %v4559 = vadd.f32 0.0, %v4558
        %4560 = vmatmul.f32.gmra.mxu0 %v4449
        %v4561 = vpop.f32.mrf.mxu0
        %v4562 = vadd.f32 0.0, %v4561
        %4563 = vmatmul.f32.gmra.mxu0 %v4452
        %v4564 = vpop.f32.mrf.mxu0
        %v4565 = vadd.f32 0.0, %v4564
        %4566 = vmatmul.f32.gmra.mxu0 %v4455
        %v4567 = vpop.f32.mrf.mxu0
        %v4568 = vadd.f32 0.0, %v4567
        %4569 = vmatmul.f32.gmra.mxu0 %v4458
        %v4570 = vpop.f32.mrf.mxu0
        %v4571 = vadd.f32 0.0, %v4570
        %4572 = vmatmul.f32.gmra.mxu0 %v4461
        %v4573 = vpop.f32.mrf.mxu0
        %v4574 = vadd.f32 0.0, %v4573
        %4575 = vmatmul.f32.gmra.mxu0 %v4464
        %v4576 = vpop.f32.mrf.mxu0
        %v4577 = vadd.f32 0.0, %v4576
        %4578 = vmatmul.f32.gmra.mxu0 %v4467
        %v4579 = vpop.f32.mrf.mxu0
        %v4580 = vadd.f32 0.0, %v4579
        %4581 = vmatmul.f32.gmra.mxu0 %v4470
        %v4582 = vpop.f32.mrf.mxu0
        %v4583 = vadd.f32 0.0, %v4582
        %4584 = vmatmul.f32.gmra.mxu0 %v4473
        %v4585 = vpop.f32.mrf.mxu0
        %v4586 = vadd.f32 0.0, %v4585
        %4587 = vmatmul.f32.gmra.mxu0 %v4476
        %v4588 = vpop.f32.mrf.mxu0
        %v4589 = vadd.f32 0.0, %v4588
        %4590 = vdwg.mxu0
        %vm4591 = vcmp.gt.f32.partialorder %v4496, 0.0
        %vm4592 = vcmp.gt.f32.partialorder %v4499, 0.0
        %vm4593 = vcmp.gt.f32.partialorder %v4502, 0.0
        %vm4594 = vcmp.gt.f32.partialorder %v4505, 0.0
        %vm4595 = vcmp.gt.f32.partialorder %v4508, 0.0
        %vm4596 = vcmp.gt.f32.partialorder %v4511, 0.0
        %vm4597 = vcmp.gt.f32.partialorder %v4514, 0.0
        %vm4598 = vcmp.gt.f32.partialorder %v4517, 0.0
        %vm4599 = vcmp.gt.f32.partialorder %v4520, 0.0
        %vm4600 = vcmp.gt.f32.partialorder %v4523, 0.0
        %vm4601 = vcmp.gt.f32.partialorder %v4526, 0.0
        %vm4602 = vcmp.gt.f32.partialorder %v4529, 0.0
        %vm4603 = vcmp.gt.f32.partialorder %v4532, 0.0
        %vm4604 = vcmp.gt.f32.partialorder %v4535, 0.0
        %vm4605 = vcmp.gt.f32.partialorder %v4538, 0.0
        %vm4606 = vcmp.gt.f32.partialorder %v4541, 0.0
        %vm4607 = vcmp.gt.f32.partialorder %v4544, 0.0
        %vm4608 = vcmp.gt.f32.partialorder %v4547, 0.0
        %vm4609 = vcmp.gt.f32.partialorder %v4550, 0.0
        %vm4610 = vcmp.gt.f32.partialorder %v4553, 0.0
        %vm4611 = vcmp.gt.f32.partialorder %v4556, 0.0
        %vm4612 = vcmp.gt.f32.partialorder %v4559, 0.0
        %vm4613 = vcmp.gt.f32.partialorder %v4562, 0.0
        %vm4614 = vcmp.gt.f32.partialorder %v4565, 0.0
        %vm4615 = vcmp.gt.f32.partialorder %v4568, 0.0
        %vm4616 = vcmp.gt.f32.partialorder %v4571, 0.0
        %vm4617 = vcmp.gt.f32.partialorder %v4574, 0.0
        %vm4618 = vcmp.gt.f32.partialorder %v4577, 0.0
        %vm4619 = vcmp.gt.f32.partialorder %v4580, 0.0
        %vm4620 = vcmp.gt.f32.partialorder %v4583, 0.0
        %vm4621 = vcmp.gt.f32.partialorder %v4586, 0.0
        %vm4622 = vcmp.gt.f32.partialorder %v4589, 0.0
        %v4623 = vmul.f32 %v4496, 0.2
        %v4624 = vmul.f32 %v4499, 0.2
        %v4625 = vmul.f32 %v4502, 0.2
        %v4626 = vmul.f32 %v4505, 0.2
        %v4627 = vmul.f32 %v4508, 0.2
        %v4628 = vmul.f32 %v4511, 0.2
        %v4629 = vmul.f32 %v4514, 0.2
        %v4630 = vmul.f32 %v4517, 0.2
        %v4631 = vmul.f32 %v4520, 0.2
        %v4632 = vmul.f32 %v4523, 0.2
        %v4633 = vmul.f32 %v4526, 0.2
        %v4634 = vmul.f32 %v4529, 0.2
        %v4635 = vmul.f32 %v4532, 0.2
        %v4636 = vmul.f32 %v4535, 0.2
        %v4637 = vmul.f32 %v4538, 0.2
        %v4638 = vmul.f32 %v4541, 0.2
        %v4639 = vmul.f32 %v4544, 0.2
        %v4640 = vmul.f32 %v4547, 0.2
        %v4641 = vmul.f32 %v4550, 0.2
        %v4642 = vmul.f32 %v4553, 0.2
        %v4643 = vmul.f32 %v4556, 0.2
        %v4644 = vmul.f32 %v4559, 0.2
        %v4645 = vmul.f32 %v4562, 0.2
        %v4646 = vmul.f32 %v4565, 0.2
        %v4647 = vmul.f32 %v4568, 0.2
        %v4648 = vmul.f32 %v4571, 0.2
        %v4649 = vmul.f32 %v4574, 0.2
        %v4650 = vmul.f32 %v4577, 0.2
        %v4651 = vmul.f32 %v4580, 0.2
        %v4652 = vmul.f32 %v4583, 0.2
        %v4653 = vmul.f32 %v4586, 0.2
        %v4654 = vmul.f32 %v4589, 0.2
        %v4655 = vsel %vm4591, %v4496, %v4623
        %v4656 = vsel %vm4592, %v4499, %v4624
        %v4657 = vsel %vm4593, %v4502, %v4625
        %v4658 = vsel %vm4594, %v4505, %v4626
        %v4659 = vsel %vm4595, %v4508, %v4627
        %v4660 = vsel %vm4596, %v4511, %v4628
        %v4661 = vsel %vm4597, %v4514, %v4629
        %v4662 = vsel %vm4598, %v4517, %v4630
        %v4663 = vsel %vm4599, %v4520, %v4631
        %v4664 = vsel %vm4600, %v4523, %v4632
        %v4665 = vsel %vm4601, %v4526, %v4633
        %v4666 = vsel %vm4602, %v4529, %v4634
        %v4667 = vsel %vm4603, %v4532, %v4635
        %v4668 = vsel %vm4604, %v4535, %v4636
        %v4669 = vsel %vm4605, %v4538, %v4637
        %v4670 = vsel %vm4606, %v4541, %v4638
        %v4671 = vsel %vm4607, %v4544, %v4639
        %v4672 = vsel %vm4608, %v4547, %v4640
        %v4673 = vsel %vm4609, %v4550, %v4641
        %v4674 = vsel %vm4610, %v4553, %v4642
        %v4675 = vsel %vm4611, %v4556, %v4643
        %v4676 = vsel %vm4612, %v4559, %v4644
        %v4677 = vsel %vm4613, %v4562, %v4645
        %v4678 = vsel %vm4614, %v4565, %v4646
        %v4679 = vsel %vm4615, %v4568, %v4647
        %v4680 = vsel %vm4616, %v4571, %v4648
        %v4681 = vsel %vm4617, %v4574, %v4649
        %v4682 = vsel %vm4618, %v4577, %v4650
        %v4683 = vsel %vm4619, %v4580, %v4651
        %v4684 = vsel %vm4620, %v4583, %v4652
        %v4685 = vsel %vm4621, %v4586, %v4653
        %v4686 = vsel %vm4622, %v4589, %v4654
        %v4688 = vsel %vm250, %v4655, 0
        %v4691 = vsel %vm250, %v4656, 0
        %v4694 = vsel %vm250, %v4657, 0
        %v4697 = vsel %vm250, %v4658, 0
        %v4700 = vsel %vm250, %v4659, 0
        %v4703 = vsel %vm250, %v4660, 0
        %v4706 = vsel %vm250, %v4661, 0
        %v4709 = vsel %vm250, %v4662, 0
        %v4712 = vsel %vm250, %v4663, 0
        %v4715 = vsel %vm250, %v4664, 0
        %v4718 = vsel %vm250, %v4665, 0
        %v4721 = vsel %vm250, %v4666, 0
        %v4724 = vsel %vm250, %v4667, 0
        %v4727 = vsel %vm250, %v4668, 0
        %v4730 = vsel %vm250, %v4669, 0
        %v4733 = vsel %vm250, %v4670, 0
        %v4736 = vsel %vm250, %v4671, 0
        %v4739 = vsel %vm250, %v4672, 0
        %v4742 = vsel %vm250, %v4673, 0
        %v4745 = vsel %vm250, %v4674, 0
        %v4748 = vsel %vm250, %v4675, 0
        %v4751 = vsel %vm250, %v4676, 0
        %v4754 = vsel %vm250, %v4677, 0
        %v4757 = vsel %vm250, %v4678, 0
        %v4760 = vsel %vm250, %v4679, 0
        %v4763 = vsel %vm250, %v4680, 0
        %v4766 = vsel %vm250, %v4681, 0
        %v4769 = vsel %vm250, %v4682, 0
        %v4772 = vsel %vm250, %v4683, 0
        %v4775 = vsel %vm250, %v4684, 0
        %v4778 = vsel %vm250, %v4685, 0
        %v4781 = vsel %vm250, %v4686, 0
        %4783 = vmatpush.msra.mxu0 0.0
        %4784 = vmatpush.msra.mxu0 0.0
        %4785 = vmatpush.msra.mxu0 0.0
        %4786 = vmatpush.msra.mxu0 0.0
        %4787 = vmatpush.msra.mxu0 0.0
        %4788 = vmatpush.msra.mxu0 0.0
        %4789 = vmatpush.msra.mxu0 0.0
        %4790 = vmatpush.msra.mxu0 0.0
        %4791 = vmatpush.msra.mxu0 0.0
        %4792 = vmatpush.msra.mxu0 0.0
        %4793 = vmatpush.msra.mxu0 0.0
        %4794 = vmatpush.msra.mxu0 0.0
        %4795 = vmatpush.msra.mxu0 0.0
        %4796 = vmatpush.msra.mxu0 0.0
        %4797 = vmatpush.msra.mxu0 0.0
        %4798 = vmatpush.msra.mxu0 %v323
        %4799 = vmatmul.f32.gmra.mxu0 %v4688
        %v4800 = vpop.f32.mrf.mxu0
        %v4801 = vadd.f32 0.0, %v4800
        %4802 = vmatmul.f32.gmra.mxu0 %v4691
        %v4803 = vpop.f32.mrf.mxu0
        %v4804 = vadd.f32 0.0, %v4803
        %4805 = vmatmul.f32.gmra.mxu0 %v4694
        %v4806 = vpop.f32.mrf.mxu0
        %v4807 = vadd.f32 0.0, %v4806
        %4808 = vmatmul.f32.gmra.mxu0 %v4697
        %v4809 = vpop.f32.mrf.mxu0
        %v4810 = vadd.f32 0.0, %v4809
        %4811 = vmatmul.f32.gmra.mxu0 %v4700
        %v4812 = vpop.f32.mrf.mxu0
        %v4813 = vadd.f32 0.0, %v4812
        %4814 = vmatmul.f32.gmra.mxu0 %v4703
        %v4815 = vpop.f32.mrf.mxu0
        %v4816 = vadd.f32 0.0, %v4815
        %4817 = vmatmul.f32.gmra.mxu0 %v4706
        %v4818 = vpop.f32.mrf.mxu0
        %v4819 = vadd.f32 0.0, %v4818
        %4820 = vmatmul.f32.gmra.mxu0 %v4709
        %v4821 = vpop.f32.mrf.mxu0
        %v4822 = vadd.f32 0.0, %v4821
        %4823 = vmatmul.f32.gmra.mxu0 %v4712
        %v4824 = vpop.f32.mrf.mxu0
        %v4825 = vadd.f32 0.0, %v4824
        %4826 = vmatmul.f32.gmra.mxu0 %v4715
        %v4827 = vpop.f32.mrf.mxu0
        %v4828 = vadd.f32 0.0, %v4827
        %4829 = vmatmul.f32.gmra.mxu0 %v4718
        %v4830 = vpop.f32.mrf.mxu0
        %v4831 = vadd.f32 0.0, %v4830
        %4832 = vmatmul.f32.gmra.mxu0 %v4721
        %v4833 = vpop.f32.mrf.mxu0
        %v4834 = vadd.f32 0.0, %v4833
        %4835 = vmatmul.f32.gmra.mxu0 %v4724
        %v4836 = vpop.f32.mrf.mxu0
        %v4837 = vadd.f32 0.0, %v4836
        %4838 = vmatmul.f32.gmra.mxu0 %v4727
        %v4839 = vpop.f32.mrf.mxu0
        %v4840 = vadd.f32 0.0, %v4839
        %4841 = vmatmul.f32.gmra.mxu0 %v4730
        %v4842 = vpop.f32.mrf.mxu0
        %v4843 = vadd.f32 0.0, %v4842
        %4844 = vmatmul.f32.gmra.mxu0 %v4733
        %v4845 = vpop.f32.mrf.mxu0
        %v4846 = vadd.f32 0.0, %v4845
        %4847 = vmatmul.f32.gmra.mxu0 %v4736
        %v4848 = vpop.f32.mrf.mxu0
        %v4849 = vadd.f32 0.0, %v4848
        %4850 = vmatmul.f32.gmra.mxu0 %v4739
        %v4851 = vpop.f32.mrf.mxu0
        %v4852 = vadd.f32 0.0, %v4851
        %4853 = vmatmul.f32.gmra.mxu0 %v4742
        %v4854 = vpop.f32.mrf.mxu0
        %v4855 = vadd.f32 0.0, %v4854
        %4856 = vmatmul.f32.gmra.mxu0 %v4745
        %v4857 = vpop.f32.mrf.mxu0
        %v4858 = vadd.f32 0.0, %v4857
        %4859 = vmatmul.f32.gmra.mxu0 %v4748
        %v4860 = vpop.f32.mrf.mxu0
        %v4861 = vadd.f32 0.0, %v4860
        %4862 = vmatmul.f32.gmra.mxu0 %v4751
        %v4863 = vpop.f32.mrf.mxu0
        %v4864 = vadd.f32 0.0, %v4863
        %4865 = vmatmul.f32.gmra.mxu0 %v4754
        %v4866 = vpop.f32.mrf.mxu0
        %v4867 = vadd.f32 0.0, %v4866
        %4868 = vmatmul.f32.gmra.mxu0 %v4757
        %v4869 = vpop.f32.mrf.mxu0
        %v4870 = vadd.f32 0.0, %v4869
        %4871 = vmatmul.f32.gmra.mxu0 %v4760
        %v4872 = vpop.f32.mrf.mxu0
        %v4873 = vadd.f32 0.0, %v4872
        %4874 = vmatmul.f32.gmra.mxu0 %v4763
        %v4875 = vpop.f32.mrf.mxu0
        %v4876 = vadd.f32 0.0, %v4875
        %4877 = vmatmul.f32.gmra.mxu0 %v4766
        %v4878 = vpop.f32.mrf.mxu0
        %v4879 = vadd.f32 0.0, %v4878
        %4880 = vmatmul.f32.gmra.mxu0 %v4769
        %v4881 = vpop.f32.mrf.mxu0
        %v4882 = vadd.f32 0.0, %v4881
        %4883 = vmatmul.f32.gmra.mxu0 %v4772
        %v4884 = vpop.f32.mrf.mxu0
        %v4885 = vadd.f32 0.0, %v4884
        %4886 = vmatmul.f32.gmra.mxu0 %v4775
        %v4887 = vpop.f32.mrf.mxu0
        %v4888 = vadd.f32 0.0, %v4887
        %4889 = vmatmul.f32.gmra.mxu0 %v4778
        %v4890 = vpop.f32.mrf.mxu0
        %v4891 = vadd.f32 0.0, %v4890
        %4892 = vmatmul.f32.gmra.mxu0 %v4781
        %v4893 = vpop.f32.mrf.mxu0
        %v4894 = vadd.f32 0.0, %v4893
        %4895 = vdwg.mxu0
        %v4896 = vsel %vm250, %v4801, 0.0
        %v4897 = vsel %vm250, %v4804, 0.0
        %v4898 = vadd.f32 %v4896, %v4897
        %v4899 = vsel %vm250, %v4807, 0.0
        %v4900 = vadd.f32 %v4898, %v4899
        %v4901 = vsel %vm250, %v4810, 0.0
        %v4902 = vadd.f32 %v4900, %v4901
        %v4903 = vsel %vm250, %v4813, 0.0
        %v4904 = vadd.f32 %v4902, %v4903
        %v4905 = vsel %vm250, %v4816, 0.0
        %v4906 = vadd.f32 %v4904, %v4905
        %v4907 = vsel %vm250, %v4819, 0.0
        %v4908 = vadd.f32 %v4906, %v4907
        %v4909 = vsel %vm250, %v4822, 0.0
        %v4910 = vadd.f32 %v4908, %v4909
        %v4911 = vsel %vm250, %v4825, 0.0
        %v4912 = vadd.f32 %v4910, %v4911
        %v4913 = vsel %vm250, %v4828, 0.0
        %v4914 = vadd.f32 %v4912, %v4913
        %v4915 = vsel %vm250, %v4831, 0.0
        %v4916 = vadd.f32 %v4914, %v4915
        %v4917 = vsel %vm250, %v4834, 0.0
        %v4918 = vadd.f32 %v4916, %v4917
        %v4919 = vsel %vm250, %v4837, 0.0
        %v4920 = vadd.f32 %v4918, %v4919
        %v4921 = vsel %vm250, %v4840, 0.0
        %v4922 = vadd.f32 %v4920, %v4921
        %v4923 = vsel %vm250, %v4843, 0.0
        %v4924 = vadd.f32 %v4922, %v4923
        %v4925 = vsel %vm250, %v4846, 0.0
        %v4926 = vadd.f32 %v4924, %v4925
        %v4927 = vsel %vm250, %v4849, 0.0
        %v4928 = vadd.f32 %v4926, %v4927
        %v4929 = vsel %vm250, %v4852, 0.0
        %v4930 = vadd.f32 %v4928, %v4929
        %v4931 = vsel %vm250, %v4855, 0.0
        %v4932 = vadd.f32 %v4930, %v4931
        %v4933 = vsel %vm250, %v4858, 0.0
        %v4934 = vadd.f32 %v4932, %v4933
        %v4935 = vsel %vm250, %v4861, 0.0
        %v4936 = vadd.f32 %v4934, %v4935
        %v4937 = vsel %vm250, %v4864, 0.0
        %v4938 = vadd.f32 %v4936, %v4937
        %v4939 = vsel %vm250, %v4867, 0.0
        %v4940 = vadd.f32 %v4938, %v4939
        %v4941 = vsel %vm250, %v4870, 0.0
        %v4942 = vadd.f32 %v4940, %v4941
        %v4943 = vsel %vm250, %v4873, 0.0
        %v4944 = vadd.f32 %v4942, %v4943
        %v4945 = vsel %vm250, %v4876, 0.0
        %v4946 = vadd.f32 %v4944, %v4945
        %v4947 = vsel %vm250, %v4879, 0.0
        %v4948 = vadd.f32 %v4946, %v4947
        %v4949 = vsel %vm250, %v4882, 0.0
        %v4950 = vadd.f32 %v4948, %v4949
        %v4951 = vsel %vm250, %v4885, 0.0
        %v4952 = vadd.f32 %v4950, %v4951
        %v4953 = vsel %vm250, %v4888, 0.0
        %v4954 = vadd.f32 %v4952, %v4953
        %v4955 = vsel %vm250, %v4891, 0.0
        %v4956 = vadd.f32 %v4954, %v4955
        %v4957 = vsel %vm250, %v4894, 0.0
        %v4958 = vadd.f32 %v4956, %v4957
        %v4959 = vrot.slane %v4958, 4
        %v4960 = vadd.f32 %v4958, %v4959
        %v4961 = vrot.slane %v4960, 2
        %v4962 = vadd.f32 %v4960, %v4961
        %v4963 = vrot.slane %v4962, 1
        %v4964 = vadd.f32 %v4962, %v4963
        %v4965 = vmul.f32 %v4964, %v2490
        %v4966 = vmul.f32 %v4655, %v4655
        %v4967 = vmul.f32 %v4656, %v4656
        %v4968 = vmul.f32 %v4657, %v4657
        %v4969 = vmul.f32 %v4658, %v4658
        %v4970 = vmul.f32 %v4659, %v4659
        %v4971 = vmul.f32 %v4660, %v4660
        %v4972 = vmul.f32 %v4661, %v4661
        %v4973 = vmul.f32 %v4662, %v4662
        %v4974 = vmul.f32 %v4663, %v4663
        %v4975 = vmul.f32 %v4664, %v4664
        %v4976 = vmul.f32 %v4665, %v4665
        %v4977 = vmul.f32 %v4666, %v4666
        %v4978 = vmul.f32 %v4667, %v4667
        %v4979 = vmul.f32 %v4668, %v4668
        %v4980 = vmul.f32 %v4669, %v4669
        %v4981 = vmul.f32 %v4670, %v4670
        %v4982 = vmul.f32 %v4671, %v4671
        %v4983 = vmul.f32 %v4672, %v4672
        %v4984 = vmul.f32 %v4673, %v4673
        %v4985 = vmul.f32 %v4674, %v4674
        %v4986 = vmul.f32 %v4675, %v4675
        %v4987 = vmul.f32 %v4676, %v4676
        %v4988 = vmul.f32 %v4677, %v4677
        %v4989 = vmul.f32 %v4678, %v4678
        %v4990 = vmul.f32 %v4679, %v4679
        %v4991 = vmul.f32 %v4680, %v4680
        %v4992 = vmul.f32 %v4681, %v4681
        %v4993 = vmul.f32 %v4682, %v4682
        %v4994 = vmul.f32 %v4683, %v4683
        %v4995 = vmul.f32 %v4684, %v4684
        %v4996 = vmul.f32 %v4685, %v4685
        %v4997 = vmul.f32 %v4686, %v4686
        %v4999 = vsel %vm250, %v4966, 0
        %v5002 = vsel %vm250, %v4967, 0
        %v5005 = vsel %vm250, %v4968, 0
        %v5008 = vsel %vm250, %v4969, 0
        %v5011 = vsel %vm250, %v4970, 0
        %v5014 = vsel %vm250, %v4971, 0
        %v5017 = vsel %vm250, %v4972, 0
        %v5020 = vsel %vm250, %v4973, 0
        %v5023 = vsel %vm250, %v4974, 0
        %v5026 = vsel %vm250, %v4975, 0
        %v5029 = vsel %vm250, %v4976, 0
        %v5032 = vsel %vm250, %v4977, 0
        %v5035 = vsel %vm250, %v4978, 0
        %v5038 = vsel %vm250, %v4979, 0
        %v5041 = vsel %vm250, %v4980, 0
        %v5044 = vsel %vm250, %v4981, 0
        %v5047 = vsel %vm250, %v4982, 0
        %v5050 = vsel %vm250, %v4983, 0
        %v5053 = vsel %vm250, %v4984, 0
        %v5056 = vsel %vm250, %v4985, 0
        %v5059 = vsel %vm250, %v4986, 0
        %v5062 = vsel %vm250, %v4987, 0
        %v5065 = vsel %vm250, %v4988, 0
        %v5068 = vsel %vm250, %v4989, 0
        %v5071 = vsel %vm250, %v4990, 0
        %v5074 = vsel %vm250, %v4991, 0
        %v5077 = vsel %vm250, %v4992, 0
        %v5080 = vsel %vm250, %v4993, 0
        %v5083 = vsel %vm250, %v4994, 0
        %v5086 = vsel %vm250, %v4995, 0
        %v5089 = vsel %vm250, %v4996, 0
        %v5092 = vsel %vm250, %v4997, 0
        %5094 = vmatpush.msra.mxu0 0.0
        %5095 = vmatpush.msra.mxu0 0.0
        %5096 = vmatpush.msra.mxu0 0.0
        %5097 = vmatpush.msra.mxu0 0.0
        %5098 = vmatpush.msra.mxu0 0.0
        %5099 = vmatpush.msra.mxu0 0.0
        %5100 = vmatpush.msra.mxu0 0.0
        %5101 = vmatpush.msra.mxu0 0.0
        %5102 = vmatpush.msra.mxu0 0.0
        %5103 = vmatpush.msra.mxu0 0.0
        %5104 = vmatpush.msra.mxu0 0.0
        %5105 = vmatpush.msra.mxu0 0.0
        %5106 = vmatpush.msra.mxu0 0.0
        %5107 = vmatpush.msra.mxu0 0.0
        %5108 = vmatpush.msra.mxu0 0.0
        %5109 = vmatpush.msra.mxu0 %v323
        %5110 = vmatmul.f32.gmra.mxu0 %v4999
        %v5111 = vpop.f32.mrf.mxu0
        %v5112 = vadd.f32 0.0, %v5111
        %5113 = vmatmul.f32.gmra.mxu0 %v5002
        %v5114 = vpop.f32.mrf.mxu0
        %v5115 = vadd.f32 0.0, %v5114
        %5116 = vmatmul.f32.gmra.mxu0 %v5005
        %v5117 = vpop.f32.mrf.mxu0
        %v5118 = vadd.f32 0.0, %v5117
        %5119 = vmatmul.f32.gmra.mxu0 %v5008
        %v5120 = vpop.f32.mrf.mxu0
        %v5121 = vadd.f32 0.0, %v5120
        %5122 = vmatmul.f32.gmra.mxu0 %v5011
        %v5123 = vpop.f32.mrf.mxu0
        %v5124 = vadd.f32 0.0, %v5123
        %5125 = vmatmul.f32.gmra.mxu0 %v5014
        %v5126 = vpop.f32.mrf.mxu0
        %v5127 = vadd.f32 0.0, %v5126
        %5128 = vmatmul.f32.gmra.mxu0 %v5017
        %v5129 = vpop.f32.mrf.mxu0
        %v5130 = vadd.f32 0.0, %v5129
        %5131 = vmatmul.f32.gmra.mxu0 %v5020
        %v5132 = vpop.f32.mrf.mxu0
        %v5133 = vadd.f32 0.0, %v5132
        %5134 = vmatmul.f32.gmra.mxu0 %v5023
        %v5135 = vpop.f32.mrf.mxu0
        %v5136 = vadd.f32 0.0, %v5135
        %5137 = vmatmul.f32.gmra.mxu0 %v5026
        %v5138 = vpop.f32.mrf.mxu0
        %v5139 = vadd.f32 0.0, %v5138
        %5140 = vmatmul.f32.gmra.mxu0 %v5029
        %v5141 = vpop.f32.mrf.mxu0
        %v5142 = vadd.f32 0.0, %v5141
        %5143 = vmatmul.f32.gmra.mxu0 %v5032
        %v5144 = vpop.f32.mrf.mxu0
        %v5145 = vadd.f32 0.0, %v5144
        %5146 = vmatmul.f32.gmra.mxu0 %v5035
        %v5147 = vpop.f32.mrf.mxu0
        %v5148 = vadd.f32 0.0, %v5147
        %5149 = vmatmul.f32.gmra.mxu0 %v5038
        %v5150 = vpop.f32.mrf.mxu0
        %v5151 = vadd.f32 0.0, %v5150
        %5152 = vmatmul.f32.gmra.mxu0 %v5041
        %v5153 = vpop.f32.mrf.mxu0
        %v5154 = vadd.f32 0.0, %v5153
        %5155 = vmatmul.f32.gmra.mxu0 %v5044
        %v5156 = vpop.f32.mrf.mxu0
        %v5157 = vadd.f32 0.0, %v5156
        %5158 = vmatmul.f32.gmra.mxu0 %v5047
        %v5159 = vpop.f32.mrf.mxu0
        %v5160 = vadd.f32 0.0, %v5159
        %5161 = vmatmul.f32.gmra.mxu0 %v5050
        %v5162 = vpop.f32.mrf.mxu0
        %v5163 = vadd.f32 0.0, %v5162
        %5164 = vmatmul.f32.gmra.mxu0 %v5053
        %v5165 = vpop.f32.mrf.mxu0
        %v5166 = vadd.f32 0.0, %v5165
        %5167 = vmatmul.f32.gmra.mxu0 %v5056
        %v5168 = vpop.f32.mrf.mxu0
        %v5169 = vadd.f32 0.0, %v5168
        %5170 = vmatmul.f32.gmra.mxu0 %v5059
        %v5171 = vpop.f32.mrf.mxu0
        %v5172 = vadd.f32 0.0, %v5171
        %5173 = vmatmul.f32.gmra.mxu0 %v5062
        %v5174 = vpop.f32.mrf.mxu0
        %v5175 = vadd.f32 0.0, %v5174
        %5176 = vmatmul.f32.gmra.mxu0 %v5065
        %v5177 = vpop.f32.mrf.mxu0
        %v5178 = vadd.f32 0.0, %v5177
        %5179 = vmatmul.f32.gmra.mxu0 %v5068
        %v5180 = vpop.f32.mrf.mxu0
        %v5181 = vadd.f32 0.0, %v5180
        %5182 = vmatmul.f32.gmra.mxu0 %v5071
        %v5183 = vpop.f32.mrf.mxu0
        %v5184 = vadd.f32 0.0, %v5183
        %5185 = vmatmul.f32.gmra.mxu0 %v5074
        %v5186 = vpop.f32.mrf.mxu0
        %v5187 = vadd.f32 0.0, %v5186
        %5188 = vmatmul.f32.gmra.mxu0 %v5077
        %v5189 = vpop.f32.mrf.mxu0
        %v5190 = vadd.f32 0.0, %v5189
        %5191 = vmatmul.f32.gmra.mxu0 %v5080
        %v5192 = vpop.f32.mrf.mxu0
        %v5193 = vadd.f32 0.0, %v5192
        %5194 = vmatmul.f32.gmra.mxu0 %v5083
        %v5195 = vpop.f32.mrf.mxu0
        %v5196 = vadd.f32 0.0, %v5195
        %5197 = vmatmul.f32.gmra.mxu0 %v5086
        %v5198 = vpop.f32.mrf.mxu0
        %v5199 = vadd.f32 0.0, %v5198
        %5200 = vmatmul.f32.gmra.mxu0 %v5089
        %v5201 = vpop.f32.mrf.mxu0
        %v5202 = vadd.f32 0.0, %v5201
        %5203 = vmatmul.f32.gmra.mxu0 %v5092
        %v5204 = vpop.f32.mrf.mxu0
        %v5205 = vadd.f32 0.0, %v5204
        %5206 = vdwg.mxu0
        %v5207 = vsel %vm250, %v5112, 0.0
        %v5208 = vsel %vm250, %v5115, 0.0
        %v5209 = vadd.f32 %v5207, %v5208
        %v5210 = vsel %vm250, %v5118, 0.0
        %v5211 = vadd.f32 %v5209, %v5210
        %v5212 = vsel %vm250, %v5121, 0.0
        %v5213 = vadd.f32 %v5211, %v5212
        %v5214 = vsel %vm250, %v5124, 0.0
        %v5215 = vadd.f32 %v5213, %v5214
        %v5216 = vsel %vm250, %v5127, 0.0
        %v5217 = vadd.f32 %v5215, %v5216
        %v5218 = vsel %vm250, %v5130, 0.0
        %v5219 = vadd.f32 %v5217, %v5218
        %v5220 = vsel %vm250, %v5133, 0.0
        %v5221 = vadd.f32 %v5219, %v5220
        %v5222 = vsel %vm250, %v5136, 0.0
        %v5223 = vadd.f32 %v5221, %v5222
        %v5224 = vsel %vm250, %v5139, 0.0
        %v5225 = vadd.f32 %v5223, %v5224
        %v5226 = vsel %vm250, %v5142, 0.0
        %v5227 = vadd.f32 %v5225, %v5226
        %v5228 = vsel %vm250, %v5145, 0.0
        %v5229 = vadd.f32 %v5227, %v5228
        %v5230 = vsel %vm250, %v5148, 0.0
        %v5231 = vadd.f32 %v5229, %v5230
        %v5232 = vsel %vm250, %v5151, 0.0
        %v5233 = vadd.f32 %v5231, %v5232
        %v5234 = vsel %vm250, %v5154, 0.0
        %v5235 = vadd.f32 %v5233, %v5234
        %v5236 = vsel %vm250, %v5157, 0.0
        %v5237 = vadd.f32 %v5235, %v5236
        %v5238 = vsel %vm250, %v5160, 0.0
        %v5239 = vadd.f32 %v5237, %v5238
        %v5240 = vsel %vm250, %v5163, 0.0
        %v5241 = vadd.f32 %v5239, %v5240
        %v5242 = vsel %vm250, %v5166, 0.0
        %v5243 = vadd.f32 %v5241, %v5242
        %v5244 = vsel %vm250, %v5169, 0.0
        %v5245 = vadd.f32 %v5243, %v5244
        %v5246 = vsel %vm250, %v5172, 0.0
        %v5247 = vadd.f32 %v5245, %v5246
        %v5248 = vsel %vm250, %v5175, 0.0
        %v5249 = vadd.f32 %v5247, %v5248
        %v5250 = vsel %vm250, %v5178, 0.0
        %v5251 = vadd.f32 %v5249, %v5250
        %v5252 = vsel %vm250, %v5181, 0.0
        %v5253 = vadd.f32 %v5251, %v5252
        %v5254 = vsel %vm250, %v5184, 0.0
        %v5255 = vadd.f32 %v5253, %v5254
        %v5256 = vsel %vm250, %v5187, 0.0
        %v5257 = vadd.f32 %v5255, %v5256
        %v5258 = vsel %vm250, %v5190, 0.0
        %v5259 = vadd.f32 %v5257, %v5258
        %v5260 = vsel %vm250, %v5193, 0.0
        %v5261 = vadd.f32 %v5259, %v5260
        %v5262 = vsel %vm250, %v5196, 0.0
        %v5263 = vadd.f32 %v5261, %v5262
        %v5264 = vsel %vm250, %v5199, 0.0
        %v5265 = vadd.f32 %v5263, %v5264
        %v5266 = vsel %vm250, %v5202, 0.0
        %v5267 = vadd.f32 %v5265, %v5266
        %v5268 = vsel %vm250, %v5205, 0.0
        %v5269 = vadd.f32 %v5267, %v5268
        %v5270 = vrot.slane %v5269, 4
        %v5271 = vadd.f32 %v5269, %v5270
        %v5272 = vrot.slane %v5271, 2
        %v5273 = vadd.f32 %v5271, %v5272
        %v5274 = vrot.slane %v5273, 1
        %v5275 = vadd.f32 %v5273, %v5274
        %v5276 = vmul.f32 %v5275, %v2490
        %v5277 = vmul.f32 %v4965, %v4965
        %v5278 = vsub.f32 %v5276, %v5277
        %v5279 = vadd.f32 %v5278, 1e-05
        %v5280 = vrsqrt.pop %v5279
        %v5281 = vmul.f32 %v5280, %v5279
        %v5282 = vmul.f32 %v5281, %v5280
        %v5283 = vmul.f32 0.5, %v5282
        %v5284 = vsub.f32 1.5, %v5283
        %v5285 = vmul.f32 %v5280, %v5284
        %vm5286 = vweird.f32 %v5279
        %vm5287 = vweird.f32 %v5280
        %vm5288 = vmor %vm5286, %vm5287
        %v5289 = vsel %vm5288, %v5280, %v5285
        %v5290 = vmul.f32 %v5289, %v326
        %v5291 = vmul.f32 %v4965, %v5290
        %v5292 = vsub.f32 %v327, %v5291
        %v5293 = vperm.slane %v5290, 0
        %v5294 = vmul.f32 %v4655, %v5293
        %v5295 = vmul.f32 %v4656, %v5293
        %v5296 = vmul.f32 %v4657, %v5293
        %v5297 = vmul.f32 %v4658, %v5293
        %v5298 = vmul.f32 %v4659, %v5293
        %v5299 = vmul.f32 %v4660, %v5293
        %v5300 = vmul.f32 %v4661, %v5293
        %v5301 = vmul.f32 %v4662, %v5293
        %v5302 = vmul.f32 %v4663, %v5293
        %v5303 = vmul.f32 %v4664, %v5293
        %v5304 = vmul.f32 %v4665, %v5293
        %v5305 = vmul.f32 %v4666, %v5293
        %v5306 = vmul.f32 %v4667, %v5293
        %v5307 = vmul.f32 %v4668, %v5293
        %v5308 = vmul.f32 %v4669, %v5293
        %v5309 = vmul.f32 %v4670, %v5293
        %v5310 = vmul.f32 %v4671, %v5293
        %v5311 = vmul.f32 %v4672, %v5293
        %v5312 = vmul.f32 %v4673, %v5293
        %v5313 = vmul.f32 %v4674, %v5293
        %v5314 = vmul.f32 %v4675, %v5293
        %v5315 = vmul.f32 %v4676, %v5293
        %v5316 = vmul.f32 %v4677, %v5293
        %v5317 = vmul.f32 %v4678, %v5293
        %v5318 = vmul.f32 %v4679, %v5293
        %v5319 = vmul.f32 %v4680, %v5293
        %v5320 = vmul.f32 %v4681, %v5293
        %v5321 = vmul.f32 %v4682, %v5293
        %v5322 = vmul.f32 %v4683, %v5293
        %v5323 = vmul.f32 %v4684, %v5293
        %v5324 = vmul.f32 %v4685, %v5293
        %v5325 = vmul.f32 %v4686, %v5293
        %v5326 = vperm.slane %v5292, 0
        %v5327 = vadd.f32 %v5294, %v5326
        %v5328 = vadd.f32 %v5295, %v5326
        %v5329 = vadd.f32 %v5296, %v5326
        %v5330 = vadd.f32 %v5297, %v5326
        %v5331 = vadd.f32 %v5298, %v5326
        %v5332 = vadd.f32 %v5299, %v5326
        %v5333 = vadd.f32 %v5300, %v5326
        %v5334 = vadd.f32 %v5301, %v5326
        %v5335 = vadd.f32 %v5302, %v5326
        %v5336 = vadd.f32 %v5303, %v5326
        %v5337 = vadd.f32 %v5304, %v5326
        %v5338 = vadd.f32 %v5305, %v5326
        %v5339 = vadd.f32 %v5306, %v5326
        %v5340 = vadd.f32 %v5307, %v5326
        %v5341 = vadd.f32 %v5308, %v5326
        %v5342 = vadd.f32 %v5309, %v5326
        %v5343 = vadd.f32 %v5310, %v5326
        %v5344 = vadd.f32 %v5311, %v5326
        %v5345 = vadd.f32 %v5312, %v5326
        %v5346 = vadd.f32 %v5313, %v5326
        %v5347 = vadd.f32 %v5314, %v5326
        %v5348 = vadd.f32 %v5315, %v5326
        %v5349 = vadd.f32 %v5316, %v5326
        %v5350 = vadd.f32 %v5317, %v5326
        %v5351 = vadd.f32 %v5318, %v5326
        %v5352 = vadd.f32 %v5319, %v5326
        %v5353 = vadd.f32 %v5320, %v5326
        %v5354 = vadd.f32 %v5321, %v5326
        %v5355 = vadd.f32 %v5322, %v5326
        %v5356 = vadd.f32 %v5323, %v5326
        %v5357 = vadd.f32 %v5324, %v5326
        %v5358 = vadd.f32 %v5325, %v5326
        %5359 = vst.msk [vmem:[%s394 + $0x4] sm:$0xff] %vm250, %v5327
        %5360 = vst.msk [vmem:[%s394 + $0xc] sm:$0xff] %vm250, %v5328
        %5361 = vst.msk [vmem:[%s394 + $0x1c] sm:$0xff] %vm250, %v5329
        %5362 = vst.msk [vmem:[%s394 + $0x24] sm:$0xff] %vm250, %v5330
        %5363 = vst.msk [vmem:[%s394 + $0x34] sm:$0xff] %vm250, %v5331
        %5364 = vst.msk [vmem:[%s394 + $0x3c] sm:$0xff] %vm250, %v5332
        %5365 = vst.msk [vmem:[%s394 + $0x4c] sm:$0xff] %vm250, %v5333
        %5366 = vst.msk [vmem:[%s394 + $0x54] sm:$0xff] %vm250, %v5334
        %5367 = vst.msk [vmem:[%s394 + $0x64] sm:$0xff] %vm250, %v5335
        %5368 = vst.msk [vmem:[%s394 + $0x6c] sm:$0xff] %vm250, %v5336
        %5369 = vst.msk [vmem:[%s394 + $0x7c] sm:$0xff] %vm250, %v5337
        %5370 = vst.msk [vmem:[%s394 + $0x84] sm:$0xff] %vm250, %v5338
        %5371 = vst.msk [vmem:[%s394 + $0x94] sm:$0xff] %vm250, %v5339
        %5372 = vst.msk [vmem:[%s394 + $0x9c] sm:$0xff] %vm250, %v5340
        %5373 = vst.msk [vmem:[%s394 + $0xac] sm:$0xff] %vm250, %v5341
        %5374 = vst.msk [vmem:[%s394 + $0xb4] sm:$0xff] %vm250, %v5342
        %5375 = vst.msk [vmem:[%s394 + $0xc4] sm:$0xff] %vm250, %v5343
        %5376 = vst.msk [vmem:[%s394 + $0xcc] sm:$0xff] %vm250, %v5344
        %5377 = vst.msk [vmem:[%s394 + $0xdc] sm:$0xff] %vm250, %v5345
        %5378 = vst.msk [vmem:[%s394 + $0xe4] sm:$0xff] %vm250, %v5346
        %5379 = vst.msk [vmem:[%s394 + $0xf4] sm:$0xff] %vm250, %v5347
        %5380 = vst.msk [vmem:[%s394 + $0xfc] sm:$0xff] %vm250, %v5348
        %5381 = vst.msk [vmem:[%s394 + $0x10c] sm:$0xff] %vm250, %v5349
        %5382 = vst.msk [vmem:[%s394 + $0x114] sm:$0xff] %vm250, %v5350
        %5383 = vst.msk [vmem:[%s394 + $0x124] sm:$0xff] %vm250, %v5351
        %5384 = vst.msk [vmem:[%s394 + $0x12c] sm:$0xff] %vm250, %v5352
        %5385 = vst.msk [vmem:[%s394 + $0x13c] sm:$0xff] %vm250, %v5353
        %5386 = vst.msk [vmem:[%s394 + $0x144] sm:$0xff] %vm250, %v5354
        %5387 = vst.msk [vmem:[%s394 + $0x154] sm:$0xff] %vm250, %v5355
        %5388 = vst.msk [vmem:[%s394 + $0x15c] sm:$0xff] %vm250, %v5356
        %5389 = vst.msk [vmem:[%s394 + $0x16c] sm:$0xff] %vm250, %v5357
        %5390 = vst.msk [vmem:[%s394 + $0x174] sm:$0xff] %vm250, %v5358
        %v5391 = vld [vmem:[#allocation2] sm:$0xff]
        %v5392 = vld [vmem:[#allocation2 + $0x8] sm:$0xff]
        %v5393 = vld [vmem:[#allocation2 + $0x18] sm:$0xff]
        %v5394 = vld [vmem:[#allocation2 + $0x20] sm:$0xff]
        %v5395 = vld [vmem:[#allocation2 + $0x30] sm:$0xff]
        %v5396 = vld [vmem:[#allocation2 + $0x38] sm:$0xff]
        %v5397 = vld [vmem:[#allocation2 + $0x48] sm:$0xff]
        %v5398 = vld [vmem:[#allocation2 + $0x50] sm:$0xff]
        %v5399 = vld [vmem:[#allocation2 + $0x60] sm:$0xff]
        %v5400 = vld [vmem:[#allocation2 + $0x68] sm:$0xff]
        %v5401 = vld [vmem:[#allocation2 + $0x78] sm:$0xff]
        %v5402 = vld [vmem:[#allocation2 + $0x80] sm:$0xff]
        %v5403 = vld [vmem:[#allocation2 + $0x90] sm:$0xff]
        %v5404 = vld [vmem:[#allocation2 + $0x98] sm:$0xff]
        %v5405 = vld [vmem:[#allocation2 + $0xa8] sm:$0xff]
        %v5406 = vld [vmem:[#allocation2 + $0xb0] sm:$0xff]
        %v5407 = vld [vmem:[#allocation2 + $0xc0] sm:$0xff]
        %v5408 = vld [vmem:[#allocation2 + $0xc8] sm:$0xff]
        %v5409 = vld [vmem:[#allocation2 + $0xd8] sm:$0xff]
        %v5410 = vld [vmem:[#allocation2 + $0xe0] sm:$0xff]
        %v5411 = vld [vmem:[#allocation2 + $0xf0] sm:$0xff]
        %v5412 = vld [vmem:[#allocation2 + $0xf8] sm:$0xff]
        %v5413 = vld [vmem:[#allocation2 + $0x108] sm:$0xff]
        %v5414 = vld [vmem:[#allocation2 + $0x110] sm:$0xff]
        %v5415 = vld [vmem:[#allocation2 + $0x120] sm:$0xff]
        %v5416 = vld [vmem:[#allocation2 + $0x128] sm:$0xff]
        %v5417 = vld [vmem:[#allocation2 + $0x138] sm:$0xff]
        %v5418 = vld [vmem:[#allocation2 + $0x140] sm:$0xff]
        %v5419 = vld [vmem:[#allocation2 + $0x150] sm:$0xff]
        %v5420 = vld [vmem:[#allocation2 + $0x158] sm:$0xff]
        %v5421 = vld [vmem:[#allocation2 + $0x168] sm:$0xff]
        %v5422 = vld [vmem:[#allocation2 + $0x170] sm:$0xff]
        %v5423 = vld [vmem:[#allocation2 + $0x4] sm:$0xff]
        %v5424 = vld [vmem:[#allocation2 + $0xc] sm:$0xff]
        %v5425 = vld [vmem:[#allocation2 + $0x1c] sm:$0xff]
        %v5426 = vld [vmem:[#allocation2 + $0x24] sm:$0xff]
        %v5427 = vld [vmem:[#allocation2 + $0x34] sm:$0xff]
        %v5428 = vld [vmem:[#allocation2 + $0x3c] sm:$0xff]
        %v5429 = vld [vmem:[#allocation2 + $0x4c] sm:$0xff]
        %v5430 = vld [vmem:[#allocation2 + $0x54] sm:$0xff]
        %v5431 = vld [vmem:[#allocation2 + $0x64] sm:$0xff]
        %v5432 = vld [vmem:[#allocation2 + $0x6c] sm:$0xff]
        %v5433 = vld [vmem:[#allocation2 + $0x7c] sm:$0xff]
        %v5434 = vld [vmem:[#allocation2 + $0x84] sm:$0xff]
        %v5435 = vld [vmem:[#allocation2 + $0x94] sm:$0xff]
        %v5436 = vld [vmem:[#allocation2 + $0x9c] sm:$0xff]
        %v5437 = vld [vmem:[#allocation2 + $0xac] sm:$0xff]
        %v5438 = vld [vmem:[#allocation2 + $0xb4] sm:$0xff]
        %v5439 = vld [vmem:[#allocation2 + $0xc4] sm:$0xff]
        %v5440 = vld [vmem:[#allocation2 + $0xcc] sm:$0xff]
        %v5441 = vld [vmem:[#allocation2 + $0xdc] sm:$0xff]
        %v5442 = vld [vmem:[#allocation2 + $0xe4] sm:$0xff]
        %v5443 = vld [vmem:[#allocation2 + $0xf4] sm:$0xff]
        %v5444 = vld [vmem:[#allocation2 + $0xfc] sm:$0xff]
        %v5445 = vld [vmem:[#allocation2 + $0x10c] sm:$0xff]
        %v5446 = vld [vmem:[#allocation2 + $0x114] sm:$0xff]
        %v5447 = vld [vmem:[#allocation2 + $0x124] sm:$0xff]
        %v5448 = vld [vmem:[#allocation2 + $0x12c] sm:$0xff]
        %v5449 = vld [vmem:[#allocation2 + $0x13c] sm:$0xff]
        %v5450 = vld [vmem:[#allocation2 + $0x144] sm:$0xff]
        %v5451 = vld [vmem:[#allocation2 + $0x154] sm:$0xff]
        %v5452 = vld [vmem:[#allocation2 + $0x15c] sm:$0xff]
        %v5453 = vld [vmem:[#allocation2 + $0x16c] sm:$0xff]
        %v5454 = vld [vmem:[#allocation2 + $0x174] sm:$0xff]
        %v5455 = vld [vmem:[#allocation2 + $0x10] sm:$0xff]
        %v5456 = vld [vmem:[#allocation2 + $0x28] sm:$0xff]
        %v5457 = vld [vmem:[#allocation2 + $0x40] sm:$0xff]
        %v5458 = vld [vmem:[#allocation2 + $0x58] sm:$0xff]
        %v5459 = vld [vmem:[#allocation2 + $0x70] sm:$0xff]
        %v5460 = vld [vmem:[#allocation2 + $0x88] sm:$0xff]
        %v5461 = vld [vmem:[#allocation2 + $0xa0] sm:$0xff]
        %v5462 = vld [vmem:[#allocation2 + $0xb8] sm:$0xff]
        %v5463 = vld [vmem:[#allocation2 + $0xd0] sm:$0xff]
        %v5464 = vld [vmem:[#allocation2 + $0xe8] sm:$0xff]
        %v5465 = vld [vmem:[#allocation2 + $0x100] sm:$0xff]
        %v5466 = vld [vmem:[#allocation2 + $0x118] sm:$0xff]
        %v5467 = vld [vmem:[#allocation2 + $0x130] sm:$0xff]
        %v5468 = vld [vmem:[#allocation2 + $0x148] sm:$0xff]
        %v5469 = vld [vmem:[#allocation2 + $0x160] sm:$0xff]
        %v5470 = vld [vmem:[#allocation2 + $0x178] sm:$0xff]
        %v5471 = vld [vmem:[%s394] sm:$0xff]
        %v5472 = vld [vmem:[%s394 + $0x8] sm:$0xff]
        %v5473 = vld [vmem:[%s394 + $0x18] sm:$0xff]
        %v5474 = vld [vmem:[%s394 + $0x20] sm:$0xff]
        %v5475 = vld [vmem:[%s394 + $0x30] sm:$0xff]
        %v5476 = vld [vmem:[%s394 + $0x38] sm:$0xff]
        %v5477 = vld [vmem:[%s394 + $0x48] sm:$0xff]
        %v5478 = vld [vmem:[%s394 + $0x50] sm:$0xff]
        %v5479 = vld [vmem:[%s394 + $0x60] sm:$0xff]
        %v5480 = vld [vmem:[%s394 + $0x68] sm:$0xff]
        %v5481 = vld [vmem:[%s394 + $0x78] sm:$0xff]
        %v5482 = vld [vmem:[%s394 + $0x80] sm:$0xff]
        %v5483 = vld [vmem:[%s394 + $0x90] sm:$0xff]
        %v5484 = vld [vmem:[%s394 + $0x98] sm:$0xff]
        %v5485 = vld [vmem:[%s394 + $0xa8] sm:$0xff]
        %v5486 = vld [vmem:[%s394 + $0xb0] sm:$0xff]
        %v5487 = vld [vmem:[%s394 + $0xc0] sm:$0xff]
        %v5488 = vld [vmem:[%s394 + $0xc8] sm:$0xff]
        %v5489 = vld [vmem:[%s394 + $0xd8] sm:$0xff]
        %v5490 = vld [vmem:[%s394 + $0xe0] sm:$0xff]
        %v5491 = vld [vmem:[%s394 + $0xf0] sm:$0xff]
        %v5492 = vld [vmem:[%s394 + $0xf8] sm:$0xff]
        %v5493 = vld [vmem:[%s394 + $0x108] sm:$0xff]
        %v5494 = vld [vmem:[%s394 + $0x110] sm:$0xff]
        %v5495 = vld [vmem:[%s394 + $0x120] sm:$0xff]
        %v5496 = vld [vmem:[%s394 + $0x128] sm:$0xff]
        %v5497 = vld [vmem:[%s394 + $0x138] sm:$0xff]
        %v5498 = vld [vmem:[%s394 + $0x140] sm:$0xff]
        %v5499 = vld [vmem:[%s394 + $0x150] sm:$0xff]
        %v5500 = vld [vmem:[%s394 + $0x158] sm:$0xff]
        %v5501 = vld [vmem:[%s394 + $0x168] sm:$0xff]
        %v5502 = vld [vmem:[%s394 + $0x170] sm:$0xff]
        %v5503 = vld [vmem:[%s394 + $0x10] sm:$0xff]
        %v5504 = vld [vmem:[%s394 + $0x28] sm:$0xff]
        %v5505 = vld [vmem:[%s394 + $0x40] sm:$0xff]
        %v5506 = vld [vmem:[%s394 + $0x58] sm:$0xff]
        %v5507 = vld [vmem:[%s394 + $0x70] sm:$0xff]
        %v5508 = vld [vmem:[%s394 + $0x88] sm:$0xff]
        %v5509 = vld [vmem:[%s394 + $0xa0] sm:$0xff]
        %v5510 = vld [vmem:[%s394 + $0xb8] sm:$0xff]
        %v5511 = vld [vmem:[%s394 + $0xd0] sm:$0xff]
        %v5512 = vld [vmem:[%s394 + $0xe8] sm:$0xff]
        %v5513 = vld [vmem:[%s394 + $0x100] sm:$0xff]
        %v5514 = vld [vmem:[%s394 + $0x118] sm:$0xff]
        %v5515 = vld [vmem:[%s394 + $0x130] sm:$0xff]
        %v5516 = vld [vmem:[%s394 + $0x148] sm:$0xff]
        %v5517 = vld [vmem:[%s394 + $0x160] sm:$0xff]
        %v5518 = vld [vmem:[%s394 + $0x178] sm:$0xff]
        %v5519 = vld [vmem:[%s555] sm:$0xff]
        %v5520 = vld [vmem:[%s555 + $0x8] sm:$0xff]
        %v5521 = vld [vmem:[%s555 + $0x18] sm:$0xff]
        %v5522 = vld [vmem:[%s555 + $0x20] sm:$0xff]
        %v5523 = vld [vmem:[%s555 + $0x30] sm:$0xff]
        %v5524 = vld [vmem:[%s555 + $0x38] sm:$0xff]
        %v5525 = vld [vmem:[%s555 + $0x48] sm:$0xff]
        %v5526 = vld [vmem:[%s555 + $0x50] sm:$0xff]
        %v5527 = vld [vmem:[%s555 + $0x60] sm:$0xff]
        %v5528 = vld [vmem:[%s555 + $0x68] sm:$0xff]
        %v5529 = vld [vmem:[%s555 + $0x78] sm:$0xff]
        %v5530 = vld [vmem:[%s555 + $0x80] sm:$0xff]
        %v5531 = vld [vmem:[%s555 + $0x90] sm:$0xff]
        %v5532 = vld [vmem:[%s555 + $0x98] sm:$0xff]
        %v5533 = vld [vmem:[%s555 + $0xa8] sm:$0xff]
        %v5534 = vld [vmem:[%s555 + $0xb0] sm:$0xff]
        %v5535 = vld [vmem:[%s555 + $0xc0] sm:$0xff]
        %v5536 = vld [vmem:[%s555 + $0xc8] sm:$0xff]
        %v5537 = vld [vmem:[%s555 + $0xd8] sm:$0xff]
        %v5538 = vld [vmem:[%s555 + $0xe0] sm:$0xff]
        %v5539 = vld [vmem:[%s555 + $0xf0] sm:$0xff]
        %v5540 = vld [vmem:[%s555 + $0xf8] sm:$0xff]
        %v5541 = vld [vmem:[%s555 + $0x108] sm:$0xff]
        %v5542 = vld [vmem:[%s555 + $0x110] sm:$0xff]
        %v5543 = vld [vmem:[%s555 + $0x120] sm:$0xff]
        %v5544 = vld [vmem:[%s555 + $0x128] sm:$0xff]
        %v5545 = vld [vmem:[%s555 + $0x138] sm:$0xff]
        %v5546 = vld [vmem:[%s555 + $0x140] sm:$0xff]
        %v5547 = vld [vmem:[%s555 + $0x150] sm:$0xff]
        %v5548 = vld [vmem:[%s555 + $0x158] sm:$0xff]
        %v5549 = vld [vmem:[%s555 + $0x168] sm:$0xff]
        %v5550 = vld [vmem:[%s555 + $0x170] sm:$0xff]
        %v5551 = vld [vmem:[%s555 + $0x4] sm:$0xff]
        %v5552 = vld [vmem:[%s555 + $0xc] sm:$0xff]
        %v5553 = vld [vmem:[%s555 + $0x1c] sm:$0xff]
        %v5554 = vld [vmem:[%s555 + $0x24] sm:$0xff]
        %v5555 = vld [vmem:[%s555 + $0x34] sm:$0xff]
        %v5556 = vld [vmem:[%s555 + $0x3c] sm:$0xff]
        %v5557 = vld [vmem:[%s555 + $0x4c] sm:$0xff]
        %v5558 = vld [vmem:[%s555 + $0x54] sm:$0xff]
        %v5559 = vld [vmem:[%s555 + $0x64] sm:$0xff]
        %v5560 = vld [vmem:[%s555 + $0x6c] sm:$0xff]
        %v5561 = vld [vmem:[%s555 + $0x7c] sm:$0xff]
        %v5562 = vld [vmem:[%s555 + $0x84] sm:$0xff]
        %v5563 = vld [vmem:[%s555 + $0x94] sm:$0xff]
        %v5564 = vld [vmem:[%s555 + $0x9c] sm:$0xff]
        %v5565 = vld [vmem:[%s555 + $0xac] sm:$0xff]
        %v5566 = vld [vmem:[%s555 + $0xb4] sm:$0xff]
        %v5567 = vld [vmem:[%s555 + $0xc4] sm:$0xff]
        %v5568 = vld [vmem:[%s555 + $0xcc] sm:$0xff]
        %v5569 = vld [vmem:[%s555 + $0xdc] sm:$0xff]
        %v5570 = vld [vmem:[%s555 + $0xe4] sm:$0xff]
        %v5571 = vld [vmem:[%s555 + $0xf4] sm:$0xff]
        %v5572 = vld [vmem:[%s555 + $0xfc] sm:$0xff]
        %v5573 = vld [vmem:[%s555 + $0x10c] sm:$0xff]
        %v5574 = vld [vmem:[%s555 + $0x114] sm:$0xff]
        %v5575 = vld [vmem:[%s555 + $0x124] sm:$0xff]
        %v5576 = vld [vmem:[%s555 + $0x12c] sm:$0xff]
        %v5577 = vld [vmem:[%s555 + $0x13c] sm:$0xff]
        %v5578 = vld [vmem:[%s555 + $0x144] sm:$0xff]
        %v5579 = vld [vmem:[%s555 + $0x154] sm:$0xff]
        %v5580 = vld [vmem:[%s555 + $0x15c] sm:$0xff]
        %v5581 = vld [vmem:[%s555 + $0x16c] sm:$0xff]
        %v5582 = vld [vmem:[%s555 + $0x174] sm:$0xff]
        %v5583 = vld [vmem:[%s555 + $0x10] sm:$0xff]
        %v5584 = vld [vmem:[%s555 + $0x28] sm:$0xff]
        %v5585 = vld [vmem:[%s555 + $0x40] sm:$0xff]
        %v5586 = vld [vmem:[%s555 + $0x58] sm:$0xff]
        %v5587 = vld [vmem:[%s555 + $0x70] sm:$0xff]
        %v5588 = vld [vmem:[%s555 + $0x88] sm:$0xff]
        %v5589 = vld [vmem:[%s555 + $0xa0] sm:$0xff]
        %v5590 = vld [vmem:[%s555 + $0xb8] sm:$0xff]
        %v5591 = vld [vmem:[%s555 + $0xd0] sm:$0xff]
        %v5592 = vld [vmem:[%s555 + $0xe8] sm:$0xff]
        %v5593 = vld [vmem:[%s555 + $0x100] sm:$0xff]
        %v5594 = vld [vmem:[%s555 + $0x118] sm:$0xff]
        %v5595 = vld [vmem:[%s555 + $0x130] sm:$0xff]
        %v5596 = vld [vmem:[%s555 + $0x148] sm:$0xff]
        %v5597 = vld [vmem:[%s555 + $0x160] sm:$0xff]
        %v5598 = vld [vmem:[%s555 + $0x178] sm:$0xff]
        %5631 = vrot.lane.b32.xlu0 %v5423, 8
        %v5632 = vpop.permute.xlu0 %5631
        %5633 = vrot.lane.b32.xlu0 %v5424, 8
        %v5634 = vpop.permute.xlu0 %5633
        %5635 = vrot.lane.b32.xlu0 %v5425, 8
        %v5636 = vpop.permute.xlu0 %5635
        %5637 = vrot.lane.b32.xlu0 %v5426, 8
        %v5638 = vpop.permute.xlu0 %5637
        %5639 = vrot.lane.b32.xlu0 %v5427, 8
        %v5640 = vpop.permute.xlu0 %5639
        %5641 = vrot.lane.b32.xlu0 %v5428, 8
        %v5642 = vpop.permute.xlu0 %5641
        %5643 = vrot.lane.b32.xlu0 %v5429, 8
        %v5644 = vpop.permute.xlu0 %5643
        %5645 = vrot.lane.b32.xlu0 %v5430, 8
        %v5646 = vpop.permute.xlu0 %5645
        %5647 = vrot.lane.b32.xlu0 %v5431, 8
        %v5648 = vpop.permute.xlu0 %5647
        %5649 = vrot.lane.b32.xlu0 %v5432, 8
        %v5650 = vpop.permute.xlu0 %5649
        %5651 = vrot.lane.b32.xlu0 %v5433, 8
        %v5652 = vpop.permute.xlu0 %5651
        %5653 = vrot.lane.b32.xlu0 %v5434, 8
        %v5654 = vpop.permute.xlu0 %5653
        %5655 = vrot.lane.b32.xlu0 %v5435, 8
        %v5656 = vpop.permute.xlu0 %5655
        %5657 = vrot.lane.b32.xlu0 %v5436, 8
        %v5658 = vpop.permute.xlu0 %5657
        %5659 = vrot.lane.b32.xlu0 %v5437, 8
        %v5660 = vpop.permute.xlu0 %5659
        %5661 = vrot.lane.b32.xlu0 %v5438, 8
        %v5662 = vpop.permute.xlu0 %5661
        %5663 = vrot.lane.b32.xlu0 %v5439, 8
        %v5664 = vpop.permute.xlu0 %5663
        %5665 = vrot.lane.b32.xlu0 %v5440, 8
        %v5666 = vpop.permute.xlu0 %5665
        %5667 = vrot.lane.b32.xlu0 %v5441, 8
        %v5668 = vpop.permute.xlu0 %5667
        %5669 = vrot.lane.b32.xlu0 %v5442, 8
        %v5670 = vpop.permute.xlu0 %5669
        %5671 = vrot.lane.b32.xlu0 %v5443, 8
        %v5672 = vpop.permute.xlu0 %5671
        %5673 = vrot.lane.b32.xlu0 %v5444, 8
        %v5674 = vpop.permute.xlu0 %5673
        %5675 = vrot.lane.b32.xlu0 %v5445, 8
        %v5676 = vpop.permute.xlu0 %5675
        %5677 = vrot.lane.b32.xlu0 %v5446, 8
        %v5678 = vpop.permute.xlu0 %5677
        %5679 = vrot.lane.b32.xlu0 %v5447, 8
        %v5680 = vpop.permute.xlu0 %5679
        %5681 = vrot.lane.b32.xlu0 %v5448, 8
        %v5682 = vpop.permute.xlu0 %5681
        %5683 = vrot.lane.b32.xlu0 %v5449, 8
        %v5684 = vpop.permute.xlu0 %5683
        %5685 = vrot.lane.b32.xlu0 %v5450, 8
        %v5686 = vpop.permute.xlu0 %5685
        %5687 = vrot.lane.b32.xlu0 %v5451, 8
        %v5688 = vpop.permute.xlu0 %5687
        %5689 = vrot.lane.b32.xlu0 %v5452, 8
        %v5690 = vpop.permute.xlu0 %5689
        %5691 = vrot.lane.b32.xlu0 %v5453, 8
        %v5692 = vpop.permute.xlu0 %5691
        %5693 = vrot.lane.b32.xlu0 %v5454, 8
        %v5694 = vpop.permute.xlu0 %5693
        %5759 = vrot.lane.b32.xlu0 %v5392, 16
        %v5760 = vpop.permute.xlu0 %5759
        %5761 = vrot.lane.b32.xlu0 %v5455, 16
        %v5762 = vpop.permute.xlu0 %5761
        %5763 = vrot.lane.b32.xlu0 %v5394, 16
        %v5764 = vpop.permute.xlu0 %5763
        %5765 = vrot.lane.b32.xlu0 %v5456, 16
        %v5766 = vpop.permute.xlu0 %5765
        %5767 = vrot.lane.b32.xlu0 %v5396, 16
        %v5768 = vpop.permute.xlu0 %5767
        %5769 = vrot.lane.b32.xlu0 %v5457, 16
        %v5770 = vpop.permute.xlu0 %5769
        %5771 = vrot.lane.b32.xlu0 %v5398, 16
        %v5772 = vpop.permute.xlu0 %5771
        %5773 = vrot.lane.b32.xlu0 %v5458, 16
        %v5774 = vpop.permute.xlu0 %5773
        %5775 = vrot.lane.b32.xlu0 %v5400, 16
        %v5776 = vpop.permute.xlu0 %5775
        %5777 = vrot.lane.b32.xlu0 %v5459, 16
        %v5778 = vpop.permute.xlu0 %5777
        %5779 = vrot.lane.b32.xlu0 %v5402, 16
        %v5780 = vpop.permute.xlu0 %5779
        %5781 = vrot.lane.b32.xlu0 %v5460, 16
        %v5782 = vpop.permute.xlu0 %5781
        %5783 = vrot.lane.b32.xlu0 %v5404, 16
        %v5784 = vpop.permute.xlu0 %5783
        %5785 = vrot.lane.b32.xlu0 %v5461, 16
        %v5786 = vpop.permute.xlu0 %5785
        %5787 = vrot.lane.b32.xlu0 %v5406, 16
        %v5788 = vpop.permute.xlu0 %5787
        %5789 = vrot.lane.b32.xlu0 %v5462, 16
        %v5790 = vpop.permute.xlu0 %5789
        %5791 = vrot.lane.b32.xlu0 %v5408, 16
        %v5792 = vpop.permute.xlu0 %5791
        %5793 = vrot.lane.b32.xlu0 %v5463, 16
        %v5794 = vpop.permute.xlu0 %5793
        %5795 = vrot.lane.b32.xlu0 %v5410, 16
        %v5796 = vpop.permute.xlu0 %5795
        %5797 = vrot.lane.b32.xlu0 %v5464, 16
        %v5798 = vpop.permute.xlu0 %5797
        %5799 = vrot.lane.b32.xlu0 %v5412, 16
        %v5800 = vpop.permute.xlu0 %5799
        %5801 = vrot.lane.b32.xlu0 %v5465, 16
        %v5802 = vpop.permute.xlu0 %5801
        %5803 = vrot.lane.b32.xlu0 %v5414, 16
        %v5804 = vpop.permute.xlu0 %5803
        %5805 = vrot.lane.b32.xlu0 %v5466, 16
        %v5806 = vpop.permute.xlu0 %5805
        %5807 = vrot.lane.b32.xlu0 %v5416, 16
        %v5808 = vpop.permute.xlu0 %5807
        %5809 = vrot.lane.b32.xlu0 %v5467, 16
        %v5810 = vpop.permute.xlu0 %5809
        %5811 = vrot.lane.b32.xlu0 %v5418, 16
        %v5812 = vpop.permute.xlu0 %5811
        %5813 = vrot.lane.b32.xlu0 %v5468, 16
        %v5814 = vpop.permute.xlu0 %5813
        %5815 = vrot.lane.b32.xlu0 %v5420, 16
        %v5816 = vpop.permute.xlu0 %5815
        %5817 = vrot.lane.b32.xlu0 %v5469, 16
        %v5818 = vpop.permute.xlu0 %5817
        %5819 = vrot.lane.b32.xlu0 %v5422, 16
        %v5820 = vpop.permute.xlu0 %5819
        %5821 = vrot.lane.b32.xlu0 %v5470, 16
        %v5822 = vpop.permute.xlu0 %5821
        %5887 = vrot.lane.b32.xlu0 %v5471, 24
        %v5888 = vpop.permute.xlu0 %5887
        %5889 = vrot.lane.b32.xlu0 %v5472, 24
        %v5890 = vpop.permute.xlu0 %5889
        %5891 = vrot.lane.b32.xlu0 %v5473, 24
        %v5892 = vpop.permute.xlu0 %5891
        %5893 = vrot.lane.b32.xlu0 %v5474, 24
        %v5894 = vpop.permute.xlu0 %5893
        %5895 = vrot.lane.b32.xlu0 %v5475, 24
        %v5896 = vpop.permute.xlu0 %5895
        %5897 = vrot.lane.b32.xlu0 %v5476, 24
        %v5898 = vpop.permute.xlu0 %5897
        %5899 = vrot.lane.b32.xlu0 %v5477, 24
        %v5900 = vpop.permute.xlu0 %5899
        %5901 = vrot.lane.b32.xlu0 %v5478, 24
        %v5902 = vpop.permute.xlu0 %5901
        %5903 = vrot.lane.b32.xlu0 %v5479, 24
        %v5904 = vpop.permute.xlu0 %5903
        %5905 = vrot.lane.b32.xlu0 %v5480, 24
        %v5906 = vpop.permute.xlu0 %5905
        %5907 = vrot.lane.b32.xlu0 %v5481, 24
        %v5908 = vpop.permute.xlu0 %5907
        %5909 = vrot.lane.b32.xlu0 %v5482, 24
        %v5910 = vpop.permute.xlu0 %5909
        %5911 = vrot.lane.b32.xlu0 %v5483, 24
        %v5912 = vpop.permute.xlu0 %5911
        %5913 = vrot.lane.b32.xlu0 %v5484, 24
        %v5914 = vpop.permute.xlu0 %5913
        %5915 = vrot.lane.b32.xlu0 %v5485, 24
        %v5916 = vpop.permute.xlu0 %5915
        %5917 = vrot.lane.b32.xlu0 %v5486, 24
        %v5918 = vpop.permute.xlu0 %5917
        %5919 = vrot.lane.b32.xlu0 %v5487, 24
        %v5920 = vpop.permute.xlu0 %5919
        %5921 = vrot.lane.b32.xlu0 %v5488, 24
        %v5922 = vpop.permute.xlu0 %5921
        %5923 = vrot.lane.b32.xlu0 %v5489, 24
        %v5924 = vpop.permute.xlu0 %5923
        %5925 = vrot.lane.b32.xlu0 %v5490, 24
        %v5926 = vpop.permute.xlu0 %5925
        %5927 = vrot.lane.b32.xlu0 %v5491, 24
        %v5928 = vpop.permute.xlu0 %5927
        %5929 = vrot.lane.b32.xlu0 %v5492, 24
        %v5930 = vpop.permute.xlu0 %5929
        %5931 = vrot.lane.b32.xlu0 %v5493, 24
        %v5932 = vpop.permute.xlu0 %5931
        %5933 = vrot.lane.b32.xlu0 %v5494, 24
        %v5934 = vpop.permute.xlu0 %5933
        %5935 = vrot.lane.b32.xlu0 %v5495, 24
        %v5936 = vpop.permute.xlu0 %5935
        %5937 = vrot.lane.b32.xlu0 %v5496, 24
        %v5938 = vpop.permute.xlu0 %5937
        %5939 = vrot.lane.b32.xlu0 %v5497, 24
        %v5940 = vpop.permute.xlu0 %5939
        %5941 = vrot.lane.b32.xlu0 %v5498, 24
        %v5942 = vpop.permute.xlu0 %5941
        %5943 = vrot.lane.b32.xlu0 %v5499, 24
        %v5944 = vpop.permute.xlu0 %5943
        %5945 = vrot.lane.b32.xlu0 %v5500, 24
        %v5946 = vpop.permute.xlu0 %5945
        %5947 = vrot.lane.b32.xlu0 %v5501, 24
        %v5948 = vpop.permute.xlu0 %5947
        %5949 = vrot.lane.b32.xlu0 %v5502, 24
        %v5950 = vpop.permute.xlu0 %5949
        %6015 = vrot.lane.b32.xlu0 %v5327, 32
        %v6016 = vpop.permute.xlu0 %6015
        %6017 = vrot.lane.b32.xlu0 %v5328, 32
        %v6018 = vpop.permute.xlu0 %6017
        %6019 = vrot.lane.b32.xlu0 %v5329, 32
        %v6020 = vpop.permute.xlu0 %6019
        %6021 = vrot.lane.b32.xlu0 %v5330, 32
        %v6022 = vpop.permute.xlu0 %6021
        %6023 = vrot.lane.b32.xlu0 %v5331, 32
        %v6024 = vpop.permute.xlu0 %6023
        %6025 = vrot.lane.b32.xlu0 %v5332, 32
        %v6026 = vpop.permute.xlu0 %6025
        %6027 = vrot.lane.b32.xlu0 %v5333, 32
        %v6028 = vpop.permute.xlu0 %6027
        %6029 = vrot.lane.b32.xlu0 %v5334, 32
        %v6030 = vpop.permute.xlu0 %6029
        %6031 = vrot.lane.b32.xlu0 %v5335, 32
        %v6032 = vpop.permute.xlu0 %6031
        %6033 = vrot.lane.b32.xlu0 %v5336, 32
        %v6034 = vpop.permute.xlu0 %6033
        %6035 = vrot.lane.b32.xlu0 %v5337, 32
        %v6036 = vpop.permute.xlu0 %6035
        %6037 = vrot.lane.b32.xlu0 %v5338, 32
        %v6038 = vpop.permute.xlu0 %6037
        %6039 = vrot.lane.b32.xlu0 %v5339, 32
        %v6040 = vpop.permute.xlu0 %6039
        %6041 = vrot.lane.b32.xlu0 %v5340, 32
        %v6042 = vpop.permute.xlu0 %6041
        %6043 = vrot.lane.b32.xlu0 %v5341, 32
        %v6044 = vpop.permute.xlu0 %6043
        %6045 = vrot.lane.b32.xlu0 %v5342, 32
        %v6046 = vpop.permute.xlu0 %6045
        %6047 = vrot.lane.b32.xlu0 %v5343, 32
        %v6048 = vpop.permute.xlu0 %6047
        %6049 = vrot.lane.b32.xlu0 %v5344, 32
        %v6050 = vpop.permute.xlu0 %6049
        %6051 = vrot.lane.b32.xlu0 %v5345, 32
        %v6052 = vpop.permute.xlu0 %6051
        %6053 = vrot.lane.b32.xlu0 %v5346, 32
        %v6054 = vpop.permute.xlu0 %6053
        %6055 = vrot.lane.b32.xlu0 %v5347, 32
        %v6056 = vpop.permute.xlu0 %6055
        %6057 = vrot.lane.b32.xlu0 %v5348, 32
        %v6058 = vpop.permute.xlu0 %6057
        %6059 = vrot.lane.b32.xlu0 %v5349, 32
        %v6060 = vpop.permute.xlu0 %6059
        %6061 = vrot.lane.b32.xlu0 %v5350, 32
        %v6062 = vpop.permute.xlu0 %6061
        %6063 = vrot.lane.b32.xlu0 %v5351, 32
        %v6064 = vpop.permute.xlu0 %6063
        %6065 = vrot.lane.b32.xlu0 %v5352, 32
        %v6066 = vpop.permute.xlu0 %6065
        %6067 = vrot.lane.b32.xlu0 %v5353, 32
        %v6068 = vpop.permute.xlu0 %6067
        %6069 = vrot.lane.b32.xlu0 %v5354, 32
        %v6070 = vpop.permute.xlu0 %6069
        %6071 = vrot.lane.b32.xlu0 %v5355, 32
        %v6072 = vpop.permute.xlu0 %6071
        %6073 = vrot.lane.b32.xlu0 %v5356, 32
        %v6074 = vpop.permute.xlu0 %6073
        %6075 = vrot.lane.b32.xlu0 %v5357, 32
        %v6076 = vpop.permute.xlu0 %6075
        %6077 = vrot.lane.b32.xlu0 %v5358, 32
        %v6078 = vpop.permute.xlu0 %6077
        %6127 = vrot.lane.b32.xlu0 %v5472, 40
        %v6128 = vpop.permute.xlu0 %6127
        %6129 = vrot.lane.b32.xlu0 %v5503, 40
        %v6130 = vpop.permute.xlu0 %6129
        %6131 = vrot.lane.b32.xlu0 %v5474, 40
        %v6132 = vpop.permute.xlu0 %6131
        %6133 = vrot.lane.b32.xlu0 %v5504, 40
        %v6134 = vpop.permute.xlu0 %6133
        %6135 = vrot.lane.b32.xlu0 %v5476, 40
        %v6136 = vpop.permute.xlu0 %6135
        %6137 = vrot.lane.b32.xlu0 %v5505, 40
        %v6138 = vpop.permute.xlu0 %6137
        %6139 = vrot.lane.b32.xlu0 %v5478, 40
        %v6140 = vpop.permute.xlu0 %6139
        %6141 = vrot.lane.b32.xlu0 %v5506, 40
        %v6142 = vpop.permute.xlu0 %6141
        %6143 = vrot.lane.b32.xlu0 %v5480, 40
        %v6144 = vpop.permute.xlu0 %6143
        %6145 = vrot.lane.b32.xlu0 %v5507, 40
        %v6146 = vpop.permute.xlu0 %6145
        %6147 = vrot.lane.b32.xlu0 %v5482, 40
        %v6148 = vpop.permute.xlu0 %6147
        %6149 = vrot.lane.b32.xlu0 %v5508, 40
        %v6150 = vpop.permute.xlu0 %6149
        %6151 = vrot.lane.b32.xlu0 %v5484, 40
        %v6152 = vpop.permute.xlu0 %6151
        %6153 = vrot.lane.b32.xlu0 %v5509, 40
        %v6154 = vpop.permute.xlu0 %6153
        %6155 = vrot.lane.b32.xlu0 %v5486, 40
        %v6156 = vpop.permute.xlu0 %6155
        %6157 = vrot.lane.b32.xlu0 %v5510, 40
        %v6158 = vpop.permute.xlu0 %6157
        %6159 = vrot.lane.b32.xlu0 %v5488, 40
        %v6160 = vpop.permute.xlu0 %6159
        %6161 = vrot.lane.b32.xlu0 %v5511, 40
        %v6162 = vpop.permute.xlu0 %6161
        %6163 = vrot.lane.b32.xlu0 %v5490, 40
        %v6164 = vpop.permute.xlu0 %6163
        %6165 = vrot.lane.b32.xlu0 %v5512, 40
        %v6166 = vpop.permute.xlu0 %6165
        %6167 = vrot.lane.b32.xlu0 %v5492, 40
        %v6168 = vpop.permute.xlu0 %6167
        %6169 = vrot.lane.b32.xlu0 %v5513, 40
        %v6170 = vpop.permute.xlu0 %6169
        %6171 = vrot.lane.b32.xlu0 %v5494, 40
        %v6172 = vpop.permute.xlu0 %6171
        %6173 = vrot.lane.b32.xlu0 %v5514, 40
        %v6174 = vpop.permute.xlu0 %6173
        %6175 = vrot.lane.b32.xlu0 %v5496, 40
        %v6176 = vpop.permute.xlu0 %6175
        %6177 = vrot.lane.b32.xlu0 %v5515, 40
        %v6178 = vpop.permute.xlu0 %6177
        %6179 = vrot.lane.b32.xlu0 %v5498, 40
        %v6180 = vpop.permute.xlu0 %6179
        %6181 = vrot.lane.b32.xlu0 %v5516, 40
        %v6182 = vpop.permute.xlu0 %6181
        %6183 = vrot.lane.b32.xlu0 %v5500, 40
        %v6184 = vpop.permute.xlu0 %6183
        %6185 = vrot.lane.b32.xlu0 %v5517, 40
        %v6186 = vpop.permute.xlu0 %6185
        %6187 = vrot.lane.b32.xlu0 %v5502, 40
        %v6188 = vpop.permute.xlu0 %6187
        %6189 = vrot.lane.b32.xlu0 %v5518, 40
        %v6190 = vpop.permute.xlu0 %6189
        %6255 = vrot.lane.b32.xlu0 %v5519, 48
        %v6256 = vpop.permute.xlu0 %6255
        %6257 = vrot.lane.b32.xlu0 %v5520, 48
        %v6258 = vpop.permute.xlu0 %6257
        %6259 = vrot.lane.b32.xlu0 %v5521, 48
        %v6260 = vpop.permute.xlu0 %6259
        %6261 = vrot.lane.b32.xlu0 %v5522, 48
        %v6262 = vpop.permute.xlu0 %6261
        %6263 = vrot.lane.b32.xlu0 %v5523, 48
        %v6264 = vpop.permute.xlu0 %6263
        %6265 = vrot.lane.b32.xlu0 %v5524, 48
        %v6266 = vpop.permute.xlu0 %6265
        %6267 = vrot.lane.b32.xlu0 %v5525, 48
        %v6268 = vpop.permute.xlu0 %6267
        %6269 = vrot.lane.b32.xlu0 %v5526, 48
        %v6270 = vpop.permute.xlu0 %6269
        %6271 = vrot.lane.b32.xlu0 %v5527, 48
        %v6272 = vpop.permute.xlu0 %6271
        %6273 = vrot.lane.b32.xlu0 %v5528, 48
        %v6274 = vpop.permute.xlu0 %6273
        %6275 = vrot.lane.b32.xlu0 %v5529, 48
        %v6276 = vpop.permute.xlu0 %6275
        %6277 = vrot.lane.b32.xlu0 %v5530, 48
        %v6278 = vpop.permute.xlu0 %6277
        %6279 = vrot.lane.b32.xlu0 %v5531, 48
        %v6280 = vpop.permute.xlu0 %6279
        %6281 = vrot.lane.b32.xlu0 %v5532, 48
        %v6282 = vpop.permute.xlu0 %6281
        %6283 = vrot.lane.b32.xlu0 %v5533, 48
        %v6284 = vpop.permute.xlu0 %6283
        %6285 = vrot.lane.b32.xlu0 %v5534, 48
        %v6286 = vpop.permute.xlu0 %6285
        %6287 = vrot.lane.b32.xlu0 %v5535, 48
        %v6288 = vpop.permute.xlu0 %6287
        %6289 = vrot.lane.b32.xlu0 %v5536, 48
        %v6290 = vpop.permute.xlu0 %6289
        %6291 = vrot.lane.b32.xlu0 %v5537, 48
        %v6292 = vpop.permute.xlu0 %6291
        %6293 = vrot.lane.b32.xlu0 %v5538, 48
        %v6294 = vpop.permute.xlu0 %6293
        %6295 = vrot.lane.b32.xlu0 %v5539, 48
        %v6296 = vpop.permute.xlu0 %6295
        %6297 = vrot.lane.b32.xlu0 %v5540, 48
        %v6298 = vpop.permute.xlu0 %6297
        %6299 = vrot.lane.b32.xlu0 %v5541, 48
        %v6300 = vpop.permute.xlu0 %6299
        %6301 = vrot.lane.b32.xlu0 %v5542, 48
        %v6302 = vpop.permute.xlu0 %6301
        %6303 = vrot.lane.b32.xlu0 %v5543, 48
        %v6304 = vpop.permute.xlu0 %6303
        %6305 = vrot.lane.b32.xlu0 %v5544, 48
        %v6306 = vpop.permute.xlu0 %6305
        %6307 = vrot.lane.b32.xlu0 %v5545, 48
        %v6308 = vpop.permute.xlu0 %6307
        %6309 = vrot.lane.b32.xlu0 %v5546, 48
        %v6310 = vpop.permute.xlu0 %6309
        %6311 = vrot.lane.b32.xlu0 %v5547, 48
        %v6312 = vpop.permute.xlu0 %6311
        %6313 = vrot.lane.b32.xlu0 %v5548, 48
        %v6314 = vpop.permute.xlu0 %6313
        %6315 = vrot.lane.b32.xlu0 %v5549, 48
        %v6316 = vpop.permute.xlu0 %6315
        %6317 = vrot.lane.b32.xlu0 %v5550, 48
        %v6318 = vpop.permute.xlu0 %6317
        %6383 = vrot.lane.b32.xlu0 %v5551, 56
        %v6384 = vpop.permute.xlu0 %6383
        %6385 = vrot.lane.b32.xlu0 %v5552, 56
        %v6386 = vpop.permute.xlu0 %6385
        %6387 = vrot.lane.b32.xlu0 %v5553, 56
        %v6388 = vpop.permute.xlu0 %6387
        %6389 = vrot.lane.b32.xlu0 %v5554, 56
        %v6390 = vpop.permute.xlu0 %6389
        %6391 = vrot.lane.b32.xlu0 %v5555, 56
        %v6392 = vpop.permute.xlu0 %6391
        %6393 = vrot.lane.b32.xlu0 %v5556, 56
        %v6394 = vpop.permute.xlu0 %6393
        %6395 = vrot.lane.b32.xlu0 %v5557, 56
        %v6396 = vpop.permute.xlu0 %6395
        %6397 = vrot.lane.b32.xlu0 %v5558, 56
        %v6398 = vpop.permute.xlu0 %6397
        %6399 = vrot.lane.b32.xlu0 %v5559, 56
        %v6400 = vpop.permute.xlu0 %6399
        %6401 = vrot.lane.b32.xlu0 %v5560, 56
        %v6402 = vpop.permute.xlu0 %6401
        %6403 = vrot.lane.b32.xlu0 %v5561, 56
        %v6404 = vpop.permute.xlu0 %6403
        %6405 = vrot.lane.b32.xlu0 %v5562, 56
        %v6406 = vpop.permute.xlu0 %6405
        %6407 = vrot.lane.b32.xlu0 %v5563, 56
        %v6408 = vpop.permute.xlu0 %6407
        %6409 = vrot.lane.b32.xlu0 %v5564, 56
        %v6410 = vpop.permute.xlu0 %6409
        %6411 = vrot.lane.b32.xlu0 %v5565, 56
        %v6412 = vpop.permute.xlu0 %6411
        %6413 = vrot.lane.b32.xlu0 %v5566, 56
        %v6414 = vpop.permute.xlu0 %6413
        %6415 = vrot.lane.b32.xlu0 %v5567, 56
        %v6416 = vpop.permute.xlu0 %6415
        %6417 = vrot.lane.b32.xlu0 %v5568, 56
        %v6418 = vpop.permute.xlu0 %6417
        %6419 = vrot.lane.b32.xlu0 %v5569, 56
        %v6420 = vpop.permute.xlu0 %6419
        %6421 = vrot.lane.b32.xlu0 %v5570, 56
        %v6422 = vpop.permute.xlu0 %6421
        %6423 = vrot.lane.b32.xlu0 %v5571, 56
        %v6424 = vpop.permute.xlu0 %6423
        %6425 = vrot.lane.b32.xlu0 %v5572, 56
        %v6426 = vpop.permute.xlu0 %6425
        %6427 = vrot.lane.b32.xlu0 %v5573, 56
        %v6428 = vpop.permute.xlu0 %6427
        %6429 = vrot.lane.b32.xlu0 %v5574, 56
        %v6430 = vpop.permute.xlu0 %6429
        %6431 = vrot.lane.b32.xlu0 %v5575, 56
        %v6432 = vpop.permute.xlu0 %6431
        %6433 = vrot.lane.b32.xlu0 %v5576, 56
        %v6434 = vpop.permute.xlu0 %6433
        %6435 = vrot.lane.b32.xlu0 %v5577, 56
        %v6436 = vpop.permute.xlu0 %6435
        %6437 = vrot.lane.b32.xlu0 %v5578, 56
        %v6438 = vpop.permute.xlu0 %6437
        %6439 = vrot.lane.b32.xlu0 %v5579, 56
        %v6440 = vpop.permute.xlu0 %6439
        %6441 = vrot.lane.b32.xlu0 %v5580, 56
        %v6442 = vpop.permute.xlu0 %6441
        %6443 = vrot.lane.b32.xlu0 %v5581, 56
        %v6444 = vpop.permute.xlu0 %6443
        %6445 = vrot.lane.b32.xlu0 %v5582, 56
        %v6446 = vpop.permute.xlu0 %6445
        %6495 = vrot.lane.b32.xlu0 %v5520, 64
        %v6496 = vpop.permute.xlu0 %6495
        %6497 = vrot.lane.b32.xlu0 %v5583, 64
        %v6498 = vpop.permute.xlu0 %6497
        %6499 = vrot.lane.b32.xlu0 %v5522, 64
        %v6500 = vpop.permute.xlu0 %6499
        %6501 = vrot.lane.b32.xlu0 %v5584, 64
        %v6502 = vpop.permute.xlu0 %6501
        %6503 = vrot.lane.b32.xlu0 %v5524, 64
        %v6504 = vpop.permute.xlu0 %6503
        %6505 = vrot.lane.b32.xlu0 %v5585, 64
        %v6506 = vpop.permute.xlu0 %6505
        %6507 = vrot.lane.b32.xlu0 %v5526, 64
        %v6508 = vpop.permute.xlu0 %6507
        %6509 = vrot.lane.b32.xlu0 %v5586, 64
        %v6510 = vpop.permute.xlu0 %6509
        %6511 = vrot.lane.b32.xlu0 %v5528, 64
        %v6512 = vpop.permute.xlu0 %6511
        %6513 = vrot.lane.b32.xlu0 %v5587, 64
        %v6514 = vpop.permute.xlu0 %6513
        %6515 = vrot.lane.b32.xlu0 %v5530, 64
        %v6516 = vpop.permute.xlu0 %6515
        %6517 = vrot.lane.b32.xlu0 %v5588, 64
        %v6518 = vpop.permute.xlu0 %6517
        %6519 = vrot.lane.b32.xlu0 %v5532, 64
        %v6520 = vpop.permute.xlu0 %6519
        %6521 = vrot.lane.b32.xlu0 %v5589, 64
        %v6522 = vpop.permute.xlu0 %6521
        %6523 = vrot.lane.b32.xlu0 %v5534, 64
        %v6524 = vpop.permute.xlu0 %6523
        %6525 = vrot.lane.b32.xlu0 %v5590, 64
        %v6526 = vpop.permute.xlu0 %6525
        %6527 = vrot.lane.b32.xlu0 %v5536, 64
        %v6528 = vpop.permute.xlu0 %6527
        %6529 = vrot.lane.b32.xlu0 %v5591, 64
        %v6530 = vpop.permute.xlu0 %6529
        %6531 = vrot.lane.b32.xlu0 %v5538, 64
        %v6532 = vpop.permute.xlu0 %6531
        %6533 = vrot.lane.b32.xlu0 %v5592, 64
        %v6534 = vpop.permute.xlu0 %6533
        %6535 = vrot.lane.b32.xlu0 %v5540, 64
        %v6536 = vpop.permute.xlu0 %6535
        %6537 = vrot.lane.b32.xlu0 %v5593, 64
        %v6538 = vpop.permute.xlu0 %6537
        %6539 = vrot.lane.b32.xlu0 %v5542, 64
        %v6540 = vpop.permute.xlu0 %6539
        %6541 = vrot.lane.b32.xlu0 %v5594, 64
        %v6542 = vpop.permute.xlu0 %6541
        %6543 = vrot.lane.b32.xlu0 %v5544, 64
        %v6544 = vpop.permute.xlu0 %6543
        %6545 = vrot.lane.b32.xlu0 %v5595, 64
        %v6546 = vpop.permute.xlu0 %6545
        %6547 = vrot.lane.b32.xlu0 %v5546, 64
        %v6548 = vpop.permute.xlu0 %6547
        %6549 = vrot.lane.b32.xlu0 %v5596, 64
        %v6550 = vpop.permute.xlu0 %6549
        %6551 = vrot.lane.b32.xlu0 %v5548, 64
        %v6552 = vpop.permute.xlu0 %6551
        %6553 = vrot.lane.b32.xlu0 %v5597, 64
        %v6554 = vpop.permute.xlu0 %6553
        %6555 = vrot.lane.b32.xlu0 %v5550, 64
        %v6556 = vpop.permute.xlu0 %6555
        %6557 = vrot.lane.b32.xlu0 %v5598, 64
        %v6558 = vpop.permute.xlu0 %6557
        %v6591 = vsel %vm250, %v5391, %v5632
        %v6592 = vsel %vm250, %v5392, %v5634
        %v6593 = vsel %vm250, %v5393, %v5636
        %v6594 = vsel %vm250, %v5394, %v5638
        %v6595 = vsel %vm250, %v5395, %v5640
        %v6596 = vsel %vm250, %v5396, %v5642
        %v6597 = vsel %vm250, %v5397, %v5644
        %v6598 = vsel %vm250, %v5398, %v5646
        %v6599 = vsel %vm250, %v5399, %v5648
        %v6600 = vsel %vm250, %v5400, %v5650
        %v6601 = vsel %vm250, %v5401, %v5652
        %v6602 = vsel %vm250, %v5402, %v5654
        %v6603 = vsel %vm250, %v5403, %v5656
        %v6604 = vsel %vm250, %v5404, %v5658
        %v6605 = vsel %vm250, %v5405, %v5660
        %v6606 = vsel %vm250, %v5406, %v5662
        %v6607 = vsel %vm250, %v5407, %v5664
        %v6608 = vsel %vm250, %v5408, %v5666
        %v6609 = vsel %vm250, %v5409, %v5668
        %v6610 = vsel %vm250, %v5410, %v5670
        %v6611 = vsel %vm250, %v5411, %v5672
        %v6612 = vsel %vm250, %v5412, %v5674
        %v6613 = vsel %vm250, %v5413, %v5676
        %v6614 = vsel %vm250, %v5414, %v5678
        %v6615 = vsel %vm250, %v5415, %v5680
        %v6616 = vsel %vm250, %v5416, %v5682
        %v6617 = vsel %vm250, %v5417, %v5684
        %v6618 = vsel %vm250, %v5418, %v5686
        %v6619 = vsel %vm250, %v5419, %v5688
        %v6620 = vsel %vm250, %v5420, %v5690
        %v6621 = vsel %vm250, %v5421, %v5692
        %v6622 = vsel %vm250, %v5422, %v5694
        %v6623 = vsel %vm1660, %v6591, %v5760
        %v6624 = vsel %vm1660, %v6592, %v5762
        %v6625 = vsel %vm1660, %v6593, %v5764
        %v6626 = vsel %vm1660, %v6594, %v5766
        %v6627 = vsel %vm1660, %v6595, %v5768
        %v6628 = vsel %vm1660, %v6596, %v5770
        %v6629 = vsel %vm1660, %v6597, %v5772
        %v6630 = vsel %vm1660, %v6598, %v5774
        %v6631 = vsel %vm1660, %v6599, %v5776
        %v6632 = vsel %vm1660, %v6600, %v5778
        %v6633 = vsel %vm1660, %v6601, %v5780
        %v6634 = vsel %vm1660, %v6602, %v5782
        %v6635 = vsel %vm1660, %v6603, %v5784
        %v6636 = vsel %vm1660, %v6604, %v5786
        %v6637 = vsel %vm1660, %v6605, %v5788
        %v6638 = vsel %vm1660, %v6606, %v5790
        %v6639 = vsel %vm1660, %v6607, %v5792
        %v6640 = vsel %vm1660, %v6608, %v5794
        %v6641 = vsel %vm1660, %v6609, %v5796
        %v6642 = vsel %vm1660, %v6610, %v5798
        %v6643 = vsel %vm1660, %v6611, %v5800
        %v6644 = vsel %vm1660, %v6612, %v5802
        %v6645 = vsel %vm1660, %v6613, %v5804
        %v6646 = vsel %vm1660, %v6614, %v5806
        %v6647 = vsel %vm1660, %v6615, %v5808
        %v6648 = vsel %vm1660, %v6616, %v5810
        %v6649 = vsel %vm1660, %v6617, %v5812
        %v6650 = vsel %vm1660, %v6618, %v5814
        %v6651 = vsel %vm1660, %v6619, %v5816
        %v6652 = vsel %vm1660, %v6620, %v5818
        %v6653 = vsel %vm1660, %v6621, %v5820
        %v6654 = vsel %vm1660, %v6622, %v5822
        %v6655 = vsel %vm1693, %v6623, %v5888
        %v6656 = vsel %vm1693, %v6624, %v5890
        %v6657 = vsel %vm1693, %v6625, %v5892
        %v6658 = vsel %vm1693, %v6626, %v5894
        %v6659 = vsel %vm1693, %v6627, %v5896
        %v6660 = vsel %vm1693, %v6628, %v5898
        %v6661 = vsel %vm1693, %v6629, %v5900
        %v6662 = vsel %vm1693, %v6630, %v5902
        %v6663 = vsel %vm1693, %v6631, %v5904
        %v6664 = vsel %vm1693, %v6632, %v5906
        %v6665 = vsel %vm1693, %v6633, %v5908
        %v6666 = vsel %vm1693, %v6634, %v5910
        %v6667 = vsel %vm1693, %v6635, %v5912
        %v6668 = vsel %vm1693, %v6636, %v5914
        %v6669 = vsel %vm1693, %v6637, %v5916
        %v6670 = vsel %vm1693, %v6638, %v5918
        %v6671 = vsel %vm1693, %v6639, %v5920
        %v6672 = vsel %vm1693, %v6640, %v5922
        %v6673 = vsel %vm1693, %v6641, %v5924
        %v6674 = vsel %vm1693, %v6642, %v5926
        %v6675 = vsel %vm1693, %v6643, %v5928
        %v6676 = vsel %vm1693, %v6644, %v5930
        %v6677 = vsel %vm1693, %v6645, %v5932
        %v6678 = vsel %vm1693, %v6646, %v5934
        %v6679 = vsel %vm1693, %v6647, %v5936
        %v6680 = vsel %vm1693, %v6648, %v5938
        %v6681 = vsel %vm1693, %v6649, %v5940
        %v6682 = vsel %vm1693, %v6650, %v5942
        %v6683 = vsel %vm1693, %v6651, %v5944
        %v6684 = vsel %vm1693, %v6652, %v5946
        %v6685 = vsel %vm1693, %v6653, %v5948
        %v6686 = vsel %vm1693, %v6654, %v5950
        %v6687 = vsel %vm1726, %v6655, %v6016
        %v6688 = vsel %vm1726, %v6656, %v6018
        %v6689 = vsel %vm1726, %v6657, %v6020
        %v6690 = vsel %vm1726, %v6658, %v6022
        %v6691 = vsel %vm1726, %v6659, %v6024
        %v6692 = vsel %vm1726, %v6660, %v6026
        %v6693 = vsel %vm1726, %v6661, %v6028
        %v6694 = vsel %vm1726, %v6662, %v6030
        %v6695 = vsel %vm1726, %v6663, %v6032
        %v6696 = vsel %vm1726, %v6664, %v6034
        %v6697 = vsel %vm1726, %v6665, %v6036
        %v6698 = vsel %vm1726, %v6666, %v6038
        %v6699 = vsel %vm1726, %v6667, %v6040
        %v6700 = vsel %vm1726, %v6668, %v6042
        %v6701 = vsel %vm1726, %v6669, %v6044
        %v6702 = vsel %vm1726, %v6670, %v6046
        %v6703 = vsel %vm1726, %v6671, %v6048
        %v6704 = vsel %vm1726, %v6672, %v6050
        %v6705 = vsel %vm1726, %v6673, %v6052
        %v6706 = vsel %vm1726, %v6674, %v6054
        %v6707 = vsel %vm1726, %v6675, %v6056
        %v6708 = vsel %vm1726, %v6676, %v6058
        %v6709 = vsel %vm1726, %v6677, %v6060
        %v6710 = vsel %vm1726, %v6678, %v6062
        %v6711 = vsel %vm1726, %v6679, %v6064
        %v6712 = vsel %vm1726, %v6680, %v6066
        %v6713 = vsel %vm1726, %v6681, %v6068
        %v6714 = vsel %vm1726, %v6682, %v6070
        %v6715 = vsel %vm1726, %v6683, %v6072
        %v6716 = vsel %vm1726, %v6684, %v6074
        %v6717 = vsel %vm1726, %v6685, %v6076
        %v6718 = vsel %vm1726, %v6686, %v6078
        %v6719 = vsel %vm1759, %v6687, %v6128
        %v6720 = vsel %vm1759, %v6688, %v6130
        %v6721 = vsel %vm1759, %v6689, %v6132
        %v6722 = vsel %vm1759, %v6690, %v6134
        %v6723 = vsel %vm1759, %v6691, %v6136
        %v6724 = vsel %vm1759, %v6692, %v6138
        %v6725 = vsel %vm1759, %v6693, %v6140
        %v6726 = vsel %vm1759, %v6694, %v6142
        %v6727 = vsel %vm1759, %v6695, %v6144
        %v6728 = vsel %vm1759, %v6696, %v6146
        %v6729 = vsel %vm1759, %v6697, %v6148
        %v6730 = vsel %vm1759, %v6698, %v6150
        %v6731 = vsel %vm1759, %v6699, %v6152
        %v6732 = vsel %vm1759, %v6700, %v6154
        %v6733 = vsel %vm1759, %v6701, %v6156
        %v6734 = vsel %vm1759, %v6702, %v6158
        %v6735 = vsel %vm1759, %v6703, %v6160
        %v6736 = vsel %vm1759, %v6704, %v6162
        %v6737 = vsel %vm1759, %v6705, %v6164
        %v6738 = vsel %vm1759, %v6706, %v6166
        %v6739 = vsel %vm1759, %v6707, %v6168
        %v6740 = vsel %vm1759, %v6708, %v6170
        %v6741 = vsel %vm1759, %v6709, %v6172
        %v6742 = vsel %vm1759, %v6710, %v6174
        %v6743 = vsel %vm1759, %v6711, %v6176
        %v6744 = vsel %vm1759, %v6712, %v6178
        %v6745 = vsel %vm1759, %v6713, %v6180
        %v6746 = vsel %vm1759, %v6714, %v6182
        %v6747 = vsel %vm1759, %v6715, %v6184
        %v6748 = vsel %vm1759, %v6716, %v6186
        %v6749 = vsel %vm1759, %v6717, %v6188
        %v6750 = vsel %vm1759, %v6718, %v6190
        %v6751 = vsel %vm1792, %v6719, %v6256
        %v6752 = vsel %vm1792, %v6720, %v6258
        %v6753 = vsel %vm1792, %v6721, %v6260
        %v6754 = vsel %vm1792, %v6722, %v6262
        %v6755 = vsel %vm1792, %v6723, %v6264
        %v6756 = vsel %vm1792, %v6724, %v6266
        %v6757 = vsel %vm1792, %v6725, %v6268
        %v6758 = vsel %vm1792, %v6726, %v6270
        %v6759 = vsel %vm1792, %v6727, %v6272
        %v6760 = vsel %vm1792, %v6728, %v6274
        %v6761 = vsel %vm1792, %v6729, %v6276
        %v6762 = vsel %vm1792, %v6730, %v6278
        %v6763 = vsel %vm1792, %v6731, %v6280
        %v6764 = vsel %vm1792, %v6732, %v6282
        %v6765 = vsel %vm1792, %v6733, %v6284
        %v6766 = vsel %vm1792, %v6734, %v6286
        %v6767 = vsel %vm1792, %v6735, %v6288
        %v6768 = vsel %vm1792, %v6736, %v6290
        %v6769 = vsel %vm1792, %v6737, %v6292
        %v6770 = vsel %vm1792, %v6738, %v6294
        %v6771 = vsel %vm1792, %v6739, %v6296
        %v6772 = vsel %vm1792, %v6740, %v6298
        %v6773 = vsel %vm1792, %v6741, %v6300
        %v6774 = vsel %vm1792, %v6742, %v6302
        %v6775 = vsel %vm1792, %v6743, %v6304
        %v6776 = vsel %vm1792, %v6744, %v6306
        %v6777 = vsel %vm1792, %v6745, %v6308
        %v6778 = vsel %vm1792, %v6746, %v6310
        %v6779 = vsel %vm1792, %v6747, %v6312
        %v6780 = vsel %vm1792, %v6748, %v6314
        %v6781 = vsel %vm1792, %v6749, %v6316
        %v6782 = vsel %vm1792, %v6750, %v6318
        %v6783 = vsel %vm1825, %v6751, %v6384
        %v6784 = vsel %vm1825, %v6752, %v6386
        %v6785 = vsel %vm1825, %v6753, %v6388
        %v6786 = vsel %vm1825, %v6754, %v6390
        %v6787 = vsel %vm1825, %v6755, %v6392
        %v6788 = vsel %vm1825, %v6756, %v6394
        %v6789 = vsel %vm1825, %v6757, %v6396
        %v6790 = vsel %vm1825, %v6758, %v6398
        %v6791 = vsel %vm1825, %v6759, %v6400
        %v6792 = vsel %vm1825, %v6760, %v6402
        %v6793 = vsel %vm1825, %v6761, %v6404
        %v6794 = vsel %vm1825, %v6762, %v6406
        %v6795 = vsel %vm1825, %v6763, %v6408
        %v6796 = vsel %vm1825, %v6764, %v6410
        %v6797 = vsel %vm1825, %v6765, %v6412
        %v6798 = vsel %vm1825, %v6766, %v6414
        %v6799 = vsel %vm1825, %v6767, %v6416
        %v6800 = vsel %vm1825, %v6768, %v6418
        %v6801 = vsel %vm1825, %v6769, %v6420
        %v6802 = vsel %vm1825, %v6770, %v6422
        %v6803 = vsel %vm1825, %v6771, %v6424
        %v6804 = vsel %vm1825, %v6772, %v6426
        %v6805 = vsel %vm1825, %v6773, %v6428
        %v6806 = vsel %vm1825, %v6774, %v6430
        %v6807 = vsel %vm1825, %v6775, %v6432
        %v6808 = vsel %vm1825, %v6776, %v6434
        %v6809 = vsel %vm1825, %v6777, %v6436
        %v6810 = vsel %vm1825, %v6778, %v6438
        %v6811 = vsel %vm1825, %v6779, %v6440
        %v6812 = vsel %vm1825, %v6780, %v6442
        %v6813 = vsel %vm1825, %v6781, %v6444
        %v6814 = vsel %vm1825, %v6782, %v6446
        %v6815 = vsel %vm1858, %v6783, %v6496
        %v6816 = vsel %vm1858, %v6784, %v6498
        %v6817 = vsel %vm1858, %v6785, %v6500
        %v6818 = vsel %vm1858, %v6786, %v6502
        %v6819 = vsel %vm1858, %v6787, %v6504
        %v6820 = vsel %vm1858, %v6788, %v6506
        %v6821 = vsel %vm1858, %v6789, %v6508
        %v6822 = vsel %vm1858, %v6790, %v6510
        %v6823 = vsel %vm1858, %v6791, %v6512
        %v6824 = vsel %vm1858, %v6792, %v6514
        %v6825 = vsel %vm1858, %v6793, %v6516
        %v6826 = vsel %vm1858, %v6794, %v6518
        %v6827 = vsel %vm1858, %v6795, %v6520
        %v6828 = vsel %vm1858, %v6796, %v6522
        %v6829 = vsel %vm1858, %v6797, %v6524
        %v6830 = vsel %vm1858, %v6798, %v6526
        %v6831 = vsel %vm1858, %v6799, %v6528
        %v6832 = vsel %vm1858, %v6800, %v6530
        %v6833 = vsel %vm1858, %v6801, %v6532
        %v6834 = vsel %vm1858, %v6802, %v6534
        %v6835 = vsel %vm1858, %v6803, %v6536
        %v6836 = vsel %vm1858, %v6804, %v6538
        %v6837 = vsel %vm1858, %v6805, %v6540
        %v6838 = vsel %vm1858, %v6806, %v6542
        %v6839 = vsel %vm1858, %v6807, %v6544
        %v6840 = vsel %vm1858, %v6808, %v6546
        %v6841 = vsel %vm1858, %v6809, %v6548
        %v6842 = vsel %vm1858, %v6810, %v6550
        %v6843 = vsel %vm1858, %v6811, %v6552
        %v6844 = vsel %vm1858, %v6812, %v6554
        %v6845 = vsel %vm1858, %v6813, %v6556
        %v6846 = vsel %vm1858, %v6814, %v6558
        %v6847 = vld [vmem:[%s3] sm:$0xff]
        %v6848 = vld [vmem:[%s3 + $0x8] sm:$0xff]
        %v6849 = vld [vmem:[%s3 + $0x10] sm:$0xff]
        %v6850 = vld [vmem:[%s3 + $0x18] sm:$0xff]
        %v6851 = vld [vmem:[%s3 + $0x20] sm:$0xff]
        %v6852 = vld [vmem:[%s3 + $0x28] sm:$0xff]
        %v6853 = vld [vmem:[%s3 + $0x30] sm:$0xff]
        %v6854 = vld [vmem:[%s3 + $0x38] sm:$0xff]
        %v6855 = vld [vmem:[%s3 + $0x40] sm:$0xff]
        %v6857 = vsel %vm1900, %v6815, 0
        %v6860 = vsel %vm1900, %v6816, 0
        %v6863 = vsel %vm1900, %v6817, 0
        %v6866 = vsel %vm1900, %v6818, 0
        %v6869 = vsel %vm1900, %v6819, 0
        %v6872 = vsel %vm1900, %v6820, 0
        %v6875 = vsel %vm1900, %v6821, 0
        %v6878 = vsel %vm1900, %v6822, 0
        %v6881 = vsel %vm1900, %v6823, 0
        %v6884 = vsel %vm1900, %v6824, 0
        %v6887 = vsel %vm1900, %v6825, 0
        %v6890 = vsel %vm1900, %v6826, 0
        %v6893 = vsel %vm1900, %v6827, 0
        %v6896 = vsel %vm1900, %v6828, 0
        %v6899 = vsel %vm1900, %v6829, 0
        %v6902 = vsel %vm1900, %v6830, 0
        %v6905 = vsel %vm1900, %v6831, 0
        %v6908 = vsel %vm1900, %v6832, 0
        %v6911 = vsel %vm1900, %v6833, 0
        %v6914 = vsel %vm1900, %v6834, 0
        %v6917 = vsel %vm1900, %v6835, 0
        %v6920 = vsel %vm1900, %v6836, 0
        %v6923 = vsel %vm1900, %v6837, 0
        %v6926 = vsel %vm1900, %v6838, 0
        %v6929 = vsel %vm1900, %v6839, 0
        %v6932 = vsel %vm1900, %v6840, 0
        %v6935 = vsel %vm1900, %v6841, 0
        %v6938 = vsel %vm1900, %v6842, 0
        %v6941 = vsel %vm1900, %v6843, 0
        %v6944 = vsel %vm1900, %v6844, 0
        %v6947 = vsel %vm1900, %v6845, 0
        %v6950 = vsel %vm1900, %v6846, 0
        %6952 = vmatpush.msra.mxu0 0.0
        %6953 = vmatpush.msra.mxu0 0.0
        %6954 = vmatpush.msra.mxu0 0.0
        %6955 = vmatpush.msra.mxu0 0.0
        %6956 = vmatpush.msra.mxu0 0.0
        %6957 = vmatpush.msra.mxu0 0.0
        %6958 = vmatpush.msra.mxu0 0.0
        %6959 = vmatpush.msra.mxu0 %v6855
        %6960 = vmatpush.msra.mxu0 %v6854
        %6961 = vmatpush.msra.mxu0 %v6853
        %6962 = vmatpush.msra.mxu0 %v6852
        %6963 = vmatpush.msra.mxu0 %v6851
        %6964 = vmatpush.msra.mxu0 %v6850
        %6965 = vmatpush.msra.mxu0 %v6849
        %6966 = vmatpush.msra.mxu0 %v6848
        %6967 = vmatpush.msra.mxu0 %v6847
        %6968 = vmatmul.f32.gmra.mxu0 %v6857
        %v6969 = vpop.f32.mrf.mxu0
        %v6970 = vadd.f32 0.0, %v6969
        %6971 = vmatmul.f32.gmra.mxu0 %v6860
        %v6972 = vpop.f32.mrf.mxu0
        %v6973 = vadd.f32 0.0, %v6972
        %6974 = vmatmul.f32.gmra.mxu0 %v6863
        %v6975 = vpop.f32.mrf.mxu0
        %v6976 = vadd.f32 0.0, %v6975
        %6977 = vmatmul.f32.gmra.mxu0 %v6866
        %v6978 = vpop.f32.mrf.mxu0
        %v6979 = vadd.f32 0.0, %v6978
        %6980 = vmatmul.f32.gmra.mxu0 %v6869
        %v6981 = vpop.f32.mrf.mxu0
        %v6982 = vadd.f32 0.0, %v6981
        %6983 = vmatmul.f32.gmra.mxu0 %v6872
        %v6984 = vpop.f32.mrf.mxu0
        %v6985 = vadd.f32 0.0, %v6984
        %6986 = vmatmul.f32.gmra.mxu0 %v6875
        %v6987 = vpop.f32.mrf.mxu0
        %v6988 = vadd.f32 0.0, %v6987
        %6989 = vmatmul.f32.gmra.mxu0 %v6878
        %v6990 = vpop.f32.mrf.mxu0
        %v6991 = vadd.f32 0.0, %v6990
        %6992 = vmatmul.f32.gmra.mxu0 %v6881
        %v6993 = vpop.f32.mrf.mxu0
        %v6994 = vadd.f32 0.0, %v6993
        %6995 = vmatmul.f32.gmra.mxu0 %v6884
        %v6996 = vpop.f32.mrf.mxu0
        %v6997 = vadd.f32 0.0, %v6996
        %6998 = vmatmul.f32.gmra.mxu0 %v6887
        %v6999 = vpop.f32.mrf.mxu0
        %v7000 = vadd.f32 0.0, %v6999
        %7001 = vmatmul.f32.gmra.mxu0 %v6890
        %v7002 = vpop.f32.mrf.mxu0
        %v7003 = vadd.f32 0.0, %v7002
        %7004 = vmatmul.f32.gmra.mxu0 %v6893
        %v7005 = vpop.f32.mrf.mxu0
        %v7006 = vadd.f32 0.0, %v7005
        %7007 = vmatmul.f32.gmra.mxu0 %v6896
        %v7008 = vpop.f32.mrf.mxu0
        %v7009 = vadd.f32 0.0, %v7008
        %7010 = vmatmul.f32.gmra.mxu0 %v6899
        %v7011 = vpop.f32.mrf.mxu0
        %v7012 = vadd.f32 0.0, %v7011
        %7013 = vmatmul.f32.gmra.mxu0 %v6902
        %v7014 = vpop.f32.mrf.mxu0
        %v7015 = vadd.f32 0.0, %v7014
        %7016 = vmatmul.f32.gmra.mxu0 %v6905
        %v7017 = vpop.f32.mrf.mxu0
        %v7018 = vadd.f32 0.0, %v7017
        %7019 = vmatmul.f32.gmra.mxu0 %v6908
        %v7020 = vpop.f32.mrf.mxu0
        %v7021 = vadd.f32 0.0, %v7020
        %7022 = vmatmul.f32.gmra.mxu0 %v6911
        %v7023 = vpop.f32.mrf.mxu0
        %v7024 = vadd.f32 0.0, %v7023
        %7025 = vmatmul.f32.gmra.mxu0 %v6914
        %v7026 = vpop.f32.mrf.mxu0
        %v7027 = vadd.f32 0.0, %v7026
        %7028 = vmatmul.f32.gmra.mxu0 %v6917
        %v7029 = vpop.f32.mrf.mxu0
        %v7030 = vadd.f32 0.0, %v7029
        %7031 = vmatmul.f32.gmra.mxu0 %v6920
        %v7032 = vpop.f32.mrf.mxu0
        %v7033 = vadd.f32 0.0, %v7032
        %7034 = vmatmul.f32.gmra.mxu0 %v6923
        %v7035 = vpop.f32.mrf.mxu0
        %v7036 = vadd.f32 0.0, %v7035
        %7037 = vmatmul.f32.gmra.mxu0 %v6926
        %v7038 = vpop.f32.mrf.mxu0
        %v7039 = vadd.f32 0.0, %v7038
        %7040 = vmatmul.f32.gmra.mxu0 %v6929
        %v7041 = vpop.f32.mrf.mxu0
        %v7042 = vadd.f32 0.0, %v7041
        %7043 = vmatmul.f32.gmra.mxu0 %v6932
        %v7044 = vpop.f32.mrf.mxu0
        %v7045 = vadd.f32 0.0, %v7044
        %7046 = vmatmul.f32.gmra.mxu0 %v6935
        %v7047 = vpop.f32.mrf.mxu0
        %v7048 = vadd.f32 0.0, %v7047
        %7049 = vmatmul.f32.gmra.mxu0 %v6938
        %v7050 = vpop.f32.mrf.mxu0
        %v7051 = vadd.f32 0.0, %v7050
        %7052 = vmatmul.f32.gmra.mxu0 %v6941
        %v7053 = vpop.f32.mrf.mxu0
        %v7054 = vadd.f32 0.0, %v7053
        %7055 = vmatmul.f32.gmra.mxu0 %v6944
        %v7056 = vpop.f32.mrf.mxu0
        %v7057 = vadd.f32 0.0, %v7056
        %7058 = vmatmul.f32.gmra.mxu0 %v6947
        %v7059 = vpop.f32.mrf.mxu0
        %v7060 = vadd.f32 0.0, %v7059
        %7061 = vmatmul.f32.gmra.mxu0 %v6950
        %v7062 = vpop.f32.mrf.mxu0
        %v7063 = vadd.f32 0.0, %v7062
        %7064 = vdwg.mxu0
        %vm7065 = vcmp.gt.f32.partialorder %v6970, 0.0
        %vm7066 = vcmp.gt.f32.partialorder %v6973, 0.0
        %vm7067 = vcmp.gt.f32.partialorder %v6976, 0.0
        %vm7068 = vcmp.gt.f32.partialorder %v6979, 0.0
        %vm7069 = vcmp.gt.f32.partialorder %v6982, 0.0
        %vm7070 = vcmp.gt.f32.partialorder %v6985, 0.0
        %vm7071 = vcmp.gt.f32.partialorder %v6988, 0.0
        %vm7072 = vcmp.gt.f32.partialorder %v6991, 0.0
        %vm7073 = vcmp.gt.f32.partialorder %v6994, 0.0
        %vm7074 = vcmp.gt.f32.partialorder %v6997, 0.0
        %vm7075 = vcmp.gt.f32.partialorder %v7000, 0.0
        %vm7076 = vcmp.gt.f32.partialorder %v7003, 0.0
        %vm7077 = vcmp.gt.f32.partialorder %v7006, 0.0
        %vm7078 = vcmp.gt.f32.partialorder %v7009, 0.0
        %vm7079 = vcmp.gt.f32.partialorder %v7012, 0.0
        %vm7080 = vcmp.gt.f32.partialorder %v7015, 0.0
        %vm7081 = vcmp.gt.f32.partialorder %v7018, 0.0
        %vm7082 = vcmp.gt.f32.partialorder %v7021, 0.0
        %vm7083 = vcmp.gt.f32.partialorder %v7024, 0.0
        %vm7084 = vcmp.gt.f32.partialorder %v7027, 0.0
        %vm7085 = vcmp.gt.f32.partialorder %v7030, 0.0
        %vm7086 = vcmp.gt.f32.partialorder %v7033, 0.0
        %vm7087 = vcmp.gt.f32.partialorder %v7036, 0.0
        %vm7088 = vcmp.gt.f32.partialorder %v7039, 0.0
        %vm7089 = vcmp.gt.f32.partialorder %v7042, 0.0
        %vm7090 = vcmp.gt.f32.partialorder %v7045, 0.0
        %vm7091 = vcmp.gt.f32.partialorder %v7048, 0.0
        %vm7092 = vcmp.gt.f32.partialorder %v7051, 0.0
        %vm7093 = vcmp.gt.f32.partialorder %v7054, 0.0
        %vm7094 = vcmp.gt.f32.partialorder %v7057, 0.0
        %vm7095 = vcmp.gt.f32.partialorder %v7060, 0.0
        %vm7096 = vcmp.gt.f32.partialorder %v7063, 0.0
        %v7097 = vmul.f32 %v6970, 0.2
        %v7098 = vmul.f32 %v6973, 0.2
        %v7099 = vmul.f32 %v6976, 0.2
        %v7100 = vmul.f32 %v6979, 0.2
        %v7101 = vmul.f32 %v6982, 0.2
        %v7102 = vmul.f32 %v6985, 0.2
        %v7103 = vmul.f32 %v6988, 0.2
        %v7104 = vmul.f32 %v6991, 0.2
        %v7105 = vmul.f32 %v6994, 0.2
        %v7106 = vmul.f32 %v6997, 0.2
        %v7107 = vmul.f32 %v7000, 0.2
        %v7108 = vmul.f32 %v7003, 0.2
        %v7109 = vmul.f32 %v7006, 0.2
        %v7110 = vmul.f32 %v7009, 0.2
        %v7111 = vmul.f32 %v7012, 0.2
        %v7112 = vmul.f32 %v7015, 0.2
        %v7113 = vmul.f32 %v7018, 0.2
        %v7114 = vmul.f32 %v7021, 0.2
        %v7115 = vmul.f32 %v7024, 0.2
        %v7116 = vmul.f32 %v7027, 0.2
        %v7117 = vmul.f32 %v7030, 0.2
        %v7118 = vmul.f32 %v7033, 0.2
        %v7119 = vmul.f32 %v7036, 0.2
        %v7120 = vmul.f32 %v7039, 0.2
        %v7121 = vmul.f32 %v7042, 0.2
        %v7122 = vmul.f32 %v7045, 0.2
        %v7123 = vmul.f32 %v7048, 0.2
        %v7124 = vmul.f32 %v7051, 0.2
        %v7125 = vmul.f32 %v7054, 0.2
        %v7126 = vmul.f32 %v7057, 0.2
        %v7127 = vmul.f32 %v7060, 0.2
        %v7128 = vmul.f32 %v7063, 0.2
        %v7129 = vsel %vm7065, %v6970, %v7097
        %v7130 = vsel %vm7066, %v6973, %v7098
        %v7131 = vsel %vm7067, %v6976, %v7099
        %v7132 = vsel %vm7068, %v6979, %v7100
        %v7133 = vsel %vm7069, %v6982, %v7101
        %v7134 = vsel %vm7070, %v6985, %v7102
        %v7135 = vsel %vm7071, %v6988, %v7103
        %v7136 = vsel %vm7072, %v6991, %v7104
        %v7137 = vsel %vm7073, %v6994, %v7105
        %v7138 = vsel %vm7074, %v6997, %v7106
        %v7139 = vsel %vm7075, %v7000, %v7107
        %v7140 = vsel %vm7076, %v7003, %v7108
        %v7141 = vsel %vm7077, %v7006, %v7109
        %v7142 = vsel %vm7078, %v7009, %v7110
        %v7143 = vsel %vm7079, %v7012, %v7111
        %v7144 = vsel %vm7080, %v7015, %v7112
        %v7145 = vsel %vm7081, %v7018, %v7113
        %v7146 = vsel %vm7082, %v7021, %v7114
        %v7147 = vsel %vm7083, %v7024, %v7115
        %v7148 = vsel %vm7084, %v7027, %v7116
        %v7149 = vsel %vm7085, %v7030, %v7117
        %v7150 = vsel %vm7086, %v7033, %v7118
        %v7151 = vsel %vm7087, %v7036, %v7119
        %v7152 = vsel %vm7088, %v7039, %v7120
        %v7153 = vsel %vm7089, %v7042, %v7121
        %v7154 = vsel %vm7090, %v7045, %v7122
        %v7155 = vsel %vm7091, %v7048, %v7123
        %v7156 = vsel %vm7092, %v7051, %v7124
        %v7157 = vsel %vm7093, %v7054, %v7125
        %v7158 = vsel %vm7094, %v7057, %v7126
        %v7159 = vsel %vm7095, %v7060, %v7127
        %v7160 = vsel %vm7096, %v7063, %v7128
        %7161 = vxpose.xlu0.b32.start [1/16] %v7129, 128
        %7162 = vxpose.xlu0.b32.cont [2/16] %v7130, 128
        %7163 = vxpose.xlu0.b32.cont [3/16] %v7131, 128
        %7164 = vxpose.xlu0.b32.cont [4/16] %v7132, 128
        %7165 = vxpose.xlu0.b32.cont [5/16] %v7133, 128
        %7166 = vxpose.xlu0.b32.cont [6/16] %v7134, 128
        %7167 = vxpose.xlu0.b32.cont [7/16] %v7135, 128
        %7168 = vxpose.xlu0.b32.cont [8/16] %v7136, 128
        %7169 = vxpose.xlu0.b32.cont [9/16] %v7137, 128
        %7170 = vxpose.xlu0.b32.cont [10/16] %v7138, 128
        %7171 = vxpose.xlu0.b32.cont [11/16] %v7139, 128
        %7172 = vxpose.xlu0.b32.cont [12/16] %v7140, 128
        %7173 = vxpose.xlu0.b32.cont [13/16] %v7141, 128
        %7174 = vxpose.xlu0.b32.cont [14/16] %v7142, 128
        %7175 = vxpose.xlu0.b32.cont [15/16] %v7143, 128
        %7176 = vxpose.xlu0.b32.end [16/16] %v7144, 128
        %v7177 = vpop.trf.xlu0
        %v7178 = vpop.trf.xlu0
        %v7179 = vpop.trf.xlu0
        %v7180 = vpop.trf.xlu0
        %v7181 = vpop.trf.xlu0
        %v7182 = vpop.trf.xlu0
        %v7183 = vpop.trf.xlu0
        %v7184 = vpop.trf.xlu0
        %v7185 = vpop.trf.xlu0
        %v7186 = vpop.trf.xlu0
        %v7187 = vpop.trf.xlu0
        %v7188 = vpop.trf.xlu0
        %v7189 = vpop.trf.xlu0
        %v7190 = vpop.trf.xlu0
        %v7191 = vpop.trf.xlu0
        %v7192 = vpop.trf.xlu0
        %7193 = vxpose.xlu0.b32.start [1/16] %v7145, 128
        %7194 = vxpose.xlu0.b32.cont [2/16] %v7146, 128
        %7195 = vxpose.xlu0.b32.cont [3/16] %v7147, 128
        %7196 = vxpose.xlu0.b32.cont [4/16] %v7148, 128
        %7197 = vxpose.xlu0.b32.cont [5/16] %v7149, 128
        %7198 = vxpose.xlu0.b32.cont [6/16] %v7150, 128
        %7199 = vxpose.xlu0.b32.cont [7/16] %v7151, 128
        %7200 = vxpose.xlu0.b32.cont [8/16] %v7152, 128
        %7201 = vxpose.xlu0.b32.cont [9/16] %v7153, 128
        %7202 = vxpose.xlu0.b32.cont [10/16] %v7154, 128
        %7203 = vxpose.xlu0.b32.cont [11/16] %v7155, 128
        %7204 = vxpose.xlu0.b32.cont [12/16] %v7156, 128
        %7205 = vxpose.xlu0.b32.cont [13/16] %v7157, 128
        %7206 = vxpose.xlu0.b32.cont [14/16] %v7158, 128
        %7207 = vxpose.xlu0.b32.cont [15/16] %v7159, 128
        %7208 = vxpose.xlu0.b32.end [16/16] %v7160, 128
        %v7209 = vpop.trf.xlu0
        %v7210 = vpop.trf.xlu0
        %v7211 = vpop.trf.xlu0
        %v7212 = vpop.trf.xlu0
        %v7213 = vpop.trf.xlu0
        %v7214 = vpop.trf.xlu0
        %v7215 = vpop.trf.xlu0
        %v7216 = vpop.trf.xlu0
        %v7217 = vpop.trf.xlu0
        %v7218 = vpop.trf.xlu0
        %v7219 = vpop.trf.xlu0
        %v7220 = vpop.trf.xlu0
        %v7221 = vpop.trf.xlu0
        %v7222 = vpop.trf.xlu0
        %v7223 = vpop.trf.xlu0
        %v7224 = vpop.trf.xlu0
        %v7227 = vrot.slane %v7209, 4
        %vm7228 = vcmask 1043456
        %v7229 = vsel %vm7228, %v7177, %v7227
        %7231 = vst [vmem:[%s244] sm:$0xff] %v7229
        %s7232 = sand.u32 %s159, 1
        %s7233 = scalar_lea.sflag [#allocation4], %s7232
        %s7234 = sand.u32 %s159, 1
        %s7235 = smul.addr %s7234, 8
        %s7236 = scalar_lea.vmem [#allocation3], %s7235
        // Predicated region
        $region45: #{tpu_custom_call.1} parent=43 // pred_check
          %p7237 = pneg %p169
        $region46: #{tpu_custom_call.1} parent=43 // pred_check_branch
          %7239 = sbr.rel (%p7237) target = $region48
        $region47: #{tpu_custom_call.1} parent=43 // pred_region
          %7241 = vsyncadd %s7233, 0
          %s7242 = smul.addr %s20, 2
          %s7243 = smul.addr %s7242, 4
          %s7244 = scalar_lea.hbm %s6, %s7243
          %s7246 = sshll.u32 %s7236, 4
          %s7247 = int_to_ptr.vmem [resolvable:$true] %s7246
          %s7248 = sshll.u32 %s7244, 4
          %s7249 = int_to_ptr.hbm [resolvable:$true] %s7248
          %7251 = dma.vmem_to_hbm [thread:$0]  %s7247, 128, %s7249, %s7233
        $region48: #{tpu_custom_call.1} parent=43 // pred_fallthru
          _
      $region44: #{tpu_custom_call.1} parent=5 // pred_fallthru
        _
      %p7252 = scmp.le.s32.totalorder 2, %s15
      // Predicated region
      $region49: #{tpu_custom_call.1} parent=5 // pred_check
        %p7253 = pneg %p7252
      $region50: #{tpu_custom_call.1} parent=5 // pred_check_branch
        %7255 = sbr.rel (%p7253) target = $region52
      $region51: #{tpu_custom_call.1} parent=5 // pred_region
        %s7256 = ssub.s32 %s15, 2
        // Predicated region
        $region53: #{tpu_custom_call.1} parent=51 // pred_check
          %p7257 = pneg %p175
        $region54: #{tpu_custom_call.1} parent=51 // pred_check_branch
          %7259 = sbr.rel (%p7257) target = $region56
        $region55: #{tpu_custom_call.1} parent=51 // pred_region
          %s7260 = sand.u32 %s160, 1
          %s7261 = scalar_lea.sflag [#allocation4], %s7260
          %s7262 = sand.u32 %s160, 1
          %s7263 = smul.addr %s7262, 8
          %s7264 = scalar_lea.vmem [#allocation3], %s7263
          %7266 = dma.done %s7261, 128
        $region56: #{tpu_custom_call.1} parent=51 // pred_fallthru
          _
      $region52: #{tpu_custom_call.1} parent=5 // pred_fallthru
        _
    $region6: #{tpu_custom_call.1} parent=1 // loop_footer
      %s19 = sadd.s32 1, %s15
    $region7: #{tpu_custom_call.1} parent=1 // loop_footer_branch
      %14 = sbr.rel target = $region3
    $region8: #{tpu_custom_call.1} parent=1 // loop_exit
      _
    %7267 = vsyncpa [#allocation4], 1
    %s7268 = scalar_lea.sflag [#allocation4], 1
    %7269 = vsyncpa %s7268, 1

</llo_original>
